<compile_context>
chip_gen: v5e
topology: v5e:2x2
jax: 0.10.0
libtpu: 0.0.40
codegen_flags: <defaults>
</compile_context>

<pallas_src>
import functools

import jax
import jax.numpy as jnp
from jax.experimental import pallas as pl
from jax.experimental.pallas import tpu as pltpu

EPS = 1e-5
LANE = 128
TN = 128  # output-channel chunk width: keeps the f32 accumulator <= 32 vregs


def _vmem_limit_bytes():
    # Generation-aware: ~48 MiB on v7x (64 MiB/TC physical), ~96 MiB on v5e/v6e.
    try:
        cap = int(pltpu.get_tpu_info().vmem_capacity_bytes)
    except Exception:  # pragma: no cover - conservative fallback
        cap = 64 * 1024 * 1024
    return min(cap * 3 // 4, 100 * 1024 * 1024)


VMEM_LIMIT = _vmem_limit_bytes()


# ---------------------------------------------------------------------------
# small helpers (trace-time Python / cheap XLA glue)
# ---------------------------------------------------------------------------
def _rup(x, m):
    return (x + m - 1) // m * m


def _pad_last(a, target):
    pad = target - a.shape[-1]
    if pad == 0:
        return a
    return jnp.pad(a, [(0, 0)] * (a.ndim - 1) + [(0, pad)])


def _pick_row_tile(ho, wo, target_rows=256):
    """Largest divisor of ho whose (rows * wo) M-tile stays <= target_rows."""
    best = 1
    for d in range(1, ho + 1):
        if ho % d == 0 and d * wo <= max(target_rows, wo):
            best = d
    return best


def _prep_w3x3(w, cin_pad, cout_pad):
    # (P, C, 3, 3) -> (9, Cp, Pp) bf16, tap-major (kh*3+kw)
    cout, cin = w.shape[0], w.shape[1]
    wm = jnp.transpose(w, (2, 3, 1, 0)).reshape(9, cin, cout)
    wm = jnp.pad(wm, ((0, 0), (0, cin_pad - cin), (0, cout_pad - cout)))
    return wm.astype(jnp.bfloat16)


def _prep_w1x1(w, cin_pad, cout_pad):
    # (P, C, 1, 1) -> (Cp, Pp) bf16
    cout, cin = w.shape[0], w.shape[1]
    wm = w.reshape(cout, cin).T
    wm = jnp.pad(wm, ((0, cin_pad - cin), (0, cout_pad - cout)))
    return wm.astype(jnp.bfloat16)


def _prep_conv_input(x_nhwc, stride):
    """Zero-pad spatially.  For stride 2, split into 4 phases stacked along H so
    every 3x3 tap becomes a contiguous slice inside the kernel.  This fuses into
    the (mandatory) NCHW->NHWC entry relayout."""
    xp = jnp.pad(x_nhwc, ((0, 0), (1, 1), (1, 1), (0, 0)))
    if stride == 1:
        return xp, xp.shape[1], xp.shape[2]
    assert stride == 2
    phases = [xp[:, a::2, b::2, :] for a in range(2) for b in range(2)]
    hq, wq = phases[0].shape[1], phases[0].shape[2]
    return jnp.concatenate(phases, axis=1), hq, wq


# ---------------------------------------------------------------------------
# conv 3x3 (+ optional fused residual add / 1x1 projection shortcut)
# + merged partial BatchNorm statistics
# ---------------------------------------------------------------------------
def _make_conv_kernel(stride, tr, wo, hq, cin, tn, has_res, has_proj):
    def body(x_ref, w_ref, r_ref, ws_ref, y_ref, sc_ref, s_ref):
        i = pl.program_id(2)
        r0 = pl.multiple_of(i * tr, tr)
        acc = jnp.zeros((tr * wo, tn), jnp.float32)
        center = None
        # Nine taps as (M, C) x (C, TN) MXU matmuls with a running f32 acc
        # (lets v7x's MRB accumulate in place; hidden under MXU on v5e/v6e).
        # TODO(synk): check bundle for per-tap sublane relayouts from the
        # kw-offset slices; restructure only if vld/vst slots show it.
        for kh in range(3):
            for kw in range(3):
                ph = (kh % stride) * stride + (kw % stride)
                tap = x_ref[0,
                            pl.ds(ph * hq + (kh // stride) + r0, tr),
                            pl.ds(kw // stride, wo), :].reshape(tr * wo, cin)
                if kh == 1 and kw == 1:
                    center = tap  # centre-tap samples == 1x1/stride-s shortcut input
                acc = acc + jnp.dot(tap, w_ref[kh * 3 + kw],
                                    preferred_element_type=jnp.float32)
        if has_res:
            acc = acc + r_ref[...].reshape(tr * wo, tn).astype(jnp.float32)
        # merged per-tile partial BatchNorm statistics from the f32 accumulator
        s_ref[0, 0, 0:1, :] = jnp.sum(acc, axis=0, keepdims=True)
        s_ref[0, 0, 1:2, :] = jnp.sum(acc * acc, axis=0, keepdims=True)
        # bf16 activation writeback (halves HBM traffic; stats stay f32)
        y_ref[...] = acc.astype(y_ref.dtype).reshape(1, tr, wo, tn)
        if has_proj:
            sc = jnp.dot(center, ws_ref[...], preferred_element_type=jnp.float32)
            sc_ref[...] = sc.astype(sc_ref.dtype).reshape(1, tr, wo, tn)

    if has_proj:
        def kernel(x_ref, w_ref, ws_ref, y_ref, sc_ref, s_ref):
            body(x_ref, w_ref, None, ws_ref, y_ref, sc_ref, s_ref)
    elif has_res:
        def kernel(x_ref, w_ref, r_ref, y_ref, s_ref):
            body(x_ref, w_ref, r_ref, None, y_ref, None, s_ref)
    else:
        def kernel(x_ref, w_ref, y_ref, s_ref):
            body(x_ref, w_ref, None, None, y_ref, None, s_ref)
    return kernel


def conv3x3(xph, w, *, stride, ho, wo, tr, hq, residual=None, shortcut_w=None):
    """3x3 conv over a zero-padded (phase-split if stride==2) NHWC image.

    residual:   optional (n, ho, wo, cout) bf16 tensor added to the conv output
                before the statistics (conv2's residual branch).
    shortcut_w: optional (cin, cout) bf16 1x1 projection applied to the
                centre-tap samples and emitted as an extra bf16 output
                (computed here because the input image is already resident).
    Returns (y[, shortcut], stats); stats is (n, nrb, 2, cout) f32 holding
    per-row-tile (sum, sum of squares).
    """
    assert residual is None or shortcut_w is None
    n, hph, wq, cin = xph.shape
    cout = w.shape[-1]
    nrb, ncb = ho // tr, cout // TN
    has_res, has_proj = residual is not None, shortcut_w is not None

    kernel = _make_conv_kernel(stride, tr, wo, hq, cin, TN, has_res, has_proj)

    in_specs = [
        pl.BlockSpec((1, hph, wq, cin), lambda b, j, i: (b, 0, 0, 0)),  # resident image
        pl.BlockSpec((9, cin, TN), lambda b, j, i: (0, 0, j)),          # weight chunk
    ]
    args = [xph, w]
    if has_proj:
        in_specs.append(pl.BlockSpec((cin, TN), lambda b, j, i: (0, j)))
        args.append(shortcut_w)
    if has_res:
        in_specs.append(pl.BlockSpec((1, tr, wo, TN), lambda b, j, i: (b, i, 0, j)))
        args.append(residual)

    act_spec = pl.BlockSpec((1, tr, wo, TN), lambda b, j, i: (b, i, 0, j))
    out_shapes = [jax.ShapeDtypeStruct((n, ho, wo, cout), jnp.bfloat16)]
    out_specs = [act_spec]
    if has_proj:
        out_shapes.append(jax.ShapeDtypeStruct((n, ho, wo, cout), jnp.bfloat16))
        out_specs.append(act_spec)
    out_shapes.append(jax.ShapeDtypeStruct((n, nrb, 2, cout), jnp.float32))
    out_specs.append(pl.BlockSpec((1, 1, 2, TN), lambda b, j, i: (b, i, 0, j)))

    flops = 2 * n * ho * wo * 9 * cin * cout
    if has_proj:
        flops += 2 * n * ho * wo * cin * cout
    in_bytes = sum(int(a.size) * a.dtype.itemsize for a in args)
    out_bytes = (n * ho * wo * cout * 2 * (2 if has_proj else 1)
                 + n * nrb * 2 * cout * 4)

    return pl.pallas_call(
        kernel,
        out_shape=tuple(out_shapes),
        grid=(n, ncb, nrb),
        in_specs=in_specs,
        out_specs=tuple(out_specs),
        compiler_params=pltpu.CompilerParams(
            dimension_semantics=("parallel", "parallel", "arbitrary"),
            vmem_limit_bytes=VMEM_LIMIT,
        ),
        cost_estimate=pl.CostEstimate(
            flops=flops, transcendentals=0, bytes_accessed=in_bytes + out_bytes),
    )(*args)


# ---------------------------------------------------------------------------
# BatchNorm (training-mode batch statistics) apply + ReLU
# ---------------------------------------------------------------------------
def _bn_scale_shift(stats, gamma, beta, m_count, cpad):
    s = jnp.sum(stats, axis=(0, 1))                     # (2, cpad)
    mean = s[0] / m_count
    var = jnp.maximum(s[1] / m_count - mean * mean, 0.0)
    scale = _pad_last(gamma, cpad) * jax.lax.rsqrt(var + EPS)
    shift = _pad_last(beta, cpad) - mean * scale
    return scale.reshape(1, 1, 1, cpad), shift.reshape(1, 1, 1, cpad)


def _bn_relu_pad_kernel(y_ref, sc_ref, sh_ref, o_ref):
    ho, wo = y_ref.shape[1], y_ref.shape[2]
    o_ref[...] = jnp.zeros(o_ref.shape, o_ref.dtype)               # zero halo
    v = jnp.maximum(y_ref[...].astype(jnp.float32) * sc_ref[...] + sh_ref[...], 0.0)
    o_ref[0, 1:ho + 1, 1:wo + 1, :] = v[0].astype(o_ref.dtype)     # interior


def bn_relu_pad(y, scale, shift):
    """BN-apply + ReLU written straight into a spatially zero-padded bf16 NHWC
    buffer (the next conv's resident input) -> no HBM pad pass for conv2.
    Whole image per grid step: large, lane-dense blocks for this HBM-bound stage.
    """
    n, ho, wo, c = y.shape
    # TODO(synk): re-tile over row bands if a single padded image ever outgrows VMEM.
    return pl.pallas_call(
        _bn_relu_pad_kernel,
        out_shape=jax.ShapeDtypeStruct((n, ho + 2, wo + 2, c), jnp.bfloat16),
        grid=(n,),
        in_specs=[pl.BlockSpec((1, ho, wo, c), lambda b: (b, 0, 0, 0)),
                  pl.BlockSpec((1, 1, 1, c), lambda b: (0, 0, 0, 0)),
                  pl.BlockSpec((1, 1, 1, c), lambda b: (0, 0, 0, 0))],
        out_specs=pl.BlockSpec((1, ho + 2, wo + 2, c), lambda b: (b, 0, 0, 0)),
        compiler_params=pltpu.CompilerParams(
            dimension_semantics=("parallel",), vmem_limit_bytes=VMEM_LIMIT),
    )(y, scale, shift)


def _bn_relu_kernel(y_ref, sc_ref, sh_ref, o_ref):
    v = jnp.maximum(y_ref[...].astype(jnp.float32) * sc_ref[...] + sh_ref[...], 0.0)
    o_ref[...] = v.astype(o_ref.dtype)


def bn_relu(y, scale, shift, out_dtype):
    n, ho, wo, c = y.shape
    return pl.pallas_call(
        _bn_relu_kernel,
        out_shape=jax.ShapeDtypeStruct((n, ho, wo, c), out_dtype),
        grid=(n,),
        in_specs=[pl.BlockSpec((1, ho, wo, c), lambda b: (b, 0, 0, 0)),
                  pl.BlockSpec((1, 1, 1, c), lambda b: (0, 0, 0, 0)),
                  pl.BlockSpec((1, 1, 1, c), lambda b: (0, 0, 0, 0))],
        out_specs=pl.BlockSpec((1, ho, wo, c), lambda b: (b, 0, 0, 0)),
        compiler_params=pltpu.CompilerParams(
            dimension_semantics=("parallel",), vmem_limit_bytes=VMEM_LIMIT),
    )(y, scale, shift)


# ---------------------------------------------------------------------------
# BasicBlock forward (Pallas-backed)
# ---------------------------------------------------------------------------
@functools.partial(jax.jit, static_argnames=("stride",))
def basic_block_forward(x, params, stride):
    """x: (N, in_planes, H, W) NCHW float32 -> (N, planes, Ho, Wo) float32."""
    n, cin, h, wdim = x.shape
    w1, w2 = params["w1"], params["w2"]
    planes = w1.shape[0]
    ho = (h + 2 - 3) // stride + 1
    wo = (wdim + 2 - 3) // stride + 1
    if stride != 1:
        assert h % stride == 0 and wdim % stride == 0
    cin_p, planes_p = _rup(cin, LANE), _rup(planes, LANE)
    tr = _pick_row_tile(ho, wo)
    m = n * ho * wo
    use_proj = (stride != 1) or (cin != planes)

    # single NCHW->NHWC relayout; channel-pad to lane multiple; bf16 for MXU.
    # The spatial pad / stride-2 space-to-depth split fuse into this same pass.
    x_nhwc = _pad_last(jnp.transpose(x, (0, 2, 3, 1)), cin_p).astype(jnp.bfloat16)
    xph1, hq1, _ = _prep_conv_input(x_nhwc, stride)

    # --- conv1 (3x3, stride) [+ fused 1x1 projection shortcut] + BN1 partials
    # (conv/shortcut biases dropped: cancelled exactly by train-mode BN mean)
    w1m = _prep_w3x3(w1, cin_p, planes_p)
    if use_proj:
        wsm = _prep_w1x1(params["ws"], cin_p, planes_p)
        y1, res, st1 = conv3x3(xph1, w1m, stride=stride, ho=ho, wo=wo, tr=tr,
                               hq=hq1, shortcut_w=wsm)
    else:
        y1, st1 = conv3x3(xph1, w1m, stride=stride, ho=ho, wo=wo, tr=tr, hq=hq1)
        res = x_nhwc  # identity shortcut (stride==1, cin_p == planes_p)

    # --- bn1 (batch stats) + relu, written into conv2's padded bf16 input ----
    sc1, sh1 = _bn_scale_shift(st1, params["g1"], params["be1"], m, planes_p)
    o1p = bn_relu_pad(y1, sc1, sh1)          # (n, ho+2, wo+2, planes_p) bf16

    # --- conv2 (3x3, stride 1) + fused residual add + BN2 partials -----------
    w2m = _prep_w3x3(w2, planes_p, planes_p)
    y2, st2 = conv3x3(o1p, w2m, stride=1, ho=ho, wo=wo, tr=tr, hq=ho + 2,
                      residual=res)

    # --- bn2 + relu -----------------------------------------------------------
    sc2, sh2 = _bn_scale_shift(st2, params["g2"], params["be2"], m, planes_p)
    o2 = bn_relu(y2, sc2, sh2, jnp.float32)

    # un-pad channels, back to NCHW once at the block boundary
    return jnp.transpose(o2[..., :planes], (0, 3, 1, 2))


# ---------------------------------------------------------------------------
# Pure-JAX reference (mirrors the PyTorch module, training-mode BN, with biases)
# ---------------------------------------------------------------------------
def reference_forward(x, params, stride):
    def conv(inp, w, b, s, pad):
        y = jax.lax.conv_general_dilated(
            inp, w, (s, s), ((pad, pad), (pad, pad)),
            dimension_numbers=("NCHW", "OIHW", "NCHW"))
        return y + b[None, :, None, None]

    def bn(y, g, b):
        mu = y.mean(axis=(0, 2, 3), keepdims=True)
        var = jnp.square(y - mu).mean(axis=(0, 2, 3), keepdims=True)
        return (y - mu) * jax.lax.rsqrt(var + EPS) * g[None, :, None, None] \
            + b[None, :, None, None]

    out = jax.nn.relu(bn(conv(x, params["w1"], params["b1"], stride, 1),
                         params["g1"], params["be1"]))
    out = conv(out, params["w2"], params["b2"], 1, 1)
    if stride != 1 or params["w1"].shape[1] != params["w1"].shape[0]:
        out = out + conv(x, params["ws"], params["bs"], stride, 0)
    else:
        out = out + x
    return jax.nn.relu(bn(out, params["g2"], params["be2"]))


# ---------------------------------------------------------------------------
if __name__ == "__main__":
    key = jax.random.PRNGKey(0)
    n, in_planes, h, w = 2, 4, 16, 16
    planes, stride = 8, 2   # stride != 1 -> projection-shortcut path

    ks = jax.random.split(key, 10)
    params = {
        "w1": 0.1 * jax.random.normal(ks[0], (planes, in_planes, 3, 3), jnp.float32),
        "b1": 0.05 * jax.random.normal(ks[1], (planes,), jnp.float32),
        "w2": 0.1 * jax.random.normal(ks[2], (planes, planes, 3, 3), jnp.float32),
        "b2": 0.05 * jax.random.normal(ks[3], (planes,), jnp.float32),
        "ws": 0.1 * jax.random.normal(ks[4], (planes, in_planes, 1, 1), jnp.float32),
        "bs": 0.05 * jax.random.normal(ks[5], (planes,), jnp.float32),
        "g1": 1.0 + 0.1 * jax.random.normal(ks[6], (planes,), jnp.float32),
        "be1": 0.05 * jax.random.normal(ks[7], (planes,), jnp.float32),
        "g2": 1.0 + 0.1 * jax.random.normal(ks[8], (planes,), jnp.float32),
        "be2": 0.05 * jax.random.normal(ks[9], (planes,), jnp.float32),
    }
    x = jax.random.normal(key, (n, in_planes, h, w), jnp.float32)

    out = jax.block_until_ready(basic_block_forward(x, params, stride))
    ref = jax.block_until_ready(reference_forward(x, params, stride))

    assert out.shape == (n, planes, h // stride, w // stride), out.shape
    err = float(jnp.max(jnp.abs(out - ref)))
    # bf16 MXU inputs and bf16 activation storage (f32 accumulation / f32 BN
    # statistics) vs an all-f32 reference -> bf16-level tolerance.
    assert jnp.allclose(out, ref, atol=1e-1, rtol=1e-1), err
    print("KERNEL_OK")
</pallas_src>

<mosaic_0001>
module attributes {stable_mosaic.version = 11 : i64} {
  func.func @_bn_relu_pad_kernel(%arg0: i32, %arg1: memref<1x8x8x128xbf16, #tpu.memory_space<vmem>>, %arg2: memref<1x1x1x128xf32, #tpu.memory_space<vmem>>, %arg3: memref<1x1x1x128xf32, #tpu.memory_space<vmem>>, %arg4: memref<1x10x10x128xbf16, #tpu.memory_space<vmem>>) attributes {dimension_semantics = [#tpu.dimension_semantics<parallel>], iteration_bounds = array<i64: 2>, scalar_prefetch = 0 : i64, scratch_operands = 0 : i64, tpu.core_type = #tpu.core_type<tc>, window_params = [{transform_indices = @transform_0, window_bounds = array<i64: 1, 8, 8, 128>}, {pipeline_mode = #tpu.pipeline_mode<synchronous>, transform_indices = @transform_1, window_bounds = array<i64: 1, 1, 1, 128>}, {pipeline_mode = #tpu.pipeline_mode<synchronous>, transform_indices = @transform_2, window_bounds = array<i64: 1, 1, 1, 128>}, {transform_indices = @transform_3, window_bounds = array<i64: 1, 10, 10, 128>}]} {
    %cst = arith.constant 0.000000e+00 : bf16
    %0 = vector.broadcast %cst : bf16 to vector<1x10x10x128xbf16>
    %c0 = arith.constant 0 : index
    %c0_0 = arith.constant 0 : index
    %c0_1 = arith.constant 0 : index
    %c0_2 = arith.constant 0 : index
    %1 = vector.load %arg4[%c0, %c0_0, %c0_1, %c0_2] : memref<1x10x10x128xbf16, #tpu.memory_space<vmem>>, vector<1x10x10x128xbf16>
    tpu.vector_store %arg4[%c0, %c0_0, %c0_1, %c0_2], %0 {strides = array<i32>} : memref<1x10x10x128xbf16, #tpu.memory_space<vmem>>, vector<1x10x10x128xbf16>,
    %c0_3 = arith.constant 0 : index
    %c0_4 = arith.constant 0 : index
    %c0_5 = arith.constant 0 : index
    %c0_6 = arith.constant 0 : index
    %2 = vector.load %arg1[%c0_3, %c0_4, %c0_5, %c0_6] : memref<1x8x8x128xbf16, #tpu.memory_space<vmem>>, vector<1x8x8x128xbf16>
    %3 = arith.extf %2 : vector<1x8x8x128xbf16> to vector<1x8x8x128xf32>
    %c0_7 = arith.constant 0 : index
    %c0_8 = arith.constant 0 : index
    %c0_9 = arith.constant 0 : index
    %c0_10 = arith.constant 0 : index
    %4 = vector.load %arg2[%c0_7, %c0_8, %c0_9, %c0_10] : memref<1x1x1x128xf32, #tpu.memory_space<vmem>>, vector<1x1x1x128xf32>
    %5 = vector.broadcast %4 : vector<1x1x1x128xf32> to vector<1x8x8x128xf32>
    %6 = arith.mulf %3, %5 : vector<1x8x8x128xf32>
    %c0_11 = arith.constant 0 : index
    %c0_12 = arith.constant 0 : index
    %c0_13 = arith.constant 0 : index
    %c0_14 = arith.constant 0 : index
    %7 = vector.load %arg3[%c0_11, %c0_12, %c0_13, %c0_14] : memref<1x1x1x128xf32, #tpu.memory_space<vmem>>, vector<1x1x1x128xf32>
    %8 = vector.broadcast %7 : vector<1x1x1x128xf32> to vector<1x8x8x128xf32>
    %9 = arith.addf %6, %8 : vector<1x8x8x128xf32>
    %cst_15 = arith.constant 0.000000e+00 : f32
    %10 = vector.broadcast %cst_15 : f32 to vector<1x8x8x128xf32>
    %11 = arith.maximumf %9, %10 : vector<1x8x8x128xf32>
    %12 = vector.shape_cast %11 : vector<1x8x8x128xf32> to vector<8x8x128xf32>
    %13 = arith.truncf %12 : vector<8x8x128xf32> to vector<8x8x128xbf16>
    %c0_16 = arith.constant 0 : index
    %c1 = arith.constant 1 : index
    %c1_17 = arith.constant 1 : index
    %c0_18 = arith.constant 0 : index
    %14 = vector.load %arg4[%c0_16, %c1, %c1_17, %c0_18] : memref<1x10x10x128xbf16, #tpu.memory_space<vmem>>, vector<1x8x8x128xbf16>
    %15 = vector.shape_cast %14 : vector<1x8x8x128xbf16> to vector<8x8x128xbf16>
    %16 = vector.shape_cast %13 : vector<8x8x128xbf16> to vector<1x8x8x128xbf16>
    tpu.vector_store %arg4[%c0_16, %c1, %c1_17, %c0_18], %16 {strides = array<i32>} : memref<1x10x10x128xbf16, #tpu.memory_space<vmem>>, vector<1x8x8x128xbf16>,
    return
  }
  func.func @transform_0(%arg0: i32) -> (i32, i32, i32, i32) {
    %c0_i32 = arith.constant 0 : i32
    %c0_i32_0 = arith.constant 0 : i32
    %c0_i32_1 = arith.constant 0 : i32
    %c0_i32_2 = arith.constant 0 : i32
    return %arg0, %c0_i32, %c0_i32_0, %c0_i32_1 : i32, i32, i32, i32
  }
  func.func @transform_1(%arg0: i32) -> (i32, i32, i32, i32) {
    %c0_i32 = arith.constant 0 : i32
    %c0_i32_0 = arith.constant 0 : i32
    %c0_i32_1 = arith.constant 0 : i32
    %c0_i32_2 = arith.constant 0 : i32
    %c0_i32_3 = arith.constant 0 : i32
    return %c0_i32, %c0_i32_0, %c0_i32_1, %c0_i32_2 : i32, i32, i32, i32
  }
  func.func @transform_2(%arg0: i32) -> (i32, i32, i32, i32) {
    %c0_i32 = arith.constant 0 : i32
    %c0_i32_0 = arith.constant 0 : i32
    %c0_i32_1 = arith.constant 0 : i32
    %c0_i32_2 = arith.constant 0 : i32
    %c0_i32_3 = arith.constant 0 : i32
    return %c0_i32, %c0_i32_0, %c0_i32_1, %c0_i32_2 : i32, i32, i32, i32
  }
  func.func @transform_3(%arg0: i32) -> (i32, i32, i32, i32) {
    %c0_i32 = arith.constant 0 : i32
    %c0_i32_0 = arith.constant 0 : i32
    %c0_i32_1 = arith.constant 0 : i32
    %c0_i32_2 = arith.constant 0 : i32
    return %arg0, %c0_i32, %c0_i32_0, %c0_i32_1 : i32, i32, i32, i32
  }
}

module attributes {stable_mosaic.version = 11 : i64} {
  func.func @kernel(%arg0: i32, %arg1: i32, %arg2: i32, %arg3: memref<1x36x9x128xbf16, #tpu.memory_space<vmem>>, %arg4: memref<9x128x128xbf16, #tpu.memory_space<vmem>>, %arg5: memref<128x128xbf16, #tpu.memory_space<vmem>>, %arg6: memref<1x8x8x128xbf16, #tpu.memory_space<vmem>>, %arg7: memref<1x8x8x128xbf16, #tpu.memory_space<vmem>>, %arg8: memref<1x1x2x128xf32, #tpu.memory_space<vmem>>) attributes {dimension_semantics = [#tpu.dimension_semantics<parallel>, #tpu.dimension_semantics<parallel>, #tpu.dimension_semantics<arbitrary>], iteration_bounds = array<i64: 2, 1, 1>, scalar_prefetch = 0 : i64, scratch_operands = 0 : i64, tpu.core_type = #tpu.core_type<tc>, window_params = [{transform_indices = @transform_0, window_bounds = array<i64: 1, 36, 9, 128>}, {transform_indices = @transform_1, window_bounds = array<i64: 9, 128, 128>}, {transform_indices = @transform_2, window_bounds = array<i64: 128, 128>}, {transform_indices = @transform_3, window_bounds = array<i64: 1, 8, 8, 128>}, {transform_indices = @transform_4, window_bounds = array<i64: 1, 8, 8, 128>}, {transform_indices = @transform_5, window_bounds = array<i64: 1, 1, 2, 128>}]} {
    %c8_i32 = arith.constant 8 : i32
    %0 = arith.muli %arg2, %c8_i32 : i32
    %1 = tpu.assume_multiple %0, 8 : i32
    %cst = arith.constant 0.000000e+00 : f32
    %2 = vector.broadcast %cst : f32 to vector<64x128xf32>
    %c0_i32 = arith.constant 0 : i32
    %3 = arith.addi %c0_i32, %1 : i32
    %c0 = arith.constant 0 : index
    %4 = arith.index_cast %3 : i32 to index
    %c0_0 = arith.constant 0 : index
    %c0_1 = arith.constant 0 : index
    %5 = vector.load %arg3[%c0, %4, %c0_0, %c0_1] : memref<1x36x9x128xbf16, #tpu.memory_space<vmem>>, vector<1x8x8x128xbf16>
    %6 = vector.shape_cast %5 : vector<1x8x8x128xbf16> to vector<8x8x128xbf16>
    %7 = vector.shape_cast %6 : vector<8x8x128xbf16> to vector<64x128xbf16>
    %c0_2 = arith.constant 0 : index
    %c0_3 = arith.constant 0 : index
    %c0_4 = arith.constant 0 : index
    %8 = vector.load %arg4[%c0_2, %c0_3, %c0_4] : memref<9x128x128xbf16, #tpu.memory_space<vmem>>, vector<1x128x128xbf16>
    %9 = vector.shape_cast %8 : vector<1x128x128xbf16> to vector<128x128xbf16>
    %cst_5 = arith.constant dense<0.000000e+00> : vector<64x128xf32>
    %10 = tpu.matmul %7, %9, %cst_5 {dimension_numbers = #tpu.dot_dimension_numbers<[1], [0], [0], [1], [0, 0, 1, 1], [], []>} : vector<64x128xbf16>, vector<128x128xbf16>, vector<64x128xf32> -> vector<64x128xf32>
    %11 = arith.addf %2, %10 : vector<64x128xf32>
    %c9_i32 = arith.constant 9 : i32
    %12 = arith.addi %c9_i32, %1 : i32
    %c0_6 = arith.constant 0 : index
    %13 = arith.index_cast %12 : i32 to index
    %c0_7 = arith.constant 0 : index
    %c0_8 = arith.constant 0 : index
    %14 = vector.load %arg3[%c0_6, %13, %c0_7, %c0_8] : memref<1x36x9x128xbf16, #tpu.memory_space<vmem>>, vector<1x8x8x128xbf16>
    %15 = vector.shape_cast %14 : vector<1x8x8x128xbf16> to vector<8x8x128xbf16>
    %16 = vector.shape_cast %15 : vector<8x8x128xbf16> to vector<64x128xbf16>
    %c1 = arith.constant 1 : index
    %c0_9 = arith.constant 0 : index
    %c0_10 = arith.constant 0 : index
    %17 = vector.load %arg4[%c1, %c0_9, %c0_10] : memref<9x128x128xbf16, #tpu.memory_space<vmem>>, vector<1x128x128xbf16>
    %18 = vector.shape_cast %17 : vector<1x128x128xbf16> to vector<128x128xbf16>
    %cst_11 = arith.constant dense<0.000000e+00> : vector<64x128xf32>
    %19 = tpu.matmul %16, %18, %cst_11 {dimension_numbers = #tpu.dot_dimension_numbers<[1], [0], [0], [1], [0, 0, 1, 1], [], []>} : vector<64x128xbf16>, vector<128x128xbf16>, vector<64x128xf32> -> vector<64x128xf32>
    %20 = arith.addf %11, %19 : vector<64x128xf32>
    %c0_i32_12 = arith.constant 0 : i32
    %21 = arith.addi %c0_i32_12, %1 : i32
    %c0_13 = arith.constant 0 : index
    %22 = arith.index_cast %21 : i32 to index
    %c1_14 = arith.constant 1 : index
    %c0_15 = arith.constant 0 : index
    %23 = vector.load %arg3[%c0_13, %22, %c1_14, %c0_15] : memref<1x36x9x128xbf16, #tpu.memory_space<vmem>>, vector<1x8x8x128xbf16>
    %24 = vector.shape_cast %23 : vector<1x8x8x128xbf16> to vector<8x8x128xbf16>
    %25 = vector.shape_cast %24 : vector<8x8x128xbf16> to vector<64x128xbf16>
    %c2 = arith.constant 2 : index
    %c0_16 = arith.constant 0 : index
    %c0_17 = arith.constant 0 : index
    %26 = vector.load %arg4[%c2, %c0_16, %c0_17] : memref<9x128x128xbf16, #tpu.memory_space<vmem>>, vector<1x128x128xbf16>
    %27 = vector.shape_cast %26 : vector<1x128x128xbf16> to vector<128x128xbf16>
    %cst_18 = arith.constant dense<0.000000e+00> : vector<64x128xf32>
    %28 = tpu.matmul %25, %27, %cst_18 {dimension_numbers = #tpu.dot_dimension_numbers<[1], [0], [0], [1], [0, 0, 1, 1], [], []>} : vector<64x128xbf16>, vector<128x128xbf16>, vector<64x128xf32> -> vector<64x128xf32>
    %29 = arith.addf %20, %28 : vector<64x128xf32>
    %c18_i32 = arith.constant 18 : i32
    %30 = arith.addi %c18_i32, %1 : i32
    %c0_19 = arith.constant 0 : index
    %31 = arith.index_cast %30 : i32 to index
    %c0_20 = arith.constant 0 : index
    %c0_21 = arith.constant 0 : index
    %32 = vector.load %arg3[%c0_19, %31, %c0_20, %c0_21] : memref<1x36x9x128xbf16, #tpu.memory_space<vmem>>, vector<1x8x8x128xbf16>
    %33 = vector.shape_cast %32 : vector<1x8x8x128xbf16> to vector<8x8x128xbf16>
    %34 = vector.shape_cast %33 : vector<8x8x128xbf16> to vector<64x128xbf16>
    %c3 = arith.constant 3 : index
    %c0_22 = arith.constant 0 : index
    %c0_23 = arith.constant 0 : index
    %35 = vector.load %arg4[%c3, %c0_22, %c0_23] : memref<9x128x128xbf16, #tpu.memory_space<vmem>>, vector<1x128x128xbf16>
    %36 = vector.shape_cast %35 : vector<1x128x128xbf16> to vector<128x128xbf16>
    %cst_24 = arith.constant dense<0.000000e+00> : vector<64x128xf32>
    %37 = tpu.matmul %34, %36, %cst_24 {dimension_numbers = #tpu.dot_dimension_numbers<[1], [0], [0], [1], [0, 0, 1, 1], [], []>} : vector<64x128xbf16>, vector<128x128xbf16>, vector<64x128xf32> -> vector<64x128xf32>
    %38 = arith.addf %29, %37 : vector<64x128xf32>
    %c27_i32 = arith.constant 27 : i32
    %39 = arith.addi %c27_i32, %1 : i32
    %c0_25 = arith.constant 0 : index
    %40 = arith.index_cast %39 : i32 to index
    %c0_26 = arith.constant 0 : index
    %c0_27 = arith.constant 0 : index
    %41 = vector.load %arg3[%c0_25, %40, %c0_26, %c0_27] : memref<1x36x9x128xbf16, #tpu.memory_space<vmem>>, vector<1x8x8x128xbf16>
    %42 = vector.shape_cast %41 : vector<1x8x8x128xbf16> to vector<8x8x128xbf16>
    %43 = vector.shape_cast %42 : vector<8x8x128xbf16> to vector<64x128xbf16>
    %c4 = arith.constant 4 : index
    %c0_28 = arith.constant 0 : index
    %c0_29 = arith.constant 0 : index
    %44 = vector.load %arg4[%c4, %c0_28, %c0_29] : memref<9x128x128xbf16, #tpu.memory_space<vmem>>, vector<1x128x128xbf16>
    %45 = vector.shape_cast %44 : vector<1x128x128xbf16> to vector<128x128xbf16>
    %cst_30 = arith.constant dense<0.000000e+00> : vector<64x128xf32>
    %46 = tpu.matmul %43, %45, %cst_30 {dimension_numbers = #tpu.dot_dimension_numbers<[1], [0], [0], [1], [0, 0, 1, 1], [], []>} : vector<64x128xbf16>, vector<128x128xbf16>, vector<64x128xf32> -> vector<64x128xf32>
    %47 = arith.addf %38, %46 : vector<64x128xf32>
    %c18_i32_31 = arith.constant 18 : i32
    %48 = arith.addi %c18_i32_31, %1 : i32
    %c0_32 = arith.constant 0 : index
    %49 = arith.index_cast %48 : i32 to index
    %c1_33 = arith.constant 1 : index
    %c0_34 = arith.constant 0 : index
    %50 = vector.load %arg3[%c0_32, %49, %c1_33, %c0_34] : memref<1x36x9x128xbf16, #tpu.memory_space<vmem>>, vector<1x8x8x128xbf16>
    %51 = vector.shape_cast %50 : vector<1x8x8x128xbf16> to vector<8x8x128xbf16>
    %52 = vector.shape_cast %51 : vector<8x8x128xbf16> to vector<64x128xbf16>
    %c5 = arith.constant 5 : index
    %c0_35 = arith.constant 0 : index
    %c0_36 = arith.constant 0 : index
    %53 = vector.load %arg4[%c5, %c0_35, %c0_36] : memref<9x128x128xbf16, #tpu.memory_space<vmem>>, vector<1x128x128xbf16>
    %54 = vector.shape_cast %53 : vector<1x128x128xbf16> to vector<128x128xbf16>
    %cst_37 = arith.constant dense<0.000000e+00> : vector<64x128xf32>
    %55 = tpu.matmul %52, %54, %cst_37 {dimension_numbers = #tpu.dot_dimension_numbers<[1], [0], [0], [1], [0, 0, 1, 1], [], []>} : vector<64x128xbf16>, vector<128x128xbf16>, vector<64x128xf32> -> vector<64x128xf32>
    %56 = arith.addf %47, %55 : vector<64x128xf32>
    %c1_i32 = arith.constant 1 : i32
    %57 = arith.addi %c1_i32, %1 : i32
    %c0_38 = arith.constant 0 : index
    %58 = arith.index_cast %57 : i32 to index
    %c0_39 = arith.constant 0 : index
    %c0_40 = arith.constant 0 : index
    %59 = vector.load %arg3[%c0_38, %58, %c0_39, %c0_40] : memref<1x36x9x128xbf16, #tpu.memory_space<vmem>>, vector<1x8x8x128xbf16>
    %60 = vector.shape_cast %59 : vector<1x8x8x128xbf16> to vector<8x8x128xbf16>
    %61 = vector.shape_cast %60 : vector<8x8x128xbf16> to vector<64x128xbf16>
    %c6 = arith.constant 6 : index
    %c0_41 = arith.constant 0 : index
    %c0_42 = arith.constant 0 : index
    %62 = vector.load %arg4[%c6, %c0_41, %c0_42] : memref<9x128x128xbf16, #tpu.memory_space<vmem>>, vector<1x128x128xbf16>
    %63 = vector.shape_cast %62 : vector<1x128x128xbf16> to vector<128x128xbf16>
    %cst_43 = arith.constant dense<0.000000e+00> : vector<64x128xf32>
    %64 = tpu.matmul %61, %63, %cst_43 {dimension_numbers = #tpu.dot_dimension_numbers<[1], [0], [0], [1], [0, 0, 1, 1], [], []>} : vector<64x128xbf16>, vector<128x128xbf16>, vector<64x128xf32> -> vector<64x128xf32>
    %65 = arith.addf %56, %64 : vector<64x128xf32>
    %c10_i32 = arith.constant 10 : i32
    %66 = arith.addi %c10_i32, %1 : i32
    %c0_44 = arith.constant 0 : index
    %67 = arith.index_cast %66 : i32 to index
    %c0_45 = arith.constant 0 : index
    %c0_46 = arith.constant 0 : index
    %68 = vector.load %arg3[%c0_44, %67, %c0_45, %c0_46] : memref<1x36x9x128xbf16, #tpu.memory_space<vmem>>, vector<1x8x8x128xbf16>
    %69 = vector.shape_cast %68 : vector<1x8x8x128xbf16> to vector<8x8x128xbf16>
    %70 = vector.shape_cast %69 : vector<8x8x128xbf16> to vector<64x128xbf16>
    %c7 = arith.constant 7 : index
    %c0_47 = arith.constant 0 : index
    %c0_48 = arith.constant 0 : index
    %71 = vector.load %arg4[%c7, %c0_47, %c0_48] : memref<9x128x128xbf16, #tpu.memory_space<vmem>>, vector<1x128x128xbf16>
    %72 = vector.shape_cast %71 : vector<1x128x128xbf16> to vector<128x128xbf16>
    %cst_49 = arith.constant dense<0.000000e+00> : vector<64x128xf32>
    %73 = tpu.matmul %70, %72, %cst_49 {dimension_numbers = #tpu.dot_dimension_numbers<[1], [0], [0], [1], [0, 0, 1, 1], [], []>} : vector<64x128xbf16>, vector<128x128xbf16>, vector<64x128xf32> -> vector<64x128xf32>
    %74 = arith.addf %65, %73 : vector<64x128xf32>
    %c1_i32_50 = arith.constant 1 : i32
    %75 = arith.addi %c1_i32_50, %1 : i32
    %c0_51 = arith.constant 0 : index
    %76 = arith.index_cast %75 : i32 to index
    %c1_52 = arith.constant 1 : index
    %c0_53 = arith.constant 0 : index
    %77 = vector.load %arg3[%c0_51, %76, %c1_52, %c0_53] : memref<1x36x9x128xbf16, #tpu.memory_space<vmem>>, vector<1x8x8x128xbf16>
    %78 = vector.shape_cast %77 : vector<1x8x8x128xbf16> to vector<8x8x128xbf16>
    %79 = vector.shape_cast %78 : vector<8x8x128xbf16> to vector<64x128xbf16>
    %c8 = arith.constant 8 : index
    %c0_54 = arith.constant 0 : index
    %c0_55 = arith.constant 0 : index
    %80 = vector.load %arg4[%c8, %c0_54, %c0_55] : memref<9x128x128xbf16, #tpu.memory_space<vmem>>, vector<1x128x128xbf16>
    %81 = vector.shape_cast %80 : vector<1x128x128xbf16> to vector<128x128xbf16>
    %cst_56 = arith.constant dense<0.000000e+00> : vector<64x128xf32>
    %82 = tpu.matmul %79, %81, %cst_56 {dimension_numbers = #tpu.dot_dimension_numbers<[1], [0], [0], [1], [0, 0, 1, 1], [], []>} : vector<64x128xbf16>, vector<128x128xbf16>, vector<64x128xf32> -> vector<64x128xf32>
    %83 = arith.addf %74, %82 : vector<64x128xf32>
    %cst_57 = arith.constant dense<0.000000e+00> : vector<128xf32>
    %84 = vector.multi_reduction <add>, %83, %cst_57 [0] : vector<64x128xf32> to vector<128xf32>
    %85 = vector.shape_cast %84 : vector<128xf32> to vector<1x128xf32>
    %c0_58 = arith.constant 0 : index
    %c0_59 = arith.constant 0 : index
    %c0_60 = arith.constant 0 : index
    %c0_61 = arith.constant 0 : index
    %86 = vector.load %arg8[%c0_58, %c0_59, %c0_60, %c0_61] : memref<1x1x2x128xf32, #tpu.memory_space<vmem>>, vector<1x1x1x128xf32>
    %87 = vector.shape_cast %86 : vector<1x1x1x128xf32> to vector<1x128xf32>
    %88 = vector.shape_cast %85 : vector<1x128xf32> to vector<1x1x1x128xf32>
    tpu.vector_store %arg8[%c0_58, %c0_59, %c0_60, %c0_61], %88 {strides = array<i32>} : memref<1x1x2x128xf32, #tpu.memory_space<vmem>>, vector<1x1x1x128xf32>,
    %89 = arith.mulf %83, %83 : vector<64x128xf32>
    %cst_62 = arith.constant dense<0.000000e+00> : vector<128xf32>
    %90 = vector.multi_reduction <add>, %89, %cst_62 [0] : vector<64x128xf32> to vector<128xf32>
    %91 = vector.shape_cast %90 : vector<128xf32> to vector<1x128xf32>
    %c0_63 = arith.constant 0 : index
    %c0_64 = arith.constant 0 : index
    %c1_65 = arith.constant 1 : index
    %c0_66 = arith.constant 0 : index
    %92 = vector.load %arg8[%c0_63, %c0_64, %c1_65, %c0_66] : memref<1x1x2x128xf32, #tpu.memory_space<vmem>>, vector<1x1x1x128xf32>
    %93 = vector.shape_cast %92 : vector<1x1x1x128xf32> to vector<1x128xf32>
    %94 = vector.shape_cast %91 : vector<1x128xf32> to vector<1x1x1x128xf32>
    tpu.vector_store %arg8[%c0_63, %c0_64, %c1_65, %c0_66], %94 {strides = array<i32>} : memref<1x1x2x128xf32, #tpu.memory_space<vmem>>, vector<1x1x1x128xf32>,
    %95 = arith.truncf %83 : vector<64x128xf32> to vector<64x128xbf16>
    %96 = vector.shape_cast %95 : vector<64x128xbf16> to vector<1x8x8x128xbf16>
    %c0_67 = arith.constant 0 : index
    %c0_68 = arith.constant 0 : index
    %c0_69 = arith.constant 0 : index
    %c0_70 = arith.constant 0 : index
    %97 = vector.load %arg6[%c0_67, %c0_68, %c0_69, %c0_70] : memref<1x8x8x128xbf16, #tpu.memory_space<vmem>>, vector<1x8x8x128xbf16>
    tpu.vector_store %arg6[%c0_67, %c0_68, %c0_69, %c0_70], %96 {strides = array<i32>} : memref<1x8x8x128xbf16, #tpu.memory_space<vmem>>, vector<1x8x8x128xbf16>,
    %c0_71 = arith.constant 0 : index
    %c0_72 = arith.constant 0 : index
    %98 = vector.load %arg5[%c0_71, %c0_72] : memref<128x128xbf16, #tpu.memory_space<vmem>>, vector<128x128xbf16>
    %cst_73 = arith.constant dense<0.000000e+00> : vector<64x128xf32>
    %99 = tpu.matmul %43, %98, %cst_73 {dimension_numbers = #tpu.dot_dimension_numbers<[1], [0], [0], [1], [0, 0, 1, 1], [], []>} : vector<64x128xbf16>, vector<128x128xbf16>, vector<64x128xf32> -> vector<64x128xf32>
    %100 = arith.truncf %99 : vector<64x128xf32> to vector<64x128xbf16>
    %101 = vector.shape_cast %100 : vector<64x128xbf16> to vector<1x8x8x128xbf16>
    %c0_74 = arith.constant 0 : index
    %c0_75 = arith.constant 0 : index
    %c0_76 = arith.constant 0 : index
    %c0_77 = arith.constant 0 : index
    %102 = vector.load %arg7[%c0_74, %c0_75, %c0_76, %c0_77] : memref<1x8x8x128xbf16, #tpu.memory_space<vmem>>, vector<1x8x8x128xbf16>
    tpu.vector_store %arg7[%c0_74, %c0_75, %c0_76, %c0_77], %101 {strides = array<i32>} : memref<1x8x8x128xbf16, #tpu.memory_space<vmem>>, vector<1x8x8x128xbf16>,
    return
  }
  func.func @transform_0(%arg0: i32, %arg1: i32, %arg2: i32) -> (i32, i32, i32, i32) {
    %c0_i32 = arith.constant 0 : i32
    %c0_i32_0 = arith.constant 0 : i32
    %c0_i32_1 = arith.constant 0 : i32
    %c0_i32_2 = arith.constant 0 : i32
    return %arg0, %c0_i32, %c0_i32_0, %c0_i32_1 : i32, i32, i32, i32
  }
  func.func @transform_1(%arg0: i32, %arg1: i32, %arg2: i32) -> (i32, i32, i32) {
    %c0_i32 = arith.constant 0 : i32
    %c0_i32_0 = arith.constant 0 : i32
    %c0_i32_1 = arith.constant 0 : i32
    return %c0_i32, %c0_i32_0, %arg1 : i32, i32, i32
  }
  func.func @transform_2(%arg0: i32, %arg1: i32, %arg2: i32) -> (i32, i32) {
    %c0_i32 = arith.constant 0 : i32
    %c0_i32_0 = arith.constant 0 : i32
    return %c0_i32, %arg1 : i32, i32
  }
  func.func @transform_3(%arg0: i32, %arg1: i32, %arg2: i32) -> (i32, i32, i32, i32) {
    %c0_i32 = arith.constant 0 : i32
    %c0_i32_0 = arith.constant 0 : i32
    return %arg0, %arg2, %c0_i32, %arg1 : i32, i32, i32, i32
  }
  func.func @transform_4(%arg0: i32, %arg1: i32, %arg2: i32) -> (i32, i32, i32, i32) {
    %c0_i32 = arith.constant 0 : i32
    %c0_i32_0 = arith.constant 0 : i32
    return %arg0, %arg2, %c0_i32, %arg1 : i32, i32, i32, i32
  }
  func.func @transform_5(%arg0: i32, %arg1: i32, %arg2: i32) -> (i32, i32, i32, i32) {
    %c0_i32 = arith.constant 0 : i32
    %c0_i32_0 = arith.constant 0 : i32
    return %arg0, %arg2, %c0_i32, %arg1 : i32, i32, i32, i32
  }
}

module attributes {stable_mosaic.version = 11 : i64} {
  func.func @_bn_relu_kernel(%arg0: i32, %arg1: memref<1x8x8x128xbf16, #tpu.memory_space<vmem>>, %arg2: memref<1x1x1x128xf32, #tpu.memory_space<vmem>>, %arg3: memref<1x1x1x128xf32, #tpu.memory_space<vmem>>, %arg4: memref<1x8x8x128xf32, #tpu.memory_space<vmem>>) attributes {dimension_semantics = [#tpu.dimension_semantics<parallel>], iteration_bounds = array<i64: 2>, scalar_prefetch = 0 : i64, scratch_operands = 0 : i64, tpu.core_type = #tpu.core_type<tc>, window_params = [{transform_indices = @transform_0, window_bounds = array<i64: 1, 8, 8, 128>}, {pipeline_mode = #tpu.pipeline_mode<synchronous>, transform_indices = @transform_1, window_bounds = array<i64: 1, 1, 1, 128>}, {pipeline_mode = #tpu.pipeline_mode<synchronous>, transform_indices = @transform_2, window_bounds = array<i64: 1, 1, 1, 128>}, {transform_indices = @transform_3, window_bounds = array<i64: 1, 8, 8, 128>}]} {
    %c0 = arith.constant 0 : index
    %c0_0 = arith.constant 0 : index
    %c0_1 = arith.constant 0 : index
    %c0_2 = arith.constant 0 : index
    %0 = vector.load %arg1[%c0, %c0_0, %c0_1, %c0_2] : memref<1x8x8x128xbf16, #tpu.memory_space<vmem>>, vector<1x8x8x128xbf16>
    %1 = arith.extf %0 : vector<1x8x8x128xbf16> to vector<1x8x8x128xf32>
    %c0_3 = arith.constant 0 : index
    %c0_4 = arith.constant 0 : index
    %c0_5 = arith.constant 0 : index
    %c0_6 = arith.constant 0 : index
    %2 = vector.load %arg2[%c0_3, %c0_4, %c0_5, %c0_6] : memref<1x1x1x128xf32, #tpu.memory_space<vmem>>, vector<1x1x1x128xf32>
    %3 = vector.broadcast %2 : vector<1x1x1x128xf32> to vector<1x8x8x128xf32>
    %4 = arith.mulf %1, %3 : vector<1x8x8x128xf32>
    %c0_7 = arith.constant 0 : index
    %c0_8 = arith.constant 0 : index
    %c0_9 = arith.constant 0 : index
    %c0_10 = arith.constant 0 : index
    %5 = vector.load %arg3[%c0_7, %c0_8, %c0_9, %c0_10] : memref<1x1x1x128xf32, #tpu.memory_space<vmem>>, vector<1x1x1x128xf32>
    %6 = vector.broadcast %5 : vector<1x1x1x128xf32> to vector<1x8x8x128xf32>
    %7 = arith.addf %4, %6 : vector<1x8x8x128xf32>
    %cst = arith.constant 0.000000e+00 : f32
    %8 = vector.broadcast %cst : f32 to vector<1x8x8x128xf32>
    %9 = arith.maximumf %7, %8 : vector<1x8x8x128xf32>
    %c0_11 = arith.constant 0 : index
    %c0_12 = arith.constant 0 : index
    %c0_13 = arith.constant 0 : index
    %c0_14 = arith.constant 0 : index
    %10 = vector.load %arg4[%c0_11, %c0_12, %c0_13, %c0_14] : memref<1x8x8x128xf32, #tpu.memory_space<vmem>>, vector<1x8x8x128xf32>
    tpu.vector_store %arg4[%c0_11, %c0_12, %c0_13, %c0_14], %9 {strides = array<i32>} : memref<1x8x8x128xf32, #tpu.memory_space<vmem>>, vector<1x8x8x128xf32>,
    return
  }
  func.func @transform_0(%arg0: i32) -> (i32, i32, i32, i32) {
    %c0_i32 = arith.constant 0 : i32
    %c0_i32_0 = arith.constant 0 : i32
    %c0_i32_1 = arith.constant 0 : i32
    %c0_i32_2 = arith.constant 0 : i32
    return %arg0, %c0_i32, %c0_i32_0, %c0_i32_1 : i32, i32, i32, i32
  }
  func.func @transform_1(%arg0: i32) -> (i32, i32, i32, i32) {
    %c0_i32 = arith.constant 0 : i32
    %c0_i32_0 = arith.constant 0 : i32
    %c0_i32_1 = arith.constant 0 : i32
    %c0_i32_2 = arith.constant 0 : i32
    %c0_i32_3 = arith.constant 0 : i32
    return %c0_i32, %c0_i32_0, %c0_i32_1, %c0_i32_2 : i32, i32, i32, i32
  }
  func.func @transform_2(%arg0: i32) -> (i32, i32, i32, i32) {
    %c0_i32 = arith.constant 0 : i32
    %c0_i32_0 = arith.constant 0 : i32
    %c0_i32_1 = arith.constant 0 : i32
    %c0_i32_2 = arith.constant 0 : i32
    %c0_i32_3 = arith.constant 0 : i32
    return %c0_i32, %c0_i32_0, %c0_i32_1, %c0_i32_2 : i32, i32, i32, i32
  }
  func.func @transform_3(%arg0: i32) -> (i32, i32, i32, i32) {
    %c0_i32 = arith.constant 0 : i32
    %c0_i32_0 = arith.constant 0 : i32
    %c0_i32_1 = arith.constant 0 : i32
    %c0_i32_2 = arith.constant 0 : i32
    return %arg0, %c0_i32, %c0_i32_0, %c0_i32_1 : i32, i32, i32, i32
  }
}

module attributes {stable_mosaic.version = 11 : i64} {
  func.func @kernel(%arg0: i32, %arg1: i32, %arg2: i32, %arg3: memref<1x10x10x128xbf16, #tpu.memory_space<vmem>>, %arg4: memref<9x128x128xbf16, #tpu.memory_space<vmem>>, %arg5: memref<1x8x8x128xbf16, #tpu.memory_space<vmem>>, %arg6: memref<1x8x8x128xbf16, #tpu.memory_space<vmem>>, %arg7: memref<1x1x2x128xf32, #tpu.memory_space<vmem>>) attributes {dimension_semantics = [#tpu.dimension_semantics<parallel>, #tpu.dimension_semantics<parallel>, #tpu.dimension_semantics<arbitrary>], iteration_bounds = array<i64: 2, 1, 1>, scalar_prefetch = 0 : i64, scratch_operands = 0 : i64, tpu.core_type = #tpu.core_type<tc>, window_params = [{transform_indices = @transform_0, window_bounds = array<i64: 1, 10, 10, 128>}, {transform_indices = @transform_1, window_bounds = array<i64: 9, 128, 128>}, {transform_indices = @transform_2, window_bounds = array<i64: 1, 8, 8, 128>}, {transform_indices = @transform_3, window_bounds = array<i64: 1, 8, 8, 128>}, {transform_indices = @transform_4, window_bounds = array<i64: 1, 1, 2, 128>}]} {
    %c8_i32 = arith.constant 8 : i32
    %0 = arith.muli %arg2, %c8_i32 : i32
    %1 = tpu.assume_multiple %0, 8 : i32
    %cst = arith.constant 0.000000e+00 : f32
    %2 = vector.broadcast %cst : f32 to vector<64x128xf32>
    %c0_i32 = arith.constant 0 : i32
    %3 = arith.addi %c0_i32, %1 : i32
    %c0 = arith.constant 0 : index
    %4 = arith.index_cast %3 : i32 to index
    %c0_0 = arith.constant 0 : index
    %c0_1 = arith.constant 0 : index
    %5 = vector.load %arg3[%c0, %4, %c0_0, %c0_1] : memref<1x10x10x128xbf16, #tpu.memory_space<vmem>>, vector<1x8x8x128xbf16>
    %6 = vector.shape_cast %5 : vector<1x8x8x128xbf16> to vector<8x8x128xbf16>
    %7 = vector.shape_cast %6 : vector<8x8x128xbf16> to vector<64x128xbf16>
    %c0_2 = arith.constant 0 : index
    %c0_3 = arith.constant 0 : index
    %c0_4 = arith.constant 0 : index
    %8 = vector.load %arg4[%c0_2, %c0_3, %c0_4] : memref<9x128x128xbf16, #tpu.memory_space<vmem>>, vector<1x128x128xbf16>
    %9 = vector.shape_cast %8 : vector<1x128x128xbf16> to vector<128x128xbf16>
    %cst_5 = arith.constant dense<0.000000e+00> : vector<64x128xf32>
    %10 = tpu.matmul %7, %9, %cst_5 {dimension_numbers = #tpu.dot_dimension_numbers<[1], [0], [0], [1], [0, 0, 1, 1], [], []>} : vector<64x128xbf16>, vector<128x128xbf16>, vector<64x128xf32> -> vector<64x128xf32>
    %11 = arith.addf %2, %10 : vector<64x128xf32>
    %c0_i32_6 = arith.constant 0 : i32
    %12 = arith.addi %c0_i32_6, %1 : i32
    %c0_7 = arith.constant 0 : index
    %13 = arith.index_cast %12 : i32 to index
    %c1 = arith.constant 1 : index
    %c0_8 = arith.constant 0 : index
    %14 = vector.load %arg3[%c0_7, %13, %c1, %c0_8] : memref<1x10x10x128xbf16, #tpu.memory_space<vmem>>, vector<1x8x8x128xbf16>
    %15 = vector.shape_cast %14 : vector<1x8x8x128xbf16> to vector<8x8x128xbf16>
    %16 = vector.shape_cast %15 : vector<8x8x128xbf16> to vector<64x128xbf16>
    %c1_9 = arith.constant 1 : index
    %c0_10 = arith.constant 0 : index
    %c0_11 = arith.constant 0 : index
    %17 = vector.load %arg4[%c1_9, %c0_10, %c0_11] : memref<9x128x128xbf16, #tpu.memory_space<vmem>>, vector<1x128x128xbf16>
    %18 = vector.shape_cast %17 : vector<1x128x128xbf16> to vector<128x128xbf16>
    %cst_12 = arith.constant dense<0.000000e+00> : vector<64x128xf32>
    %19 = tpu.matmul %16, %18, %cst_12 {dimension_numbers = #tpu.dot_dimension_numbers<[1], [0], [0], [1], [0, 0, 1, 1], [], []>} : vector<64x128xbf16>, vector<128x128xbf16>, vector<64x128xf32> -> vector<64x128xf32>
    %20 = arith.addf %11, %19 : vector<64x128xf32>
    %c0_i32_13 = arith.constant 0 : i32
    %21 = arith.addi %c0_i32_13, %1 : i32
    %c0_14 = arith.constant 0 : index
    %22 = arith.index_cast %21 : i32 to index
    %c2 = arith.constant 2 : index
    %c0_15 = arith.constant 0 : index
    %23 = vector.load %arg3[%c0_14, %22, %c2, %c0_15] : memref<1x10x10x128xbf16, #tpu.memory_space<vmem>>, vector<1x8x8x128xbf16>
    %24 = vector.shape_cast %23 : vector<1x8x8x128xbf16> to vector<8x8x128xbf16>
    %25 = vector.shape_cast %24 : vector<8x8x128xbf16> to vector<64x128xbf16>
    %c2_16 = arith.constant 2 : index
    %c0_17 = arith.constant 0 : index
    %c0_18 = arith.constant 0 : index
    %26 = vector.load %arg4[%c2_16, %c0_17, %c0_18] : memref<9x128x128xbf16, #tpu.memory_space<vmem>>, vector<1x128x128xbf16>
    %27 = vector.shape_cast %26 : vector<1x128x128xbf16> to vector<128x128xbf16>
    %cst_19 = arith.constant dense<0.000000e+00> : vector<64x128xf32>
    %28 = tpu.matmul %25, %27, %cst_19 {dimension_numbers = #tpu.dot_dimension_numbers<[1], [0], [0], [1], [0, 0, 1, 1], [], []>} : vector<64x128xbf16>, vector<128x128xbf16>, vector<64x128xf32> -> vector<64x128xf32>
    %29 = arith.addf %20, %28 : vector<64x128xf32>
    %c1_i32 = arith.constant 1 : i32
    %30 = arith.addi %c1_i32, %1 : i32
    %c0_20 = arith.constant 0 : index
    %31 = arith.index_cast %30 : i32 to index
    %c0_21 = arith.constant 0 : index
    %c0_22 = arith.constant 0 : index
    %32 = vector.load %arg3[%c0_20, %31, %c0_21, %c0_22] : memref<1x10x10x128xbf16, #tpu.memory_space<vmem>>, vector<1x8x8x128xbf16>
    %33 = vector.shape_cast %32 : vector<1x8x8x128xbf16> to vector<8x8x128xbf16>
    %34 = vector.shape_cast %33 : vector<8x8x128xbf16> to vector<64x128xbf16>
    %c3 = arith.constant 3 : index
    %c0_23 = arith.constant 0 : index
    %c0_24 = arith.constant 0 : index
    %35 = vector.load %arg4[%c3, %c0_23, %c0_24] : memref<9x128x128xbf16, #tpu.memory_space<vmem>>, vector<1x128x128xbf16>
    %36 = vector.shape_cast %35 : vector<1x128x128xbf16> to vector<128x128xbf16>
    %cst_25 = arith.constant dense<0.000000e+00> : vector<64x128xf32>
    %37 = tpu.matmul %34, %36, %cst_25 {dimension_numbers = #tpu.dot_dimension_numbers<[1], [0], [0], [1], [0, 0, 1, 1], [], []>} : vector<64x128xbf16>, vector<128x128xbf16>, vector<64x128xf32> -> vector<64x128xf32>
    %38 = arith.addf %29, %37 : vector<64x128xf32>
    %c1_i32_26 = arith.constant 1 : i32
    %39 = arith.addi %c1_i32_26, %1 : i32
    %c0_27 = arith.constant 0 : index
    %40 = arith.index_cast %39 : i32 to index
    %c1_28 = arith.constant 1 : index
    %c0_29 = arith.constant 0 : index
    %41 = vector.load %arg3[%c0_27, %40, %c1_28, %c0_29] : memref<1x10x10x128xbf16, #tpu.memory_space<vmem>>, vector<1x8x8x128xbf16>
    %42 = vector.shape_cast %41 : vector<1x8x8x128xbf16> to vector<8x8x128xbf16>
    %43 = vector.shape_cast %42 : vector<8x8x128xbf16> to vector<64x128xbf16>
    %c4 = arith.constant 4 : index
    %c0_30 = arith.constant 0 : index
    %c0_31 = arith.constant 0 : index
    %44 = vector.load %arg4[%c4, %c0_30, %c0_31] : memref<9x128x128xbf16, #tpu.memory_space<vmem>>, vector<1x128x128xbf16>
    %45 = vector.shape_cast %44 : vector<1x128x128xbf16> to vector<128x128xbf16>
    %cst_32 = arith.constant dense<0.000000e+00> : vector<64x128xf32>
    %46 = tpu.matmul %43, %45, %cst_32 {dimension_numbers = #tpu.dot_dimension_numbers<[1], [0], [0], [1], [0, 0, 1, 1], [], []>} : vector<64x128xbf16>, vector<128x128xbf16>, vector<64x128xf32> -> vector<64x128xf32>
    %47 = arith.addf %38, %46 : vector<64x128xf32>
    %c1_i32_33 = arith.constant 1 : i32
    %48 = arith.addi %c1_i32_33, %1 : i32
    %c0_34 = arith.constant 0 : index
    %49 = arith.index_cast %48 : i32 to index
    %c2_35 = arith.constant 2 : index
    %c0_36 = arith.constant 0 : index
    %50 = vector.load %arg3[%c0_34, %49, %c2_35, %c0_36] : memref<1x10x10x128xbf16, #tpu.memory_space<vmem>>, vector<1x8x8x128xbf16>
    %51 = vector.shape_cast %50 : vector<1x8x8x128xbf16> to vector<8x8x128xbf16>
    %52 = vector.shape_cast %51 : vector<8x8x128xbf16> to vector<64x128xbf16>
    %c5 = arith.constant 5 : index
    %c0_37 = arith.constant 0 : index
    %c0_38 = arith.constant 0 : index
    %53 = vector.load %arg4[%c5, %c0_37, %c0_38] : memref<9x128x128xbf16, #tpu.memory_space<vmem>>, vector<1x128x128xbf16>
    %54 = vector.shape_cast %53 : vector<1x128x128xbf16> to vector<128x128xbf16>
    %cst_39 = arith.constant dense<0.000000e+00> : vector<64x128xf32>
    %55 = tpu.matmul %52, %54, %cst_39 {dimension_numbers = #tpu.dot_dimension_numbers<[1], [0], [0], [1], [0, 0, 1, 1], [], []>} : vector<64x128xbf16>, vector<128x128xbf16>, vector<64x128xf32> -> vector<64x128xf32>
    %56 = arith.addf %47, %55 : vector<64x128xf32>
    %c2_i32 = arith.constant 2 : i32
    %57 = arith.addi %c2_i32, %1 : i32
    %c0_40 = arith.constant 0 : index
    %58 = arith.index_cast %57 : i32 to index
    %c0_41 = arith.constant 0 : index
    %c0_42 = arith.constant 0 : index
    %59 = vector.load %arg3[%c0_40, %58, %c0_41, %c0_42] : memref<1x10x10x128xbf16, #tpu.memory_space<vmem>>, vector<1x8x8x128xbf16>
    %60 = vector.shape_cast %59 : vector<1x8x8x128xbf16> to vector<8x8x128xbf16>
    %61 = vector.shape_cast %60 : vector<8x8x128xbf16> to vector<64x128xbf16>
    %c6 = arith.constant 6 : index
    %c0_43 = arith.constant 0 : index
    %c0_44 = arith.constant 0 : index
    %62 = vector.load %arg4[%c6, %c0_43, %c0_44] : memref<9x128x128xbf16, #tpu.memory_space<vmem>>, vector<1x128x128xbf16>
    %63 = vector.shape_cast %62 : vector<1x128x128xbf16> to vector<128x128xbf16>
    %cst_45 = arith.constant dense<0.000000e+00> : vector<64x128xf32>
    %64 = tpu.matmul %61, %63, %cst_45 {dimension_numbers = #tpu.dot_dimension_numbers<[1], [0], [0], [1], [0, 0, 1, 1], [], []>} : vector<64x128xbf16>, vector<128x128xbf16>, vector<64x128xf32> -> vector<64x128xf32>
    %65 = arith.addf %56, %64 : vector<64x128xf32>
    %c2_i32_46 = arith.constant 2 : i32
    %66 = arith.addi %c2_i32_46, %1 : i32
    %c0_47 = arith.constant 0 : index
    %67 = arith.index_cast %66 : i32 to index
    %c1_48 = arith.constant 1 : index
    %c0_49 = arith.constant 0 : index
    %68 = vector.load %arg3[%c0_47, %67, %c1_48, %c0_49] : memref<1x10x10x128xbf16, #tpu.memory_space<vmem>>, vector<1x8x8x128xbf16>
    %69 = vector.shape_cast %68 : vector<1x8x8x128xbf16> to vector<8x8x128xbf16>
    %70 = vector.shape_cast %69 : vector<8x8x128xbf16> to vector<64x128xbf16>
    %c7 = arith.constant 7 : index
    %c0_50 = arith.constant 0 : index
    %c0_51 = arith.constant 0 : index
    %71 = vector.load %arg4[%c7, %c0_50, %c0_51] : memref<9x128x128xbf16, #tpu.memory_space<vmem>>, vector<1x128x128xbf16>
    %72 = vector.shape_cast %71 : vector<1x128x128xbf16> to vector<128x128xbf16>
    %cst_52 = arith.constant dense<0.000000e+00> : vector<64x128xf32>
    %73 = tpu.matmul %70, %72, %cst_52 {dimension_numbers = #tpu.dot_dimension_numbers<[1], [0], [0], [1], [0, 0, 1, 1], [], []>} : vector<64x128xbf16>, vector<128x128xbf16>, vector<64x128xf32> -> vector<64x128xf32>
    %74 = arith.addf %65, %73 : vector<64x128xf32>
    %c2_i32_53 = arith.constant 2 : i32
    %75 = arith.addi %c2_i32_53, %1 : i32
    %c0_54 = arith.constant 0 : index
    %76 = arith.index_cast %75 : i32 to index
    %c2_55 = arith.constant 2 : index
    %c0_56 = arith.constant 0 : index
    %77 = vector.load %arg3[%c0_54, %76, %c2_55, %c0_56] : memref<1x10x10x128xbf16, #tpu.memory_space<vmem>>, vector<1x8x8x128xbf16>
    %78 = vector.shape_cast %77 : vector<1x8x8x128xbf16> to vector<8x8x128xbf16>
    %79 = vector.shape_cast %78 : vector<8x8x128xbf16> to vector<64x128xbf16>
    %c8 = arith.constant 8 : index
    %c0_57 = arith.constant 0 : index
    %c0_58 = arith.constant 0 : index
    %80 = vector.load %arg4[%c8, %c0_57, %c0_58] : memref<9x128x128xbf16, #tpu.memory_space<vmem>>, vector<1x128x128xbf16>
    %81 = vector.shape_cast %80 : vector<1x128x128xbf16> to vector<128x128xbf16>
    %cst_59 = arith.constant dense<0.000000e+00> : vector<64x128xf32>
    %82 = tpu.matmul %79, %81, %cst_59 {dimension_numbers = #tpu.dot_dimension_numbers<[1], [0], [0], [1], [0, 0, 1, 1], [], []>} : vector<64x128xbf16>, vector<128x128xbf16>, vector<64x128xf32> -> vector<64x128xf32>
    %83 = arith.addf %74, %82 : vector<64x128xf32>
    %c0_60 = arith.constant 0 : index
    %c0_61 = arith.constant 0 : index
    %c0_62 = arith.constant 0 : index
    %c0_63 = arith.constant 0 : index
    %84 = vector.load %arg5[%c0_60, %c0_61, %c0_62, %c0_63] : memref<1x8x8x128xbf16, #tpu.memory_space<vmem>>, vector<1x8x8x128xbf16>
    %85 = vector.shape_cast %84 : vector<1x8x8x128xbf16> to vector<64x128xbf16>
    %86 = arith.extf %85 : vector<64x128xbf16> to vector<64x128xf32>
    %87 = arith.addf %83, %86 : vector<64x128xf32>
    %cst_64 = arith.constant dense<0.000000e+00> : vector<128xf32>
    %88 = vector.multi_reduction <add>, %87, %cst_64 [0] : vector<64x128xf32> to vector<128xf32>
    %89 = vector.shape_cast %88 : vector<128xf32> to vector<1x128xf32>
    %c0_65 = arith.constant 0 : index
    %c0_66 = arith.constant 0 : index
    %c0_67 = arith.constant 0 : index
    %c0_68 = arith.constant 0 : index
    %90 = vector.load %arg7[%c0_65, %c0_66, %c0_67, %c0_68] : memref<1x1x2x128xf32, #tpu.memory_space<vmem>>, vector<1x1x1x128xf32>
    %91 = vector.shape_cast %90 : vector<1x1x1x128xf32> to vector<1x128xf32>
    %92 = vector.shape_cast %89 : vector<1x128xf32> to vector<1x1x1x128xf32>
    tpu.vector_store %arg7[%c0_65, %c0_66, %c0_67, %c0_68], %92 {strides = array<i32>} : memref<1x1x2x128xf32, #tpu.memory_space<vmem>>, vector<1x1x1x128xf32>,
    %93 = arith.mulf %87, %87 : vector<64x128xf32>
    %cst_69 = arith.constant dense<0.000000e+00> : vector<128xf32>
    %94 = vector.multi_reduction <add>, %93, %cst_69 [0] : vector<64x128xf32> to vector<128xf32>
    %95 = vector.shape_cast %94 : vector<128xf32> to vector<1x128xf32>
    %c0_70 = arith.constant 0 : index
    %c0_71 = arith.constant 0 : index
    %c1_72 = arith.constant 1 : index
    %c0_73 = arith.constant 0 : index
    %96 = vector.load %arg7[%c0_70, %c0_71, %c1_72, %c0_73] : memref<1x1x2x128xf32, #tpu.memory_space<vmem>>, vector<1x1x1x128xf32>
    %97 = vector.shape_cast %96 : vector<1x1x1x128xf32> to vector<1x128xf32>
    %98 = vector.shape_cast %95 : vector<1x128xf32> to vector<1x1x1x128xf32>
    tpu.vector_store %arg7[%c0_70, %c0_71, %c1_72, %c0_73], %98 {strides = array<i32>} : memref<1x1x2x128xf32, #tpu.memory_space<vmem>>, vector<1x1x1x128xf32>,
    %99 = arith.truncf %87 : vector<64x128xf32> to vector<64x128xbf16>
    %100 = vector.shape_cast %99 : vector<64x128xbf16> to vector<1x8x8x128xbf16>
    %c0_74 = arith.constant 0 : index
    %c0_75 = arith.constant 0 : index
    %c0_76 = arith.constant 0 : index
    %c0_77 = arith.constant 0 : index
    %101 = vector.load %arg6[%c0_74, %c0_75, %c0_76, %c0_77] : memref<1x8x8x128xbf16, #tpu.memory_space<vmem>>, vector<1x8x8x128xbf16>
    tpu.vector_store %arg6[%c0_74, %c0_75, %c0_76, %c0_77], %100 {strides = array<i32>} : memref<1x8x8x128xbf16, #tpu.memory_space<vmem>>, vector<1x8x8x128xbf16>,
    return
  }
  func.func @transform_0(%arg0: i32, %arg1: i32, %arg2: i32) -> (i32, i32, i32, i32) {
    %c0_i32 = arith.constant 0 : i32
    %c0_i32_0 = arith.constant 0 : i32
    %c0_i32_1 = arith.constant 0 : i32
    %c0_i32_2 = arith.constant 0 : i32
    return %arg0, %c0_i32, %c0_i32_0, %c0_i32_1 : i32, i32, i32, i32
  }
  func.func @transform_1(%arg0: i32, %arg1: i32, %arg2: i32) -> (i32, i32, i32) {
    %c0_i32 = arith.constant 0 : i32
    %c0_i32_0 = arith.constant 0 : i32
    %c0_i32_1 = arith.constant 0 : i32
    return %c0_i32, %c0_i32_0, %arg1 : i32, i32, i32
  }
  func.func @transform_2(%arg0: i32, %arg1: i32, %arg2: i32) -> (i32, i32, i32, i32) {
    %c0_i32 = arith.constant 0 : i32
    %c0_i32_0 = arith.constant 0 : i32
    return %arg0, %arg2, %c0_i32, %arg1 : i32, i32, i32, i32
  }
  func.func @transform_3(%arg0: i32, %arg1: i32, %arg2: i32) -> (i32, i32, i32, i32) {
    %c0_i32 = arith.constant 0 : i32
    %c0_i32_0 = arith.constant 0 : i32
    return %arg0, %arg2, %c0_i32, %arg1 : i32, i32, i32, i32
  }
  func.func @transform_4(%arg0: i32, %arg1: i32, %arg2: i32) -> (i32, i32, i32, i32) {
    %c0_i32 = arith.constant 0 : i32
    %c0_i32_0 = arith.constant 0 : i32
    return %arg0, %arg2, %c0_i32, %arg1 : i32, i32, i32, i32
  }
}

</mosaic_0001>

<llo_original>
// kernel: basic_block_forward.7
$region0: #{basic_block_forward.7}
  #allocation0 [shape = 'u32[]', space=smem, size = 0x4, offset = 0x4, fixed_abs, tag = 'smem constant byte address 0x4 - core index']
  #allocation1 [shape = 'u32[72,128]{1,0:T(1,128)}', space=vmem, size = 0x9000, scoped, tag = 'internal scratch']
  %s0 = inlined_call_operand.vmem [shape: bf16[2,8,8,128], index: 0, kind: input, shape index: {}]
  %s1 = inlined_call_operand.vmem [shape: f32[1,1,1,128], index: 1, kind: input, shape index: {}]
  %s2 = inlined_call_operand.vmem [shape: f32[1,1,1,128], index: 2, kind: input, shape index: {}]
  %s3 = inlined_call_operand.vmem [shape: f32[2,8,8,128], index: 3, kind: output, shape index: {}]
  %s4 = sld [smem:[#allocation0]]
  $region45: #{basic_block_forward.7} parent=0
    _
  %s6 = ssub.s32 1, %s4
  %s7 = scalar_select 0, %s6, %s4
  loop: start=0, step=1, limit=4
  $region2: #{basic_block_forward.7} parent=0 // loop_pre_header
    _
  $region3: #{basic_block_forward.7} parent=0 // loop_header
    %s9 = sphi 0, %s13
    %p10 = scmp.ge.s32.totalorder %s9, 4
    %s19 = sphi 0, %s21
    %s22 = sphi 0, %s19
    %s23 = sphi 0, %s22
    %s39 = sphi 0, %s23
    %s43 = sphi 0, %s43
    %s45 = sphi 0, %s43
    %s46 = sphi 0, %s45
    %s60 = sphi 0, %s46
    %s64 = sphi 0, %s64
    %s66 = sphi 0, %s64
    %s67 = sphi 0, %s66
    %s81 = sphi 0, %s67
    %s87 = sphi 0, %s89
    %s90 = sphi 0, %s87
    %s91 = sphi 0, %s90
    %s107 = sphi 0, %s91
  $region4: #{basic_block_forward.7} parent=0 // loop_header_branch
    %12 = sbr.rel (%p10) target = $region8
  $region5: #{basic_block_forward.7} parent=0 // loop_body
    %s14 = ssub.s32 %s9, 1
    %s15 = ssub.s32 %s9, 2
    %s16 = sadd.s32 %s9, 1
    %s17 = ssub.s32 %s9, %s16
    %p18 = scmp.eq.s32.totalorder %s17, 0
    %s20 = sadd.s32 %s19, 1
    %s21 = scalar_select %p18, %s19, %s20
    %p24 = pneg %p18
    %p25 = scmp.eq.s32.totalorder %s9, 1
    %p26 = por %p24, %p25
    %p27 = scmp.ne.s32.totalorder %s19, %s22
    %p28 = scmp.eq.s32.totalorder %s9, 0
    %p29 = por %p27, %p28
    %p30 = scmp.ne.s32.totalorder %s19, %s22
    %p31 = scmp.eq.s32.totalorder %s14, 1
    %p32 = por %p30, %p31
    %p33 = scmp.ne.s32.totalorder %s22, %s23
    %p34 = scmp.eq.s32.totalorder %s14, 0
    %p35 = por %p33, %p34
    %p36 = scmp.ne.s32.totalorder %s22, %s23
    %p37 = scmp.eq.s32.totalorder %s15, 1
    %p38 = por %p36, %p37
    %p40 = scmp.ne.s32.totalorder %s23, %s39
    %p41 = scmp.eq.s32.totalorder %s15, 0
    %p42 = por %p40, %p41
    %s44 = sadd.s32 %s43, 1
    %p47 = scmp.eq.s32.totalorder %s9, 1
    %p48 = scmp.ne.s32.totalorder %s43, %s45
    %p49 = scmp.eq.s32.totalorder %s9, 0
    %p50 = por %p48, %p49
    %p51 = scmp.ne.s32.totalorder %s43, %s45
    %p52 = scmp.eq.s32.totalorder %s14, 1
    %p53 = por %p51, %p52
    %p54 = scmp.ne.s32.totalorder %s45, %s46
    %p55 = scmp.eq.s32.totalorder %s14, 0
    %p56 = por %p54, %p55
    %p57 = scmp.ne.s32.totalorder %s45, %s46
    %p58 = scmp.eq.s32.totalorder %s15, 1
    %p59 = por %p57, %p58
    %p61 = scmp.ne.s32.totalorder %s46, %s60
    %p62 = scmp.eq.s32.totalorder %s15, 0
    %p63 = por %p61, %p62
    %s65 = sadd.s32 %s64, 1
    %p68 = scmp.eq.s32.totalorder %s9, 1
    %p69 = scmp.ne.s32.totalorder %s64, %s66
    %p70 = scmp.eq.s32.totalorder %s9, 0
    %p71 = por %p69, %p70
    %p72 = scmp.ne.s32.totalorder %s64, %s66
    %p73 = scmp.eq.s32.totalorder %s14, 1
    %p74 = por %p72, %p73
    %p75 = scmp.ne.s32.totalorder %s66, %s67
    %p76 = scmp.eq.s32.totalorder %s14, 0
    %p77 = por %p75, %p76
    %p78 = scmp.ne.s32.totalorder %s66, %s67
    %p79 = scmp.eq.s32.totalorder %s15, 1
    %p80 = por %p78, %p79
    %p82 = scmp.ne.s32.totalorder %s67, %s81
    %p83 = scmp.eq.s32.totalorder %s15, 0
    %p84 = por %p82, %p83
    %s85 = ssub.s32 %s9, %s16
    %p86 = scmp.eq.s32.totalorder %s85, 0
    %s88 = sadd.s32 %s87, 1
    %s89 = scalar_select %p86, %s87, %s88
    %p92 = pneg %p86
    %p93 = scmp.eq.s32.totalorder %s9, 1
    %p94 = por %p92, %p93
    %p95 = scmp.ne.s32.totalorder %s87, %s90
    %p96 = scmp.eq.s32.totalorder %s9, 0
    %p97 = por %p95, %p96
    %p98 = scmp.ne.s32.totalorder %s87, %s90
    %p99 = scmp.eq.s32.totalorder %s14, 1
    %p100 = por %p98, %p99
    %p101 = scmp.ne.s32.totalorder %s90, %s91
    %p102 = scmp.eq.s32.totalorder %s14, 0
    %p103 = por %p101, %p102
    %p104 = scmp.ne.s32.totalorder %s90, %s91
    %p105 = scmp.eq.s32.totalorder %s15, 1
    %p106 = por %p104, %p105
    %p108 = scmp.ne.s32.totalorder %s91, %s107
    %p109 = scmp.eq.s32.totalorder %s15, 0
    %p110 = por %p108, %p109
    %p111 = scmp.le.s32.totalorder 1, %s9
    %p112 = scmp.lt.s32.totalorder %s9, 3
    %p113 = pnand %p111, %p112
    %p114 = pneg %p113
    // Predicated region
    $region9: #{basic_block_forward.7} parent=5 // pred_check
      _
    $region10: #{basic_block_forward.7} parent=5 // pred_check_branch
      %116 = sbr.rel (%p113) target = $region12
    $region11: #{basic_block_forward.7} parent=5 // pred_region
      %s117 = ssub.s32 %s9, 1
      // Predicated region
      $region13: #{basic_block_forward.7} parent=11 // pred_check
        %p118 = pneg %p56
      $region14: #{basic_block_forward.7} parent=11 // pred_check_branch
        %120 = sbr.rel (%p118) target = $region16
      $region15: #{basic_block_forward.7} parent=11 // pred_region
        _
      $region16: #{basic_block_forward.7} parent=11 // pred_fallthru
        _
      // Predicated region
      $region17: #{basic_block_forward.7} parent=11 // pred_check
        %p121 = pneg %p77
      $region18: #{basic_block_forward.7} parent=11 // pred_check_branch
        %123 = sbr.rel (%p121) target = $region20
      $region19: #{basic_block_forward.7} parent=11 // pred_region
        _
      $region20: #{basic_block_forward.7} parent=11 // pred_fallthru
        _
    $region12: #{basic_block_forward.7} parent=5 // pred_fallthru
      _
    %p124 = scmp.lt.s32.totalorder %s9, 2
    // Predicated region
    $region21: #{basic_block_forward.7} parent=5 // pred_check
      %p125 = pneg %p124
    $region22: #{basic_block_forward.7} parent=5 // pred_check_branch
      %127 = sbr.rel (%p125) target = $region24
    $region23: #{basic_block_forward.7} parent=5 // pred_region
      // Predicated region
      $region25: #{basic_block_forward.7} parent=23 // pred_check
        %p128 = pneg %p29
      $region26: #{basic_block_forward.7} parent=23 // pred_check_branch
        %130 = sbr.rel (%p128) target = $region28
      $region27: #{basic_block_forward.7} parent=23 // pred_region
        %p131 = scmp.lt.s32.totalorder %s9, 1
        %s132 = scalar_select %p131, %s9, 1
        %s133 = smul.addr %s132, 8
        %s134 = smul.addr %s133, 4
        %s135 = scalar_lea.vmem %s0, %s134
      $region28: #{basic_block_forward.7} parent=23 // pred_fallthru
        _
    $region24: #{basic_block_forward.7} parent=5 // pred_fallthru
      _
    %p136 = scmp.le.s32.totalorder 1, %s9
    %p137 = scmp.lt.s32.totalorder %s9, 3
    %p138 = pnand %p136, %p137
    %p139 = pneg %p138
    // Predicated region
    $region29: #{basic_block_forward.7} parent=5 // pred_check
      _
    $region30: #{basic_block_forward.7} parent=5 // pred_check_branch
      %141 = sbr.rel (%p138) target = $region32
    $region31: #{basic_block_forward.7} parent=5 // pred_region
      %s142 = ssub.s32 %s9, 1
      %p143 = scmp.lt.s32.totalorder %s14, 1
      %s144 = scalar_select %p143, %s14, 1
      %s145 = smul.addr %s144, 8
      %s146 = smul.addr %s145, 4
      %s147 = scalar_lea.vmem %s0, %s146
      %p148 = pneg %p35
      %p149 = pneg %p32
      %p150 = pneg %p56
      %p151 = pneg %p53
      %p152 = pneg %p77
      %p153 = pneg %p74
      %p154 = pneg %p103
      %p155 = pneg %p100
      %p156 = scmp.lt.s32.totalorder %s14, 1
      %s157 = scalar_select %p156, %s14, 1
      %s158 = smul.addr %s157, 8
      %s159 = smul.addr %s158, 8
      %s160 = scalar_lea.vmem %s3, %s159
      %p161 = scmp.lt.s32.totalorder %s14, 1
      %s162 = scalar_select %p161, %s14, 1
      %s163 = smul.addr %s162, 8
      %s164 = smul.addr %s163, 4
      %s165 = scalar_lea.vmem %s0, %s164
      %p166 = scmp.lt.s32.totalorder %s14, 1
      %s167 = scalar_select %p166, %s14, 1
      %s168 = smul.addr %s167, 8
      %s169 = smul.addr %s168, 8
      %s170 = scalar_lea.vmem %s3, %s169
      %v171 = vld [vmem:[%s165] sm:$0xf]
      %v172 = vld [vmem:[%s165 + $0x4] sm:$0xf]
      %v173 = vld [vmem:[%s165 + $0x8] sm:$0xf]
      %v174 = vld [vmem:[%s165 + $0xc] sm:$0xf]
      %v175 = vld [vmem:[%s165 + $0x10] sm:$0xf]
      %v176 = vld [vmem:[%s165 + $0x14] sm:$0xf]
      %v177 = vld [vmem:[%s165 + $0x18] sm:$0xf]
      %v178 = vld [vmem:[%s165 + $0x1c] sm:$0xf]
      %v179 = vunpack.c.l.bf16 %v171
      %v180 = vunpack.c.l.bf16 %v172
      %v181 = vunpack.c.l.bf16 %v173
      %v182 = vunpack.c.l.bf16 %v174
      %v183 = vunpack.c.l.bf16 %v175
      %v184 = vunpack.c.l.bf16 %v176
      %v185 = vunpack.c.l.bf16 %v177
      %v186 = vunpack.c.l.bf16 %v178
      %v187 = vld [vmem:[%s1] sm:$0x1]
      %v189 = vperm.slane %v187, 0
      %v191 = vmul.f32 %v179, %v189
      %v192 = vmul.f32 %v180, %v189
      %v193 = vmul.f32 %v181, %v189
      %v194 = vmul.f32 %v182, %v189
      %v195 = vmul.f32 %v183, %v189
      %v196 = vmul.f32 %v184, %v189
      %v197 = vmul.f32 %v185, %v189
      %v198 = vmul.f32 %v186, %v189
      %v199 = vld [vmem:[%s2] sm:$0x1]
      %v201 = vperm.slane %v199, 0
      %v203 = vadd.f32 %v191, %v201
      %v204 = vadd.f32 %v192, %v201
      %v205 = vadd.f32 %v193, %v201
      %v206 = vadd.f32 %v194, %v201
      %v207 = vadd.f32 %v195, %v201
      %v208 = vadd.f32 %v196, %v201
      %v209 = vadd.f32 %v197, %v201
      %v210 = vadd.f32 %v198, %v201
      %v211 = vmax.f32 %v203, 0.0
      %v212 = vmax.f32 %v204, 0.0
      %v213 = vmax.f32 %v205, 0.0
      %v214 = vmax.f32 %v206, 0.0
      %v215 = vmax.f32 %v207, 0.0
      %v216 = vmax.f32 %v208, 0.0
      %v217 = vmax.f32 %v209, 0.0
      %v218 = vmax.f32 %v210, 0.0
      %219 = vst [vmem:[%s170] sm:$0xff] %v211
      %220 = vst [vmem:[%s170 + $0x8] sm:$0xff] %v212
      %221 = vst [vmem:[%s170 + $0x10] sm:$0xff] %v213
      %222 = vst [vmem:[%s170 + $0x18] sm:$0xff] %v214
      %223 = vst [vmem:[%s170 + $0x20] sm:$0xff] %v215
      %224 = vst [vmem:[%s170 + $0x28] sm:$0xff] %v216
      %225 = vst [vmem:[%s170 + $0x30] sm:$0xff] %v217
      %226 = vst [vmem:[%s170 + $0x38] sm:$0xff] %v218
      %p227 = scmp.lt.s32.totalorder %s14, 1
      %s228 = scalar_select %p227, %s14, 1
      %s229 = smul.addr %s228, 8
      %s230 = smul.addr %s229, 8
      %s231 = scalar_lea.vmem %s3, %s230
      // Predicated region
      $region33: #{basic_block_forward.7} parent=31 // pred_check
        %p232 = pneg %p100
      $region34: #{basic_block_forward.7} parent=31 // pred_check_branch
        %234 = sbr.rel (%p232) target = $region36
      $region35: #{basic_block_forward.7} parent=31 // pred_region
        _
      $region36: #{basic_block_forward.7} parent=31 // pred_fallthru
        _
    $region32: #{basic_block_forward.7} parent=5 // pred_fallthru
      _
    %p235 = scmp.le.s32.totalorder 2, %s9
    // Predicated region
    $region37: #{basic_block_forward.7} parent=5 // pred_check
      %p236 = pneg %p235
    $region38: #{basic_block_forward.7} parent=5 // pred_check_branch
      %238 = sbr.rel (%p236) target = $region40
    $region39: #{basic_block_forward.7} parent=5 // pred_region
      %s239 = ssub.s32 %s9, 2
      // Predicated region
      $region41: #{basic_block_forward.7} parent=39 // pred_check
        %p240 = pneg %p106
      $region42: #{basic_block_forward.7} parent=39 // pred_check_branch
        %242 = sbr.rel (%p240) target = $region44
      $region43: #{basic_block_forward.7} parent=39 // pred_region
        %p243 = scmp.lt.s32.totalorder %s15, 1
        %s244 = scalar_select %p243, %s15, 1
        %s245 = smul.addr %s244, 8
        %s246 = smul.addr %s245, 8
        %s247 = scalar_lea.vmem %s3, %s246
      $region44: #{basic_block_forward.7} parent=39 // pred_fallthru
        _
    $region40: #{basic_block_forward.7} parent=5 // pred_fallthru
      _
  $region6: #{basic_block_forward.7} parent=0 // loop_footer
    %s13 = sadd.s32 1, %s9
  $region7: #{basic_block_forward.7} parent=0 // loop_footer_branch
    %8 = sbr.rel target = $region3
  $region8: #{basic_block_forward.7} parent=0 // loop_exit
    _

// kernel: basic_block_forward.5
$region0: #{basic_block_forward.5}
  #allocation0 [shape = 'u32[]', space=smem, size = 0x4, offset = 0x4, fixed_abs, tag = 'smem constant byte address 0x4 - core index']
  #allocation1 [shape = 'u32[72,128]{1,0:T(1,128)}', space=vmem, size = 0x9000, scoped, tag = 'internal scratch']
  %s0 = inlined_call_operand.vmem [shape: bf16[2,8,8,128], index: 0, kind: input, shape index: {}]
  %s1 = inlined_call_operand.vmem [shape: f32[1,1,1,128], index: 1, kind: input, shape index: {}]
  %s2 = inlined_call_operand.vmem [shape: f32[1,1,1,128], index: 2, kind: input, shape index: {}]
  %s3 = inlined_call_operand.vmem [shape: bf16[2,10,10,128], index: 3, kind: output, shape index: {}]
  %s4 = sld [smem:[#allocation0]]
  $region45: #{basic_block_forward.5} parent=0
    _
  %s6 = ssub.s32 1, %s4
  %s7 = scalar_select 0, %s6, %s4
  loop: start=0, step=1, limit=4
  $region2: #{basic_block_forward.5} parent=0 // loop_pre_header
    _
  $region3: #{basic_block_forward.5} parent=0 // loop_header
    %s9 = sphi 0, %s13
    %p10 = scmp.ge.s32.totalorder %s9, 4
    %s19 = sphi 0, %s21
    %s22 = sphi 0, %s19
    %s23 = sphi 0, %s22
    %s39 = sphi 0, %s23
    %s43 = sphi 0, %s43
    %s45 = sphi 0, %s43
    %s46 = sphi 0, %s45
    %s60 = sphi 0, %s46
    %s64 = sphi 0, %s64
    %s66 = sphi 0, %s64
    %s67 = sphi 0, %s66
    %s81 = sphi 0, %s67
    %s87 = sphi 0, %s89
    %s90 = sphi 0, %s87
    %s91 = sphi 0, %s90
    %s107 = sphi 0, %s91
  $region4: #{basic_block_forward.5} parent=0 // loop_header_branch
    %12 = sbr.rel (%p10) target = $region8
  $region5: #{basic_block_forward.5} parent=0 // loop_body
    %s14 = ssub.s32 %s9, 1
    %s15 = ssub.s32 %s9, 2
    %s16 = sadd.s32 %s9, 1
    %s17 = ssub.s32 %s9, %s16
    %p18 = scmp.eq.s32.totalorder %s17, 0
    %s20 = sadd.s32 %s19, 1
    %s21 = scalar_select %p18, %s19, %s20
    %p24 = pneg %p18
    %p25 = scmp.eq.s32.totalorder %s9, 1
    %p26 = por %p24, %p25
    %p27 = scmp.ne.s32.totalorder %s19, %s22
    %p28 = scmp.eq.s32.totalorder %s9, 0
    %p29 = por %p27, %p28
    %p30 = scmp.ne.s32.totalorder %s19, %s22
    %p31 = scmp.eq.s32.totalorder %s14, 1
    %p32 = por %p30, %p31
    %p33 = scmp.ne.s32.totalorder %s22, %s23
    %p34 = scmp.eq.s32.totalorder %s14, 0
    %p35 = por %p33, %p34
    %p36 = scmp.ne.s32.totalorder %s22, %s23
    %p37 = scmp.eq.s32.totalorder %s15, 1
    %p38 = por %p36, %p37
    %p40 = scmp.ne.s32.totalorder %s23, %s39
    %p41 = scmp.eq.s32.totalorder %s15, 0
    %p42 = por %p40, %p41
    %s44 = sadd.s32 %s43, 1
    %p47 = scmp.eq.s32.totalorder %s9, 1
    %p48 = scmp.ne.s32.totalorder %s43, %s45
    %p49 = scmp.eq.s32.totalorder %s9, 0
    %p50 = por %p48, %p49
    %p51 = scmp.ne.s32.totalorder %s43, %s45
    %p52 = scmp.eq.s32.totalorder %s14, 1
    %p53 = por %p51, %p52
    %p54 = scmp.ne.s32.totalorder %s45, %s46
    %p55 = scmp.eq.s32.totalorder %s14, 0
    %p56 = por %p54, %p55
    %p57 = scmp.ne.s32.totalorder %s45, %s46
    %p58 = scmp.eq.s32.totalorder %s15, 1
    %p59 = por %p57, %p58
    %p61 = scmp.ne.s32.totalorder %s46, %s60
    %p62 = scmp.eq.s32.totalorder %s15, 0
    %p63 = por %p61, %p62
    %s65 = sadd.s32 %s64, 1
    %p68 = scmp.eq.s32.totalorder %s9, 1
    %p69 = scmp.ne.s32.totalorder %s64, %s66
    %p70 = scmp.eq.s32.totalorder %s9, 0
    %p71 = por %p69, %p70
    %p72 = scmp.ne.s32.totalorder %s64, %s66
    %p73 = scmp.eq.s32.totalorder %s14, 1
    %p74 = por %p72, %p73
    %p75 = scmp.ne.s32.totalorder %s66, %s67
    %p76 = scmp.eq.s32.totalorder %s14, 0
    %p77 = por %p75, %p76
    %p78 = scmp.ne.s32.totalorder %s66, %s67
    %p79 = scmp.eq.s32.totalorder %s15, 1
    %p80 = por %p78, %p79
    %p82 = scmp.ne.s32.totalorder %s67, %s81
    %p83 = scmp.eq.s32.totalorder %s15, 0
    %p84 = por %p82, %p83
    %s85 = ssub.s32 %s9, %s16
    %p86 = scmp.eq.s32.totalorder %s85, 0
    %s88 = sadd.s32 %s87, 1
    %s89 = scalar_select %p86, %s87, %s88
    %p92 = pneg %p86
    %p93 = scmp.eq.s32.totalorder %s9, 1
    %p94 = por %p92, %p93
    %p95 = scmp.ne.s32.totalorder %s87, %s90
    %p96 = scmp.eq.s32.totalorder %s9, 0
    %p97 = por %p95, %p96
    %p98 = scmp.ne.s32.totalorder %s87, %s90
    %p99 = scmp.eq.s32.totalorder %s14, 1
    %p100 = por %p98, %p99
    %p101 = scmp.ne.s32.totalorder %s90, %s91
    %p102 = scmp.eq.s32.totalorder %s14, 0
    %p103 = por %p101, %p102
    %p104 = scmp.ne.s32.totalorder %s90, %s91
    %p105 = scmp.eq.s32.totalorder %s15, 1
    %p106 = por %p104, %p105
    %p108 = scmp.ne.s32.totalorder %s91, %s107
    %p109 = scmp.eq.s32.totalorder %s15, 0
    %p110 = por %p108, %p109
    %p111 = scmp.le.s32.totalorder 1, %s9
    %p112 = scmp.lt.s32.totalorder %s9, 3
    %p113 = pnand %p111, %p112
    %p114 = pneg %p113
    // Predicated region
    $region9: #{basic_block_forward.5} parent=5 // pred_check
      _
    $region10: #{basic_block_forward.5} parent=5 // pred_check_branch
      %116 = sbr.rel (%p113) target = $region12
    $region11: #{basic_block_forward.5} parent=5 // pred_region
      %s117 = ssub.s32 %s9, 1
      // Predicated region
      $region13: #{basic_block_forward.5} parent=11 // pred_check
        %p118 = pneg %p56
      $region14: #{basic_block_forward.5} parent=11 // pred_check_branch
        %120 = sbr.rel (%p118) target = $region16
      $region15: #{basic_block_forward.5} parent=11 // pred_region
        _
      $region16: #{basic_block_forward.5} parent=11 // pred_fallthru
        _
      // Predicated region
      $region17: #{basic_block_forward.5} parent=11 // pred_check
        %p121 = pneg %p77
      $region18: #{basic_block_forward.5} parent=11 // pred_check_branch
        %123 = sbr.rel (%p121) target = $region20
      $region19: #{basic_block_forward.5} parent=11 // pred_region
        _
      $region20: #{basic_block_forward.5} parent=11 // pred_fallthru
        _
    $region12: #{basic_block_forward.5} parent=5 // pred_fallthru
      _
    %p124 = scmp.lt.s32.totalorder %s9, 2
    // Predicated region
    $region21: #{basic_block_forward.5} parent=5 // pred_check
      %p125 = pneg %p124
    $region22: #{basic_block_forward.5} parent=5 // pred_check_branch
      %127 = sbr.rel (%p125) target = $region24
    $region23: #{basic_block_forward.5} parent=5 // pred_region
      // Predicated region
      $region25: #{basic_block_forward.5} parent=23 // pred_check
        %p128 = pneg %p29
      $region26: #{basic_block_forward.5} parent=23 // pred_check_branch
        %130 = sbr.rel (%p128) target = $region28
      $region27: #{basic_block_forward.5} parent=23 // pred_region
        %p131 = scmp.lt.s32.totalorder %s9, 1
        %s132 = scalar_select %p131, %s9, 1
        %s133 = smul.addr %s132, 8
        %s134 = smul.addr %s133, 4
        %s135 = scalar_lea.vmem %s0, %s134
      $region28: #{basic_block_forward.5} parent=23 // pred_fallthru
        _
    $region24: #{basic_block_forward.5} parent=5 // pred_fallthru
      _
    %p136 = scmp.le.s32.totalorder 1, %s9
    %p137 = scmp.lt.s32.totalorder %s9, 3
    %p138 = pnand %p136, %p137
    %p139 = pneg %p138
    // Predicated region
    $region29: #{basic_block_forward.5} parent=5 // pred_check
      _
    $region30: #{basic_block_forward.5} parent=5 // pred_check_branch
      %141 = sbr.rel (%p138) target = $region32
    $region31: #{basic_block_forward.5} parent=5 // pred_region
      %s142 = ssub.s32 %s9, 1
      %p143 = scmp.lt.s32.totalorder %s14, 1
      %s144 = scalar_select %p143, %s14, 1
      %s145 = smul.addr %s144, 8
      %s146 = smul.addr %s145, 4
      %s147 = scalar_lea.vmem %s0, %s146
      %p148 = pneg %p35
      %p149 = pneg %p32
      %p150 = pneg %p56
      %p151 = pneg %p53
      %p152 = pneg %p77
      %p153 = pneg %p74
      %p154 = pneg %p103
      %p155 = pneg %p100
      %p156 = scmp.lt.s32.totalorder %s14, 1
      %s157 = scalar_select %p156, %s14, 1
      %s158 = smul.addr %s157, 20
      %s159 = smul.addr %s158, 4
      %s160 = scalar_lea.vmem %s3, %s159
      %p161 = scmp.lt.s32.totalorder %s14, 1
      %s162 = scalar_select %p161, %s14, 1
      %s163 = smul.addr %s162, 8
      %s164 = smul.addr %s163, 4
      %s165 = scalar_lea.vmem %s0, %s164
      %p166 = scmp.lt.s32.totalorder %s14, 1
      %s167 = scalar_select %p166, %s14, 1
      %s168 = smul.addr %s167, 20
      %s169 = smul.addr %s168, 4
      %s170 = scalar_lea.vmem %s3, %s169
      %172 = vst [vmem:[%s170] sm:$0xf] 0
      %173 = vst [vmem:[%s170 + $0x4] sm:$0x1] 0
      %174 = vst [vmem:[%s170 + $0x8] sm:$0xf] 0
      %175 = vst [vmem:[%s170 + $0xc] sm:$0x1] 0
      %176 = vst [vmem:[%s170 + $0x10] sm:$0xf] 0
      %177 = vst [vmem:[%s170 + $0x14] sm:$0x1] 0
      %178 = vst [vmem:[%s170 + $0x18] sm:$0xf] 0
      %179 = vst [vmem:[%s170 + $0x1c] sm:$0x1] 0
      %180 = vst [vmem:[%s170 + $0x20] sm:$0xf] 0
      %181 = vst [vmem:[%s170 + $0x24] sm:$0x1] 0
      %182 = vst [vmem:[%s170 + $0x28] sm:$0xf] 0
      %183 = vst [vmem:[%s170 + $0x2c] sm:$0x1] 0
      %184 = vst [vmem:[%s170 + $0x30] sm:$0xf] 0
      %185 = vst [vmem:[%s170 + $0x34] sm:$0x1] 0
      %186 = vst [vmem:[%s170 + $0x38] sm:$0xf] 0
      %187 = vst [vmem:[%s170 + $0x3c] sm:$0x1] 0
      %188 = vst [vmem:[%s170 + $0x40] sm:$0xf] 0
      %189 = vst [vmem:[%s170 + $0x44] sm:$0x1] 0
      %190 = vst [vmem:[%s170 + $0x48] sm:$0xf] 0
      %191 = vst [vmem:[%s170 + $0x4c] sm:$0x1] 0
      %v192 = vld [vmem:[%s165] sm:$0xf]
      %v193 = vld [vmem:[%s165 + $0x4] sm:$0xf]
      %v194 = vld [vmem:[%s165 + $0x8] sm:$0xf]
      %v195 = vld [vmem:[%s165 + $0xc] sm:$0xf]
      %v196 = vld [vmem:[%s165 + $0x10] sm:$0xf]
      %v197 = vld [vmem:[%s165 + $0x14] sm:$0xf]
      %v198 = vld [vmem:[%s165 + $0x18] sm:$0xf]
      %v199 = vld [vmem:[%s165 + $0x1c] sm:$0xf]
      %v200 = vunpack.c.l.bf16 %v192
      %v201 = vunpack.c.l.bf16 %v193
      %v202 = vunpack.c.l.bf16 %v194
      %v203 = vunpack.c.l.bf16 %v195
      %v204 = vunpack.c.l.bf16 %v196
      %v205 = vunpack.c.l.bf16 %v197
      %v206 = vunpack.c.l.bf16 %v198
      %v207 = vunpack.c.l.bf16 %v199
      %v208 = vld [vmem:[%s1] sm:$0x1]
      %v210 = vperm.slane %v208, 0
      %v212 = vmul.f32 %v200, %v210
      %v213 = vmul.f32 %v201, %v210
      %v214 = vmul.f32 %v202, %v210
      %v215 = vmul.f32 %v203, %v210
      %v216 = vmul.f32 %v204, %v210
      %v217 = vmul.f32 %v205, %v210
      %v218 = vmul.f32 %v206, %v210
      %v219 = vmul.f32 %v207, %v210
      %v220 = vld [vmem:[%s2] sm:$0x1]
      %v222 = vperm.slane %v220, 0
      %v224 = vadd.f32 %v212, %v222
      %v225 = vadd.f32 %v213, %v222
      %v226 = vadd.f32 %v214, %v222
      %v227 = vadd.f32 %v215, %v222
      %v228 = vadd.f32 %v216, %v222
      %v229 = vadd.f32 %v217, %v222
      %v230 = vadd.f32 %v218, %v222
      %v231 = vadd.f32 %v219, %v222
      %v232 = vmax.f32 %v224, 0.0
      %v233 = vmax.f32 %v225, 0.0
      %v234 = vmax.f32 %v226, 0.0
      %v235 = vmax.f32 %v227, 0.0
      %v236 = vmax.f32 %v228, 0.0
      %v237 = vmax.f32 %v229, 0.0
      %v238 = vmax.f32 %v230, 0.0
      %v239 = vmax.f32 %v231, 0.0
      %v240 = vpack.c.bf16 %v232, %v232
      %v241 = vpack.c.bf16 %v233, %v233
      %v242 = vpack.c.bf16 %v234, %v234
      %v243 = vpack.c.bf16 %v235, %v235
      %v244 = vpack.c.bf16 %v236, %v236
      %v245 = vpack.c.bf16 %v237, %v237
      %v246 = vpack.c.bf16 %v238, %v238
      %v247 = vpack.c.bf16 %v239, %v239
      %v249 = vshrl.u32 %v240, 16
      %v251 = vrot.slane %v249, 7
      %v252 = vshll.u32 %v240, 16
      %v254 = vor.u32 %v251, %v252
      %v255 = vrot.slane %v251, 4
      %v257 = vshrl.u32 %v241, 16
      %v259 = vrot.slane %v257, 7
      %v260 = vshll.u32 %v241, 16
      %v262 = vor.u32 %v259, %v260
      %v263 = vrot.slane %v259, 4
      %v265 = vshrl.u32 %v242, 16
      %v267 = vrot.slane %v265, 7
      %v268 = vshll.u32 %v242, 16
      %v270 = vor.u32 %v267, %v268
      %v271 = vrot.slane %v267, 4
      %v273 = vshrl.u32 %v243, 16
      %v275 = vrot.slane %v273, 7
      %v276 = vshll.u32 %v243, 16
      %v278 = vor.u32 %v275, %v276
      %v279 = vrot.slane %v275, 4
      %v281 = vshrl.u32 %v244, 16
      %v283 = vrot.slane %v281, 7
      %v284 = vshll.u32 %v244, 16
      %v286 = vor.u32 %v283, %v284
      %v287 = vrot.slane %v283, 4
      %v289 = vshrl.u32 %v245, 16
      %v291 = vrot.slane %v289, 7
      %v292 = vshll.u32 %v245, 16
      %v294 = vor.u32 %v291, %v292
      %v295 = vrot.slane %v291, 4
      %v297 = vshrl.u32 %v246, 16
      %v299 = vrot.slane %v297, 7
      %v300 = vshll.u32 %v246, 16
      %v302 = vor.u32 %v299, %v300
      %v303 = vrot.slane %v299, 4
      %v305 = vshrl.u32 %v247, 16
      %v307 = vrot.slane %v305, 7
      %v308 = vshll.u32 %v247, 16
      %v310 = vor.u32 %v307, %v308
      %v311 = vrot.slane %v307, 4
      %s328 = scalar_lea.vmem %s170, 8
      %vm329 = vcmask 1043456
      %vm330 = vsmask.f32 7938
      %vm331 = vmand %vm329, %vm330
      %v332 = vld [vmem:[%s328] sm:$0xf]
      %v333 = vsel %vm331, %v254, %v332
      %334 = vst [vmem:[%s328] sm:$0xf] %v333
      %vm335 = vcmask 1040384
      %vm336 = vsmask.f32 256
      %vm337 = vmand %vm335, %vm336
      %v338 = vld [vmem:[%s328 + $0x4] sm:$0x1]
      %v339 = vsel %vm337, %v255, %v338
      %340 = vst [vmem:[%s328 + $0x4] sm:$0x1] %v339
      %v341 = vld [vmem:[%s328 + $0x8] sm:$0xf]
      %v342 = vsel %vm331, %v262, %v341
      %343 = vst [vmem:[%s328 + $0x8] sm:$0xf] %v342
      %v344 = vld [vmem:[%s328 + $0xc] sm:$0x1]
      %v345 = vsel %vm337, %v263, %v344
      %346 = vst [vmem:[%s328 + $0xc] sm:$0x1] %v345
      %v347 = vld [vmem:[%s328 + $0x10] sm:$0xf]
      %v348 = vsel %vm331, %v270, %v347
      %349 = vst [vmem:[%s328 + $0x10] sm:$0xf] %v348
      %v350 = vld [vmem:[%s328 + $0x14] sm:$0x1]
      %v351 = vsel %vm337, %v271, %v350
      %352 = vst [vmem:[%s328 + $0x14] sm:$0x1] %v351
      %v353 = vld [vmem:[%s328 + $0x18] sm:$0xf]
      %v354 = vsel %vm331, %v278, %v353
      %355 = vst [vmem:[%s328 + $0x18] sm:$0xf] %v354
      %v356 = vld [vmem:[%s328 + $0x1c] sm:$0x1]
      %v357 = vsel %vm337, %v279, %v356
      %358 = vst [vmem:[%s328 + $0x1c] sm:$0x1] %v357
      %v359 = vld [vmem:[%s328 + $0x20] sm:$0xf]
      %v360 = vsel %vm331, %v286, %v359
      %361 = vst [vmem:[%s328 + $0x20] sm:$0xf] %v360
      %v362 = vld [vmem:[%s328 + $0x24] sm:$0x1]
      %v363 = vsel %vm337, %v287, %v362
      %364 = vst [vmem:[%s328 + $0x24] sm:$0x1] %v363
      %v365 = vld [vmem:[%s328 + $0x28] sm:$0xf]
      %v366 = vsel %vm331, %v294, %v365
      %367 = vst [vmem:[%s328 + $0x28] sm:$0xf] %v366
      %v368 = vld [vmem:[%s328 + $0x2c] sm:$0x1]
      %v369 = vsel %vm337, %v295, %v368
      %370 = vst [vmem:[%s328 + $0x2c] sm:$0x1] %v369
      %v371 = vld [vmem:[%s328 + $0x30] sm:$0xf]
      %v372 = vsel %vm331, %v302, %v371
      %373 = vst [vmem:[%s328 + $0x30] sm:$0xf] %v372
      %v374 = vld [vmem:[%s328 + $0x34] sm:$0x1]
      %v375 = vsel %vm337, %v303, %v374
      %376 = vst [vmem:[%s328 + $0x34] sm:$0x1] %v375
      %v377 = vld [vmem:[%s328 + $0x38] sm:$0xf]
      %v378 = vsel %vm331, %v310, %v377
      %379 = vst [vmem:[%s328 + $0x38] sm:$0xf] %v378
      %v380 = vld [vmem:[%s328 + $0x3c] sm:$0x1]
      %v381 = vsel %vm337, %v311, %v380
      %382 = vst [vmem:[%s328 + $0x3c] sm:$0x1] %v381
      %p383 = scmp.lt.s32.totalorder %s14, 1
      %s384 = scalar_select %p383, %s14, 1
      %s385 = smul.addr %s384, 20
      %s386 = smul.addr %s385, 4
      %s387 = scalar_lea.vmem %s3, %s386
      // Predicated region
      $region33: #{basic_block_forward.5} parent=31 // pred_check
        %p388 = pneg %p100
      $region34: #{basic_block_forward.5} parent=31 // pred_check_branch
        %390 = sbr.rel (%p388) target = $region36
      $region35: #{basic_block_forward.5} parent=31 // pred_region
        _
      $region36: #{basic_block_forward.5} parent=31 // pred_fallthru
        _
    $region32: #{basic_block_forward.5} parent=5 // pred_fallthru
      _
    %p391 = scmp.le.s32.totalorder 2, %s9
    // Predicated region
    $region37: #{basic_block_forward.5} parent=5 // pred_check
      %p392 = pneg %p391
    $region38: #{basic_block_forward.5} parent=5 // pred_check_branch
      %394 = sbr.rel (%p392) target = $region40
    $region39: #{basic_block_forward.5} parent=5 // pred_region
      %s395 = ssub.s32 %s9, 2
      // Predicated region
      $region41: #{basic_block_forward.5} parent=39 // pred_check
        %p396 = pneg %p106
      $region42: #{basic_block_forward.5} parent=39 // pred_check_branch
        %398 = sbr.rel (%p396) target = $region44
      $region43: #{basic_block_forward.5} parent=39 // pred_region
        %p399 = scmp.lt.s32.totalorder %s15, 1
        %s400 = scalar_select %p399, %s15, 1
        %s401 = smul.addr %s400, 20
        %s402 = smul.addr %s401, 4
        %s403 = scalar_lea.vmem %s3, %s402
      $region44: #{basic_block_forward.5} parent=39 // pred_fallthru
        _
    $region40: #{basic_block_forward.5} parent=5 // pred_fallthru
      _
  $region6: #{basic_block_forward.5} parent=0 // loop_footer
    %s13 = sadd.s32 1, %s9
  $region7: #{basic_block_forward.5} parent=0 // loop_footer_branch
    %8 = sbr.rel target = $region3
  $region8: #{basic_block_forward.5} parent=0 // loop_exit
    _

// kernel: basic_block_forward.4
$region0: #{basic_block_forward.4}
  #allocation0 [shape = 'u32[]', space=smem, size = 0x4, offset = 0x4, fixed_abs, tag = 'smem constant byte address 0x4 - core index']
  #allocation1 [shape = 'u32[72,128]{1,0:T(1,128)}', space=vmem, size = 0x9000, scoped, tag = 'internal scratch']
  %s0 = inlined_call_operand.vmem [shape: bf16[2,36,9,128], index: 0, kind: input, shape index: {}]
  %s1 = inlined_call_operand.vmem [shape: bf16[9,128,128], index: 1, kind: input, shape index: {}]
  %s2 = inlined_call_operand.vmem [shape: bf16[128,128], index: 2, kind: input, shape index: {}]
  %s3 = inlined_call_operand.vmem [shape: bf16[2,8,8,128], index: 3, kind: output, shape index: {0}]
  %s4 = inlined_call_operand.vmem [shape: bf16[2,8,8,128], index: 4, kind: output, shape index: {1}]
  %s5 = inlined_call_operand.vmem [shape: f32[2,1,2,128], index: 5, kind: output, shape index: {2}]
  %6 = xla_tuple %s3, %s4, %s5
  %s7 = sld [smem:[#allocation0]]
  $region61: #{basic_block_forward.4} parent=0
    _
  %s9 = ssub.s32 1, %s7
  %s10 = scalar_select 0, %s9, %s7
  loop: start=0, step=1, limit=4
  $region2: #{basic_block_forward.4} parent=0 // loop_pre_header
    _
  $region3: #{basic_block_forward.4} parent=0 // loop_header
    %s12 = sphi 0, %s16
    %p13 = scmp.ge.s32.totalorder %s12, 4
    %s19 = sphi 0, %s38
    %s20 = sphi 0, %s34
    %s21 = sphi 0, %s30
    %s22 = sphi 0, %s19
    %s23 = sphi 0, %s20
    %s24 = sphi 0, %s21
    %s25 = sphi 0, %s22
    %s26 = sphi 0, %s23
    %s27 = sphi 0, %s24
    %s41 = sphi 0, %s43
    %s44 = sphi 0, %s41
    %s45 = sphi 0, %s44
    %s61 = sphi 0, %s45
    %s67 = sphi 0, %s69
    %s70 = sphi 0, %s67
    %s71 = sphi 0, %s70
    %s87 = sphi 0, %s71
    %s93 = sphi 0, %s95
    %s96 = sphi 0, %s93
    %s97 = sphi 0, %s96
    %s113 = sphi 0, %s97
    %s123 = sphi 0, %s125
    %s126 = sphi 0, %s123
    %s127 = sphi 0, %s126
    %s143 = sphi 0, %s127
    %s153 = sphi 0, %s155
    %s156 = sphi 0, %s153
    %s157 = sphi 0, %s156
    %s173 = sphi 0, %s157
    %s183 = sphi 0, %s185
    %s186 = sphi 0, %s183
    %s187 = sphi 0, %s186
    %s203 = sphi 0, %s187
  $region4: #{basic_block_forward.4} parent=0 // loop_header_branch
    %15 = sbr.rel (%p13) target = $region8
  $region5: #{basic_block_forward.4} parent=0 // loop_body
    %s17 = ssub.s32 %s12, 1
    %s18 = ssub.s32 %s12, 2
    %s28 = sadd.s32 1, %s21
    %p29 = scmp.ge.s32.totalorder %s28, 1
    %s30 = scalar_select %p29, 0, %s28
    %s31 = sadd.s32 1, %s20
    %s32 = scalar_select %p29, %s31, %s20
    %p33 = scmp.ge.s32.totalorder %s32, 1
    %s34 = scalar_select %p33, 0, %s32
    %s35 = sadd.s32 1, %s19
    %s36 = scalar_select %p33, %s35, %s19
    %p37 = scmp.ge.s32.totalorder %s36, 2
    %s38 = scalar_select %p37, 0, %s36
    %s39 = ssub.s32 %s19, %s38
    %p40 = scmp.eq.s32.totalorder %s39, 0
    %s42 = sadd.s32 %s41, 1
    %s43 = scalar_select %p40, %s41, %s42
    %p46 = pneg %p40
    %p47 = scmp.eq.s32.totalorder %s12, 1
    %p48 = por %p46, %p47
    %p49 = scmp.ne.s32.totalorder %s41, %s44
    %p50 = scmp.eq.s32.totalorder %s12, 0
    %p51 = por %p49, %p50
    %p52 = scmp.ne.s32.totalorder %s41, %s44
    %p53 = scmp.eq.s32.totalorder %s17, 1
    %p54 = por %p52, %p53
    %p55 = scmp.ne.s32.totalorder %s44, %s45
    %p56 = scmp.eq.s32.totalorder %s17, 0
    %p57 = por %p55, %p56
    %p58 = scmp.ne.s32.totalorder %s44, %s45
    %p59 = scmp.eq.s32.totalorder %s18, 1
    %p60 = por %p58, %p59
    %p62 = scmp.ne.s32.totalorder %s45, %s61
    %p63 = scmp.eq.s32.totalorder %s18, 0
    %p64 = por %p62, %p63
    %s65 = ssub.s32 %s20, %s34
    %p66 = scmp.eq.s32.totalorder %s65, 0
    %s68 = sadd.s32 %s67, 1
    %s69 = scalar_select %p66, %s67, %s68
    %p72 = pneg %p66
    %p73 = scmp.eq.s32.totalorder %s12, 1
    %p74 = por %p72, %p73
    %p75 = scmp.ne.s32.totalorder %s67, %s70
    %p76 = scmp.eq.s32.totalorder %s12, 0
    %p77 = por %p75, %p76
    %p78 = scmp.ne.s32.totalorder %s67, %s70
    %p79 = scmp.eq.s32.totalorder %s17, 1
    %p80 = por %p78, %p79
    %p81 = scmp.ne.s32.totalorder %s70, %s71
    %p82 = scmp.eq.s32.totalorder %s17, 0
    %p83 = por %p81, %p82
    %p84 = scmp.ne.s32.totalorder %s70, %s71
    %p85 = scmp.eq.s32.totalorder %s18, 1
    %p86 = por %p84, %p85
    %p88 = scmp.ne.s32.totalorder %s71, %s87
    %p89 = scmp.eq.s32.totalorder %s18, 0
    %p90 = por %p88, %p89
    %s91 = ssub.s32 %s20, %s34
    %p92 = scmp.eq.s32.totalorder %s91, 0
    %s94 = sadd.s32 %s93, 1
    %s95 = scalar_select %p92, %s93, %s94
    %p98 = pneg %p92
    %p99 = scmp.eq.s32.totalorder %s12, 1
    %p100 = por %p98, %p99
    %p101 = scmp.ne.s32.totalorder %s93, %s96
    %p102 = scmp.eq.s32.totalorder %s12, 0
    %p103 = por %p101, %p102
    %p104 = scmp.ne.s32.totalorder %s93, %s96
    %p105 = scmp.eq.s32.totalorder %s17, 1
    %p106 = por %p104, %p105
    %p107 = scmp.ne.s32.totalorder %s96, %s97
    %p108 = scmp.eq.s32.totalorder %s17, 0
    %p109 = por %p107, %p108
    %p110 = scmp.ne.s32.totalorder %s96, %s97
    %p111 = scmp.eq.s32.totalorder %s18, 1
    %p112 = por %p110, %p111
    %p114 = scmp.ne.s32.totalorder %s97, %s113
    %p115 = scmp.eq.s32.totalorder %s18, 0
    %p116 = por %p114, %p115
    %s117 = ssub.s32 %s19, %s38
    %s118 = ssub.s32 %s21, %s30
    %s119 = sor.u32 %s117, %s118
    %s120 = ssub.s32 %s20, %s34
    %s121 = sor.u32 %s119, %s120
    %p122 = scmp.eq.s32.totalorder %s121, 0
    %s124 = sadd.s32 %s123, 1
    %s125 = scalar_select %p122, %s123, %s124
    %p128 = pneg %p122
    %p129 = scmp.eq.s32.totalorder %s12, 1
    %p130 = por %p128, %p129
    %p131 = scmp.ne.s32.totalorder %s123, %s126
    %p132 = scmp.eq.s32.totalorder %s12, 0
    %p133 = por %p131, %p132
    %p134 = scmp.ne.s32.totalorder %s123, %s126
    %p135 = scmp.eq.s32.totalorder %s17, 1
    %p136 = por %p134, %p135
    %p137 = scmp.ne.s32.totalorder %s126, %s127
    %p138 = scmp.eq.s32.totalorder %s17, 0
    %p139 = por %p137, %p138
    %p140 = scmp.ne.s32.totalorder %s126, %s127
    %p141 = scmp.eq.s32.totalorder %s18, 1
    %p142 = por %p140, %p141
    %p144 = scmp.ne.s32.totalorder %s127, %s143
    %p145 = scmp.eq.s32.totalorder %s18, 0
    %p146 = por %p144, %p145
    %s147 = ssub.s32 %s19, %s38
    %s148 = ssub.s32 %s21, %s30
    %s149 = sor.u32 %s147, %s148
    %s150 = ssub.s32 %s20, %s34
    %s151 = sor.u32 %s149, %s150
    %p152 = scmp.eq.s32.totalorder %s151, 0
    %s154 = sadd.s32 %s153, 1
    %s155 = scalar_select %p152, %s153, %s154
    %p158 = pneg %p152
    %p159 = scmp.eq.s32.totalorder %s12, 1
    %p160 = por %p158, %p159
    %p161 = scmp.ne.s32.totalorder %s153, %s156
    %p162 = scmp.eq.s32.totalorder %s12, 0
    %p163 = por %p161, %p162
    %p164 = scmp.ne.s32.totalorder %s153, %s156
    %p165 = scmp.eq.s32.totalorder %s17, 1
    %p166 = por %p164, %p165
    %p167 = scmp.ne.s32.totalorder %s156, %s157
    %p168 = scmp.eq.s32.totalorder %s17, 0
    %p169 = por %p167, %p168
    %p170 = scmp.ne.s32.totalorder %s156, %s157
    %p171 = scmp.eq.s32.totalorder %s18, 1
    %p172 = por %p170, %p171
    %p174 = scmp.ne.s32.totalorder %s157, %s173
    %p175 = scmp.eq.s32.totalorder %s18, 0
    %p176 = por %p174, %p175
    %s177 = ssub.s32 %s19, %s38
    %s178 = ssub.s32 %s21, %s30
    %s179 = sor.u32 %s177, %s178
    %s180 = ssub.s32 %s20, %s34
    %s181 = sor.u32 %s179, %s180
    %p182 = scmp.eq.s32.totalorder %s181, 0
    %s184 = sadd.s32 %s183, 1
    %s185 = scalar_select %p182, %s183, %s184
    %p188 = pneg %p182
    %p189 = scmp.eq.s32.totalorder %s12, 1
    %p190 = por %p188, %p189
    %p191 = scmp.ne.s32.totalorder %s183, %s186
    %p192 = scmp.eq.s32.totalorder %s12, 0
    %p193 = por %p191, %p192
    %p194 = scmp.ne.s32.totalorder %s183, %s186
    %p195 = scmp.eq.s32.totalorder %s17, 1
    %p196 = por %p194, %p195
    %p197 = scmp.ne.s32.totalorder %s186, %s187
    %p198 = scmp.eq.s32.totalorder %s17, 0
    %p199 = por %p197, %p198
    %p200 = scmp.ne.s32.totalorder %s186, %s187
    %p201 = scmp.eq.s32.totalorder %s18, 1
    %p202 = por %p200, %p201
    %p204 = scmp.ne.s32.totalorder %s187, %s203
    %p205 = scmp.eq.s32.totalorder %s18, 0
    %p206 = por %p204, %p205
    %p207 = scmp.le.s32.totalorder 1, %s12
    %p208 = scmp.lt.s32.totalorder %s12, 3
    %p209 = pnand %p207, %p208
    %p210 = pneg %p209
    // Predicated region
    $region9: #{basic_block_forward.4} parent=5 // pred_check
      _
    $region10: #{basic_block_forward.4} parent=5 // pred_check_branch
      %212 = sbr.rel (%p209) target = $region12
    $region11: #{basic_block_forward.4} parent=5 // pred_region
      %s213 = ssub.s32 %s12, 1
      // Predicated region
      $region13: #{basic_block_forward.4} parent=11 // pred_check
        %p214 = pneg %p83
      $region14: #{basic_block_forward.4} parent=11 // pred_check_branch
        %216 = sbr.rel (%p214) target = $region16
      $region15: #{basic_block_forward.4} parent=11 // pred_region
        %p217 = scmp.lt.s32.totalorder %s23, 0
        %s218 = scalar_select %p217, %s23, 0
        %s219 = smul.addr %s218, 4
        %s220 = scalar_lea.vmem %s1, %s219
      $region16: #{basic_block_forward.4} parent=11 // pred_fallthru
        _
      // Predicated region
      $region17: #{basic_block_forward.4} parent=11 // pred_check
        %p221 = pneg %p109
      $region18: #{basic_block_forward.4} parent=11 // pred_check_branch
        %223 = sbr.rel (%p221) target = $region20
      $region19: #{basic_block_forward.4} parent=11 // pred_region
        %p224 = scmp.lt.s32.totalorder %s23, 0
        %s225 = scalar_select %p224, %s23, 0
        %s226 = smul.addr %s225, 4
        %s227 = scalar_lea.vmem %s2, %s226
      $region20: #{basic_block_forward.4} parent=11 // pred_fallthru
        _
    $region12: #{basic_block_forward.4} parent=5 // pred_fallthru
      _
    %p228 = scmp.lt.s32.totalorder %s12, 2
    // Predicated region
    $region21: #{basic_block_forward.4} parent=5 // pred_check
      %p229 = pneg %p228
    $region22: #{basic_block_forward.4} parent=5 // pred_check_branch
      %231 = sbr.rel (%p229) target = $region24
    $region23: #{basic_block_forward.4} parent=5 // pred_region
      // Predicated region
      $region25: #{basic_block_forward.4} parent=23 // pred_check
        %p232 = pneg %p51
      $region26: #{basic_block_forward.4} parent=23 // pred_check_branch
        %234 = sbr.rel (%p232) target = $region28
      $region27: #{basic_block_forward.4} parent=23 // pred_region
        %p235 = scmp.lt.s32.totalorder %s19, 1
        %s236 = scalar_select %p235, %s19, 1
        %s237 = smul.addr %s236, 72
        %s238 = smul.addr %s237, 4
        %s239 = scalar_lea.vmem %s0, %s238
      $region28: #{basic_block_forward.4} parent=23 // pred_fallthru
        _
    $region24: #{basic_block_forward.4} parent=5 // pred_fallthru
      _
    %p240 = scmp.le.s32.totalorder 1, %s12
    %p241 = scmp.lt.s32.totalorder %s12, 3
    %p242 = pnand %p240, %p241
    %p243 = pneg %p242
    // Predicated region
    $region29: #{basic_block_forward.4} parent=5 // pred_check
      _
    $region30: #{basic_block_forward.4} parent=5 // pred_check_branch
      %245 = sbr.rel (%p242) target = $region32
    $region31: #{basic_block_forward.4} parent=5 // pred_region
      %s246 = ssub.s32 %s12, 1
      %p247 = scmp.lt.s32.totalorder %s22, 1
      %s248 = scalar_select %p247, %s22, 1
      %s249 = smul.addr %s248, 72
      %s250 = smul.addr %s249, 4
      %s251 = scalar_lea.vmem %s0, %s250
      %p252 = pneg %p57
      %p253 = pneg %p54
      %p254 = scmp.lt.s32.totalorder %s23, 0
      %s255 = scalar_select %p254, %s23, 0
      %s256 = smul.addr %s255, 4
      %s257 = scalar_lea.vmem %s1, %s256
      %p258 = pneg %p83
      %p259 = pneg %p80
      %p260 = scmp.lt.s32.totalorder %s23, 0
      %s261 = scalar_select %p260, %s23, 0
      %s262 = smul.addr %s261, 4
      %s263 = scalar_lea.vmem %s2, %s262
      %p264 = pneg %p109
      %p265 = pneg %p106
      %p266 = pneg %p139
      %p267 = pneg %p136
      %s268 = smul.u32 8, %s24
      %p269 = scmp.lt.s32.totalorder %s22, 1
      %s270 = scalar_select %p269, %s22, 1
      %p271 = scmp.lt.s32.totalorder %s268, 7
      %s272 = scalar_select %p271, %s268, 7
      %p273 = scmp.lt.s32.totalorder %s23, 0
      %s274 = scalar_select %p273, %s23, 0
      %s275 = sadd.s32 %s274, %s272
      %s276 = smul.addr %s270, 8
      %s277 = sadd.s32 %s275, %s276
      %s278 = smul.addr %s277, 4
      %s279 = scalar_lea.vmem %s3, %s278
      %p280 = pneg %p169
      %p281 = pneg %p166
      %s282 = smul.u32 8, %s24
      %p283 = scmp.lt.s32.totalorder %s22, 1
      %s284 = scalar_select %p283, %s22, 1
      %p285 = scmp.lt.s32.totalorder %s282, 7
      %s286 = scalar_select %p285, %s282, 7
      %p287 = scmp.lt.s32.totalorder %s23, 0
      %s288 = scalar_select %p287, %s23, 0
      %s289 = sadd.s32 %s288, %s286
      %s290 = smul.addr %s284, 8
      %s291 = sadd.s32 %s289, %s290
      %s292 = smul.addr %s291, 4
      %s293 = scalar_lea.vmem %s4, %s292
      %p294 = pneg %p199
      %p295 = pneg %p196
      %p296 = scmp.lt.s32.totalorder %s22, 1
      %s297 = scalar_select %p296, %s22, 1
      %p298 = scmp.lt.s32.totalorder %s24, 0
      %s299 = scalar_select %p298, %s24, 0
      %p300 = scmp.lt.s32.totalorder %s23, 0
      %s301 = scalar_select %p300, %s23, 0
      %s302 = sadd.s32 %s301, %s299
      %s303 = sadd.s32 %s302, %s297
      %s304 = smul.addr %s303, 2
      %s305 = scalar_lea.vmem %s5, %s304
      %p306 = scmp.lt.s32.totalorder %s22, 1
      %s307 = scalar_select %p306, %s22, 1
      %s308 = smul.addr %s307, 72
      %s309 = smul.addr %s308, 4
      %s310 = scalar_lea.vmem %s0, %s309
      %p311 = scmp.lt.s32.totalorder %s23, 0
      %s312 = scalar_select %p311, %s23, 0
      %s313 = smul.addr %s312, 4
      %s314 = scalar_lea.vmem %s1, %s313
      %p315 = scmp.lt.s32.totalorder %s23, 0
      %s316 = scalar_select %p315, %s23, 0
      %s317 = smul.addr %s316, 4
      %s318 = scalar_lea.vmem %s2, %s317
      %s319 = smul.u32 8, %s24
      %p320 = scmp.lt.s32.totalorder %s22, 1
      %s321 = scalar_select %p320, %s22, 1
      %p322 = scmp.lt.s32.totalorder %s319, 7
      %s323 = scalar_select %p322, %s319, 7
      %p324 = scmp.lt.s32.totalorder %s23, 0
      %s325 = scalar_select %p324, %s23, 0
      %s326 = sadd.s32 %s325, %s323
      %s327 = smul.addr %s321, 8
      %s328 = sadd.s32 %s326, %s327
      %s329 = smul.addr %s328, 4
      %s330 = scalar_lea.vmem %s3, %s329
      %s331 = smul.u32 8, %s24
      %s332 = smul.u32 8, %s24
      %p333 = scmp.lt.s32.totalorder %s22, 1
      %s334 = scalar_select %p333, %s22, 1
      %p335 = scmp.lt.s32.totalorder %s332, 7
      %s336 = scalar_select %p335, %s332, 7
      %p337 = scmp.lt.s32.totalorder %s23, 0
      %s338 = scalar_select %p337, %s23, 0
      %s339 = sadd.s32 %s338, %s336
      %s340 = smul.addr %s334, 8
      %s341 = sadd.s32 %s339, %s340
      %s342 = smul.addr %s341, 4
      %s343 = scalar_lea.vmem %s4, %s342
      %s344 = smul.u32 8, %s24
      %p345 = scmp.lt.s32.totalorder %s22, 1
      %s346 = scalar_select %p345, %s22, 1
      %p347 = scmp.lt.s32.totalorder %s24, 0
      %s348 = scalar_select %p347, %s24, 0
      %p349 = scmp.lt.s32.totalorder %s23, 0
      %s350 = scalar_select %p349, %s23, 0
      %s351 = sadd.s32 %s350, %s348
      %s352 = sadd.s32 %s351, %s346
      %s353 = smul.addr %s352, 2
      %s354 = scalar_lea.vmem %s5, %s353
      %s355 = smul.u32 %s24, 8
      %s356 = smul.u32 %s355, 2
      %s357 = smul.addr %s356, 4
      %s358 = scalar_lea.vmem %s310, %s357
      %v359 = vld [vmem:[%s358] sm:$0xf]
      %v360 = vld [vmem:[%s358 + $0x8] sm:$0xf]
      %v361 = vld [vmem:[%s358 + $0x10] sm:$0xf]
      %v362 = vld [vmem:[%s358 + $0x18] sm:$0xf]
      %v363 = vld [vmem:[%s358 + $0x20] sm:$0xf]
      %v364 = vld [vmem:[%s358 + $0x28] sm:$0xf]
      %v365 = vld [vmem:[%s358 + $0x30] sm:$0xf]
      %v366 = vld [vmem:[%s358 + $0x38] sm:$0xf]
      %v367 = vld [vmem:[%s314] sm:$0xf]
      %v368 = vld [vmem:[%s314 + $0x4] sm:$0xf]
      %v369 = vld [vmem:[%s314 + $0x8] sm:$0xf]
      %v370 = vld [vmem:[%s314 + $0xc] sm:$0xf]
      %v371 = vld [vmem:[%s314 + $0x10] sm:$0xf]
      %v372 = vld [vmem:[%s314 + $0x14] sm:$0xf]
      %v373 = vld [vmem:[%s314 + $0x18] sm:$0xf]
      %v374 = vld [vmem:[%s314 + $0x1c] sm:$0xf]
      %v375 = vld [vmem:[%s314 + $0x20] sm:$0xf]
      %v376 = vld [vmem:[%s314 + $0x24] sm:$0xf]
      %v377 = vld [vmem:[%s314 + $0x28] sm:$0xf]
      %v378 = vld [vmem:[%s314 + $0x2c] sm:$0xf]
      %v379 = vld [vmem:[%s314 + $0x30] sm:$0xf]
      %v380 = vld [vmem:[%s314 + $0x34] sm:$0xf]
      %v381 = vld [vmem:[%s314 + $0x38] sm:$0xf]
      %v382 = vld [vmem:[%s314 + $0x3c] sm:$0xf]
      %s383 = sadd.s32 %s355, 9
      %s384 = smul.u32 %s383, 2
      %s385 = smul.addr %s384, 4
      %s386 = scalar_lea.vmem %s310, %s385
      %v387 = vld [vmem:[%s386] sm:$0xf]
      %v388 = vld [vmem:[%s386 + $0x8] sm:$0xf]
      %v389 = vld [vmem:[%s386 + $0x10] sm:$0xf]
      %v390 = vld [vmem:[%s386 + $0x18] sm:$0xf]
      %v391 = vld [vmem:[%s386 + $0x20] sm:$0xf]
      %v392 = vld [vmem:[%s386 + $0x28] sm:$0xf]
      %v393 = vld [vmem:[%s386 + $0x30] sm:$0xf]
      %v394 = vld [vmem:[%s386 + $0x38] sm:$0xf]
      %s395 = scalar_lea.vmem %s314, 64
      %v396 = vld [vmem:[%s395] sm:$0xf]
      %v397 = vld [vmem:[%s395 + $0x4] sm:$0xf]
      %v398 = vld [vmem:[%s395 + $0x8] sm:$0xf]
      %v399 = vld [vmem:[%s395 + $0xc] sm:$0xf]
      %v400 = vld [vmem:[%s395 + $0x10] sm:$0xf]
      %v401 = vld [vmem:[%s395 + $0x14] sm:$0xf]
      %v402 = vld [vmem:[%s395 + $0x18] sm:$0xf]
      %v403 = vld [vmem:[%s395 + $0x1c] sm:$0xf]
      %v404 = vld [vmem:[%s395 + $0x20] sm:$0xf]
      %v405 = vld [vmem:[%s395 + $0x24] sm:$0xf]
      %v406 = vld [vmem:[%s395 + $0x28] sm:$0xf]
      %v407 = vld [vmem:[%s395 + $0x2c] sm:$0xf]
      %v408 = vld [vmem:[%s395 + $0x30] sm:$0xf]
      %v409 = vld [vmem:[%s395 + $0x34] sm:$0xf]
      %v410 = vld [vmem:[%s395 + $0x38] sm:$0xf]
      %v411 = vld [vmem:[%s395 + $0x3c] sm:$0xf]
      %v420 = vunpack.c.l.b16 %v387
      %v421 = vunpack.c.l.b16 %v388
      %v422 = vunpack.c.l.b16 %v389
      %v423 = vunpack.c.l.b16 %v390
      %v424 = vunpack.c.l.b16 %v391
      %v425 = vunpack.c.l.b16 %v392
      %v426 = vunpack.c.l.b16 %v393
      %v427 = vunpack.c.l.b16 %v394
      %v428 = vpack.c.b16 %v421, %v420
      %v429 = vpack.c.b16 %v423, %v422
      %v430 = vpack.c.b16 %v425, %v424
      %v431 = vpack.c.b16 %v427, %v426
      %v452 = vunpack.c.l.b16 %v396
      %v453 = vunpack.c.l.b16 %v397
      %v454 = vunpack.c.l.b16 %v398
      %v455 = vunpack.c.l.b16 %v399
      %v456 = vunpack.c.l.b16 %v400
      %v457 = vunpack.c.l.b16 %v401
      %v458 = vunpack.c.l.b16 %v402
      %v459 = vunpack.c.l.b16 %v403
      %v460 = vunpack.c.l.b16 %v404
      %v461 = vunpack.c.l.b16 %v405
      %v462 = vunpack.c.l.b16 %v406
      %v463 = vunpack.c.l.b16 %v407
      %v464 = vunpack.c.l.b16 %v408
      %v465 = vunpack.c.l.b16 %v409
      %v466 = vunpack.c.l.b16 %v410
      %v467 = vunpack.c.l.b16 %v411
      %v468 = vpack.c.b16 %v453, %v452
      %v469 = vpack.c.b16 %v455, %v454
      %v470 = vpack.c.b16 %v457, %v456
      %v471 = vpack.c.b16 %v459, %v458
      %v472 = vpack.c.b16 %v461, %v460
      %v473 = vpack.c.b16 %v463, %v462
      %v474 = vpack.c.b16 %v465, %v464
      %v475 = vpack.c.b16 %v467, %v466
      %484 = vmatpush.bf16.msra.mxu0 %v475
      %485 = vmatpush.bf16.msra.mxu0 %v474
      %486 = vmatpush.bf16.msra.mxu0 %v473
      %487 = vmatpush.bf16.msra.mxu0 %v472
      %488 = vmatpush.bf16.msra.mxu0 %v471
      %489 = vmatpush.bf16.msra.mxu0 %v470
      %490 = vmatpush.bf16.msra.mxu0 %v469
      %491 = vmatpush.bf16.msra.mxu0 %v468
      %492 = vmatmul.bf16.gmra.mxu0 %v428
      %v493 = vpop.f32.mrf.mxu0
      %v494 = vadd.f32 0.0, %v493
      %v495 = vpop.f32.mrf.mxu0
      %v496 = vadd.f32 0.0, %v495
      %497 = vmatmul.bf16.gmra.mxu0 %v429
      %v498 = vpop.f32.mrf.mxu0
      %v499 = vadd.f32 0.0, %v498
      %v500 = vpop.f32.mrf.mxu0
      %v501 = vadd.f32 0.0, %v500
      %502 = vmatmul.bf16.gmra.mxu0 %v430
      %v503 = vpop.f32.mrf.mxu0
      %v504 = vadd.f32 0.0, %v503
      %v505 = vpop.f32.mrf.mxu0
      %v506 = vadd.f32 0.0, %v505
      %507 = vmatmul.bf16.gmra.mxu0 %v431
      %v508 = vpop.f32.mrf.mxu0
      %v509 = vadd.f32 0.0, %v508
      %v510 = vpop.f32.mrf.mxu0
      %v511 = vadd.f32 0.0, %v510
      %512 = vdwg.mxu0
      %v521 = vunpack.c.l.b16 %v359
      %v522 = vunpack.c.l.b16 %v360
      %v523 = vunpack.c.l.b16 %v361
      %v524 = vunpack.c.l.b16 %v362
      %v525 = vunpack.c.l.b16 %v363
      %v526 = vunpack.c.l.b16 %v364
      %v527 = vunpack.c.l.b16 %v365
      %v528 = vunpack.c.l.b16 %v366
      %v529 = vpack.c.b16 %v522, %v521
      %v530 = vpack.c.b16 %v524, %v523
      %v531 = vpack.c.b16 %v526, %v525
      %v532 = vpack.c.b16 %v528, %v527
      %v553 = vunpack.c.l.b16 %v367
      %v554 = vunpack.c.l.b16 %v368
      %v555 = vunpack.c.l.b16 %v369
      %v556 = vunpack.c.l.b16 %v370
      %v557 = vunpack.c.l.b16 %v371
      %v558 = vunpack.c.l.b16 %v372
      %v559 = vunpack.c.l.b16 %v373
      %v560 = vunpack.c.l.b16 %v374
      %v561 = vunpack.c.l.b16 %v375
      %v562 = vunpack.c.l.b16 %v376
      %v563 = vunpack.c.l.b16 %v377
      %v564 = vunpack.c.l.b16 %v378
      %v565 = vunpack.c.l.b16 %v379
      %v566 = vunpack.c.l.b16 %v380
      %v567 = vunpack.c.l.b16 %v381
      %v568 = vunpack.c.l.b16 %v382
      %v569 = vpack.c.b16 %v554, %v553
      %v570 = vpack.c.b16 %v556, %v555
      %v571 = vpack.c.b16 %v558, %v557
      %v572 = vpack.c.b16 %v560, %v559
      %v573 = vpack.c.b16 %v562, %v561
      %v574 = vpack.c.b16 %v564, %v563
      %v575 = vpack.c.b16 %v566, %v565
      %v576 = vpack.c.b16 %v568, %v567
      %585 = vmatpush.bf16.msra.mxu0 %v576
      %586 = vmatpush.bf16.msra.mxu0 %v575
      %587 = vmatpush.bf16.msra.mxu0 %v574
      %588 = vmatpush.bf16.msra.mxu0 %v573
      %589 = vmatpush.bf16.msra.mxu0 %v572
      %590 = vmatpush.bf16.msra.mxu0 %v571
      %591 = vmatpush.bf16.msra.mxu0 %v570
      %592 = vmatpush.bf16.msra.mxu0 %v569
      %593 = vmatmul.bf16.gmra.mxu0 %v529
      %v594 = vpop.f32.mrf.mxu0
      %v595 = vadd.f32 %v494, %v594
      %v596 = vpop.f32.mrf.mxu0
      %v597 = vadd.f32 %v496, %v596
      %598 = vmatmul.bf16.gmra.mxu0 %v530
      %v599 = vpop.f32.mrf.mxu0
      %v600 = vadd.f32 %v499, %v599
      %v601 = vpop.f32.mrf.mxu0
      %v602 = vadd.f32 %v501, %v601
      %603 = vmatmul.bf16.gmra.mxu0 %v531
      %v604 = vpop.f32.mrf.mxu0
      %v605 = vadd.f32 %v504, %v604
      %v606 = vpop.f32.mrf.mxu0
      %v607 = vadd.f32 %v506, %v606
      %608 = vmatmul.bf16.gmra.mxu0 %v532
      %v609 = vpop.f32.mrf.mxu0
      %v610 = vadd.f32 %v509, %v609
      %v611 = vpop.f32.mrf.mxu0
      %v612 = vadd.f32 %v511, %v611
      %613 = vdwg.mxu0
      %v614 = vld [vmem:[%s358] sm:$0xf]
      %v615 = vld [vmem:[%s358 + $0x4] sm:$0x1]
      %v616 = vld [vmem:[%s358 + $0x8] sm:$0xf]
      %v617 = vld [vmem:[%s358 + $0xc] sm:$0x1]
      %v618 = vld [vmem:[%s358 + $0x10] sm:$0xf]
      %v619 = vld [vmem:[%s358 + $0x14] sm:$0x1]
      %v620 = vld [vmem:[%s358 + $0x18] sm:$0xf]
      %v621 = vld [vmem:[%s358 + $0x1c] sm:$0x1]
      %v622 = vld [vmem:[%s358 + $0x20] sm:$0xf]
      %v623 = vld [vmem:[%s358 + $0x24] sm:$0x1]
      %v624 = vld [vmem:[%s358 + $0x28] sm:$0xf]
      %v625 = vld [vmem:[%s358 + $0x2c] sm:$0x1]
      %v626 = vld [vmem:[%s358 + $0x30] sm:$0xf]
      %v627 = vld [vmem:[%s358 + $0x34] sm:$0x1]
      %v628 = vld [vmem:[%s358 + $0x38] sm:$0xf]
      %v629 = vld [vmem:[%s358 + $0x3c] sm:$0x1]
      %vm630 = vsmask.f32 3328
      %vm631 = vsmask.f32 7440
      %vm632 = vmor %vm630, %vm631
      %v634 = vshrl.u32 %v614, 16
      %v636 = vrot.slane %v634, 4
      %v637 = vshll.u32 %v614, 16
      %v639 = vrot.slane %v637, 5
      %v640 = vor.u32 %v636, %v639
      %v641 = vrot.slane %v640, 4
      %v643 = vshll.u32 %v615, 16
      %v645 = vrot.slane %v643, 5
      %v646 = vsel %vm632, %v641, %v645
      %v648 = vshrl.u32 %v616, 16
      %v650 = vrot.slane %v648, 4
      %v651 = vshll.u32 %v616, 16
      %v653 = vrot.slane %v651, 5
      %v654 = vor.u32 %v650, %v653
      %v655 = vrot.slane %v654, 4
      %v657 = vshll.u32 %v617, 16
      %v659 = vrot.slane %v657, 5
      %v660 = vsel %vm632, %v655, %v659
      %v662 = vshrl.u32 %v618, 16
      %v664 = vrot.slane %v662, 4
      %v665 = vshll.u32 %v618, 16
      %v667 = vrot.slane %v665, 5
      %v668 = vor.u32 %v664, %v667
      %v669 = vrot.slane %v668, 4
      %v671 = vshll.u32 %v619, 16
      %v673 = vrot.slane %v671, 5
      %v674 = vsel %vm632, %v669, %v673
      %v676 = vshrl.u32 %v620, 16
      %v678 = vrot.slane %v676, 4
      %v679 = vshll.u32 %v620, 16
      %v681 = vrot.slane %v679, 5
      %v682 = vor.u32 %v678, %v681
      %v683 = vrot.slane %v682, 4
      %v685 = vshll.u32 %v621, 16
      %v687 = vrot.slane %v685, 5
      %v688 = vsel %vm632, %v683, %v687
      %v690 = vshrl.u32 %v622, 16
      %v692 = vrot.slane %v690, 4
      %v693 = vshll.u32 %v622, 16
      %v695 = vrot.slane %v693, 5
      %v696 = vor.u32 %v692, %v695
      %v697 = vrot.slane %v696, 4
      %v699 = vshll.u32 %v623, 16
      %v701 = vrot.slane %v699, 5
      %v702 = vsel %vm632, %v697, %v701
      %v704 = vshrl.u32 %v624, 16
      %v706 = vrot.slane %v704, 4
      %v707 = vshll.u32 %v624, 16
      %v709 = vrot.slane %v707, 5
      %v710 = vor.u32 %v706, %v709
      %v711 = vrot.slane %v710, 4
      %v713 = vshll.u32 %v625, 16
      %v715 = vrot.slane %v713, 5
      %v716 = vsel %vm632, %v711, %v715
      %v718 = vshrl.u32 %v626, 16
      %v720 = vrot.slane %v718, 4
      %v721 = vshll.u32 %v626, 16
      %v723 = vrot.slane %v721, 5
      %v724 = vor.u32 %v720, %v723
      %v725 = vrot.slane %v724, 4
      %v727 = vshll.u32 %v627, 16
      %v729 = vrot.slane %v727, 5
      %v730 = vsel %vm632, %v725, %v729
      %v732 = vshrl.u32 %v628, 16
      %v734 = vrot.slane %v732, 4
      %v735 = vshll.u32 %v628, 16
      %v737 = vrot.slane %v735, 5
      %v738 = vor.u32 %v734, %v737
      %v739 = vrot.slane %v738, 4
      %v741 = vshll.u32 %v629, 16
      %v743 = vrot.slane %v741, 5
      %v744 = vsel %vm632, %v739, %v743
      %s745 = scalar_lea.vmem %s314, 128
      %v746 = vld [vmem:[%s745] sm:$0xf]
      %v747 = vld [vmem:[%s745 + $0x4] sm:$0xf]
      %v748 = vld [vmem:[%s745 + $0x8] sm:$0xf]
      %v749 = vld [vmem:[%s745 + $0xc] sm:$0xf]
      %v750 = vld [vmem:[%s745 + $0x10] sm:$0xf]
      %v751 = vld [vmem:[%s745 + $0x14] sm:$0xf]
      %v752 = vld [vmem:[%s745 + $0x18] sm:$0xf]
      %v753 = vld [vmem:[%s745 + $0x1c] sm:$0xf]
      %v754 = vld [vmem:[%s745 + $0x20] sm:$0xf]
      %v755 = vld [vmem:[%s745 + $0x24] sm:$0xf]
      %v756 = vld [vmem:[%s745 + $0x28] sm:$0xf]
      %v757 = vld [vmem:[%s745 + $0x2c] sm:$0xf]
      %v758 = vld [vmem:[%s745 + $0x30] sm:$0xf]
      %v759 = vld [vmem:[%s745 + $0x34] sm:$0xf]
      %v760 = vld [vmem:[%s745 + $0x38] sm:$0xf]
      %v761 = vld [vmem:[%s745 + $0x3c] sm:$0xf]
      %v762 = vunpack.c.l.b16 %v646
      %v763 = vunpack.c.l.b16 %v660
      %v764 = vunpack.c.l.b16 %v674
      %v765 = vunpack.c.l.b16 %v688
      %v766 = vunpack.c.l.b16 %v702
      %v767 = vunpack.c.l.b16 %v716
      %v768 = vunpack.c.l.b16 %v730
      %v769 = vunpack.c.l.b16 %v744
      %v770 = vpack.c.b16 %v763, %v762
      %v771 = vpack.c.b16 %v765, %v764
      %v772 = vpack.c.b16 %v767, %v766
      %v773 = vpack.c.b16 %v769, %v768
      %v794 = vunpack.c.l.b16 %v746
      %v795 = vunpack.c.l.b16 %v747
      %v796 = vunpack.c.l.b16 %v748
      %v797 = vunpack.c.l.b16 %v749
      %v798 = vunpack.c.l.b16 %v750
      %v799 = vunpack.c.l.b16 %v751
      %v800 = vunpack.c.l.b16 %v752
      %v801 = vunpack.c.l.b16 %v753
      %v802 = vunpack.c.l.b16 %v754
      %v803 = vunpack.c.l.b16 %v755
      %v804 = vunpack.c.l.b16 %v756
      %v805 = vunpack.c.l.b16 %v757
      %v806 = vunpack.c.l.b16 %v758
      %v807 = vunpack.c.l.b16 %v759
      %v808 = vunpack.c.l.b16 %v760
      %v809 = vunpack.c.l.b16 %v761
      %v810 = vpack.c.b16 %v795, %v794
      %v811 = vpack.c.b16 %v797, %v796
      %v812 = vpack.c.b16 %v799, %v798
      %v813 = vpack.c.b16 %v801, %v800
      %v814 = vpack.c.b16 %v803, %v802
      %v815 = vpack.c.b16 %v805, %v804
      %v816 = vpack.c.b16 %v807, %v806
      %v817 = vpack.c.b16 %v809, %v808
      %826 = vmatpush.bf16.msra.mxu0 %v817
      %827 = vmatpush.bf16.msra.mxu0 %v816
      %828 = vmatpush.bf16.msra.mxu0 %v815
      %829 = vmatpush.bf16.msra.mxu0 %v814
      %830 = vmatpush.bf16.msra.mxu0 %v813
      %831 = vmatpush.bf16.msra.mxu0 %v812
      %832 = vmatpush.bf16.msra.mxu0 %v811
      %833 = vmatpush.bf16.msra.mxu0 %v810
      %834 = vmatmul.bf16.gmra.mxu0 %v770
      %v835 = vpop.f32.mrf.mxu0
      %v836 = vadd.f32 0.0, %v835
      %v837 = vpop.f32.mrf.mxu0
      %v838 = vadd.f32 0.0, %v837
      %839 = vmatmul.bf16.gmra.mxu0 %v771
      %v840 = vpop.f32.mrf.mxu0
      %v841 = vadd.f32 0.0, %v840
      %v842 = vpop.f32.mrf.mxu0
      %v843 = vadd.f32 0.0, %v842
      %844 = vmatmul.bf16.gmra.mxu0 %v772
      %v845 = vpop.f32.mrf.mxu0
      %v846 = vadd.f32 0.0, %v845
      %v847 = vpop.f32.mrf.mxu0
      %v848 = vadd.f32 0.0, %v847
      %849 = vmatmul.bf16.gmra.mxu0 %v773
      %v850 = vpop.f32.mrf.mxu0
      %v851 = vadd.f32 0.0, %v850
      %v852 = vpop.f32.mrf.mxu0
      %v853 = vadd.f32 0.0, %v852
      %854 = vdwg.mxu0
      %v855 = vadd.f32 %v595, %v836
      %v856 = vadd.f32 %v597, %v838
      %v857 = vadd.f32 %v600, %v841
      %v858 = vadd.f32 %v602, %v843
      %v859 = vadd.f32 %v605, %v846
      %v860 = vadd.f32 %v607, %v848
      %v861 = vadd.f32 %v610, %v851
      %v862 = vadd.f32 %v612, %v853
      %s863 = sadd.s32 %s355, 18
      %s864 = smul.u32 %s863, 2
      %s865 = smul.addr %s864, 4
      %s866 = scalar_lea.vmem %s310, %s865
      %v867 = vld [vmem:[%s866] sm:$0xf]
      %v868 = vld [vmem:[%s866 + $0x8] sm:$0xf]
      %v869 = vld [vmem:[%s866 + $0x10] sm:$0xf]
      %v870 = vld [vmem:[%s866 + $0x18] sm:$0xf]
      %v871 = vld [vmem:[%s866 + $0x20] sm:$0xf]
      %v872 = vld [vmem:[%s866 + $0x28] sm:$0xf]
      %v873 = vld [vmem:[%s866 + $0x30] sm:$0xf]
      %v874 = vld [vmem:[%s866 + $0x38] sm:$0xf]
      %s875 = scalar_lea.vmem %s314, 192
      %v876 = vld [vmem:[%s875] sm:$0xf]
      %v877 = vld [vmem:[%s875 + $0x4] sm:$0xf]
      %v878 = vld [vmem:[%s875 + $0x8] sm:$0xf]
      %v879 = vld [vmem:[%s875 + $0xc] sm:$0xf]
      %v880 = vld [vmem:[%s875 + $0x10] sm:$0xf]
      %v881 = vld [vmem:[%s875 + $0x14] sm:$0xf]
      %v882 = vld [vmem:[%s875 + $0x18] sm:$0xf]
      %v883 = vld [vmem:[%s875 + $0x1c] sm:$0xf]
      %v884 = vld [vmem:[%s875 + $0x20] sm:$0xf]
      %v885 = vld [vmem:[%s875 + $0x24] sm:$0xf]
      %v886 = vld [vmem:[%s875 + $0x28] sm:$0xf]
      %v887 = vld [vmem:[%s875 + $0x2c] sm:$0xf]
      %v888 = vld [vmem:[%s875 + $0x30] sm:$0xf]
      %v889 = vld [vmem:[%s875 + $0x34] sm:$0xf]
      %v890 = vld [vmem:[%s875 + $0x38] sm:$0xf]
      %v891 = vld [vmem:[%s875 + $0x3c] sm:$0xf]
      %v900 = vunpack.c.l.b16 %v867
      %v901 = vunpack.c.l.b16 %v868
      %v902 = vunpack.c.l.b16 %v869
      %v903 = vunpack.c.l.b16 %v870
      %v904 = vunpack.c.l.b16 %v871
      %v905 = vunpack.c.l.b16 %v872
      %v906 = vunpack.c.l.b16 %v873
      %v907 = vunpack.c.l.b16 %v874
      %v908 = vpack.c.b16 %v901, %v900
      %v909 = vpack.c.b16 %v903, %v902
      %v910 = vpack.c.b16 %v905, %v904
      %v911 = vpack.c.b16 %v907, %v906
      %v932 = vunpack.c.l.b16 %v876
      %v933 = vunpack.c.l.b16 %v877
      %v934 = vunpack.c.l.b16 %v878
      %v935 = vunpack.c.l.b16 %v879
      %v936 = vunpack.c.l.b16 %v880
      %v937 = vunpack.c.l.b16 %v881
      %v938 = vunpack.c.l.b16 %v882
      %v939 = vunpack.c.l.b16 %v883
      %v940 = vunpack.c.l.b16 %v884
      %v941 = vunpack.c.l.b16 %v885
      %v942 = vunpack.c.l.b16 %v886
      %v943 = vunpack.c.l.b16 %v887
      %v944 = vunpack.c.l.b16 %v888
      %v945 = vunpack.c.l.b16 %v889
      %v946 = vunpack.c.l.b16 %v890
      %v947 = vunpack.c.l.b16 %v891
      %v948 = vpack.c.b16 %v933, %v932
      %v949 = vpack.c.b16 %v935, %v934
      %v950 = vpack.c.b16 %v937, %v936
      %v951 = vpack.c.b16 %v939, %v938
      %v952 = vpack.c.b16 %v941, %v940
      %v953 = vpack.c.b16 %v943, %v942
      %v954 = vpack.c.b16 %v945, %v944
      %v955 = vpack.c.b16 %v947, %v946
      %964 = vmatpush.bf16.msra.mxu0 %v955
      %965 = vmatpush.bf16.msra.mxu0 %v954
      %966 = vmatpush.bf16.msra.mxu0 %v953
      %967 = vmatpush.bf16.msra.mxu0 %v952
      %968 = vmatpush.bf16.msra.mxu0 %v951
      %969 = vmatpush.bf16.msra.mxu0 %v950
      %970 = vmatpush.bf16.msra.mxu0 %v949
      %971 = vmatpush.bf16.msra.mxu0 %v948
      %972 = vmatmul.bf16.gmra.mxu0 %v908
      %v973 = vpop.f32.mrf.mxu0
      %v974 = vadd.f32 0.0, %v973
      %v975 = vpop.f32.mrf.mxu0
      %v976 = vadd.f32 0.0, %v975
      %977 = vmatmul.bf16.gmra.mxu0 %v909
      %v978 = vpop.f32.mrf.mxu0
      %v979 = vadd.f32 0.0, %v978
      %v980 = vpop.f32.mrf.mxu0
      %v981 = vadd.f32 0.0, %v980
      %982 = vmatmul.bf16.gmra.mxu0 %v910
      %v983 = vpop.f32.mrf.mxu0
      %v984 = vadd.f32 0.0, %v983
      %v985 = vpop.f32.mrf.mxu0
      %v986 = vadd.f32 0.0, %v985
      %987 = vmatmul.bf16.gmra.mxu0 %v911
      %v988 = vpop.f32.mrf.mxu0
      %v989 = vadd.f32 0.0, %v988
      %v990 = vpop.f32.mrf.mxu0
      %v991 = vadd.f32 0.0, %v990
      %992 = vdwg.mxu0
      %v993 = vadd.f32 %v855, %v974
      %v994 = vadd.f32 %v856, %v976
      %v995 = vadd.f32 %v857, %v979
      %v996 = vadd.f32 %v858, %v981
      %v997 = vadd.f32 %v859, %v984
      %v998 = vadd.f32 %v860, %v986
      %v999 = vadd.f32 %v861, %v989
      %v1000 = vadd.f32 %v862, %v991
      %s1001 = sadd.s32 %s355, 27
      %s1002 = smul.u32 %s1001, 2
      %s1003 = smul.addr %s1002, 4
      %s1004 = scalar_lea.vmem %s310, %s1003
      %v1005 = vld [vmem:[%s1004] sm:$0xf]
      %v1006 = vld [vmem:[%s1004 + $0x8] sm:$0xf]
      %v1007 = vld [vmem:[%s1004 + $0x10] sm:$0xf]
      %v1008 = vld [vmem:[%s1004 + $0x18] sm:$0xf]
      %v1009 = vld [vmem:[%s1004 + $0x20] sm:$0xf]
      %v1010 = vld [vmem:[%s1004 + $0x28] sm:$0xf]
      %v1011 = vld [vmem:[%s1004 + $0x30] sm:$0xf]
      %v1012 = vld [vmem:[%s1004 + $0x38] sm:$0xf]
      %s1013 = scalar_lea.vmem %s314, 256
      %v1014 = vld [vmem:[%s1013] sm:$0xf]
      %v1015 = vld [vmem:[%s1013 + $0x4] sm:$0xf]
      %v1016 = vld [vmem:[%s1013 + $0x8] sm:$0xf]
      %v1017 = vld [vmem:[%s1013 + $0xc] sm:$0xf]
      %v1018 = vld [vmem:[%s1013 + $0x10] sm:$0xf]
      %v1019 = vld [vmem:[%s1013 + $0x14] sm:$0xf]
      %v1020 = vld [vmem:[%s1013 + $0x18] sm:$0xf]
      %v1021 = vld [vmem:[%s1013 + $0x1c] sm:$0xf]
      %v1022 = vld [vmem:[%s1013 + $0x20] sm:$0xf]
      %v1023 = vld [vmem:[%s1013 + $0x24] sm:$0xf]
      %v1024 = vld [vmem:[%s1013 + $0x28] sm:$0xf]
      %v1025 = vld [vmem:[%s1013 + $0x2c] sm:$0xf]
      %v1026 = vld [vmem:[%s1013 + $0x30] sm:$0xf]
      %v1027 = vld [vmem:[%s1013 + $0x34] sm:$0xf]
      %v1028 = vld [vmem:[%s1013 + $0x38] sm:$0xf]
      %v1029 = vld [vmem:[%s1013 + $0x3c] sm:$0xf]
      %v1038 = vunpack.c.l.b16 %v1005
      %v1039 = vunpack.c.l.b16 %v1006
      %v1040 = vunpack.c.l.b16 %v1007
      %v1041 = vunpack.c.l.b16 %v1008
      %v1042 = vunpack.c.l.b16 %v1009
      %v1043 = vunpack.c.l.b16 %v1010
      %v1044 = vunpack.c.l.b16 %v1011
      %v1045 = vunpack.c.l.b16 %v1012
      %v1046 = vpack.c.b16 %v1039, %v1038
      %v1047 = vpack.c.b16 %v1041, %v1040
      %v1048 = vpack.c.b16 %v1043, %v1042
      %v1049 = vpack.c.b16 %v1045, %v1044
      %v1070 = vunpack.c.l.b16 %v1014
      %v1071 = vunpack.c.l.b16 %v1015
      %v1072 = vunpack.c.l.b16 %v1016
      %v1073 = vunpack.c.l.b16 %v1017
      %v1074 = vunpack.c.l.b16 %v1018
      %v1075 = vunpack.c.l.b16 %v1019
      %v1076 = vunpack.c.l.b16 %v1020
      %v1077 = vunpack.c.l.b16 %v1021
      %v1078 = vunpack.c.l.b16 %v1022
      %v1079 = vunpack.c.l.b16 %v1023
      %v1080 = vunpack.c.l.b16 %v1024
      %v1081 = vunpack.c.l.b16 %v1025
      %v1082 = vunpack.c.l.b16 %v1026
      %v1083 = vunpack.c.l.b16 %v1027
      %v1084 = vunpack.c.l.b16 %v1028
      %v1085 = vunpack.c.l.b16 %v1029
      %v1086 = vpack.c.b16 %v1071, %v1070
      %v1087 = vpack.c.b16 %v1073, %v1072
      %v1088 = vpack.c.b16 %v1075, %v1074
      %v1089 = vpack.c.b16 %v1077, %v1076
      %v1090 = vpack.c.b16 %v1079, %v1078
      %v1091 = vpack.c.b16 %v1081, %v1080
      %v1092 = vpack.c.b16 %v1083, %v1082
      %v1093 = vpack.c.b16 %v1085, %v1084
      %1102 = vmatpush.bf16.msra.mxu0 %v1093
      %1103 = vmatpush.bf16.msra.mxu0 %v1092
      %1104 = vmatpush.bf16.msra.mxu0 %v1091
      %1105 = vmatpush.bf16.msra.mxu0 %v1090
      %1106 = vmatpush.bf16.msra.mxu0 %v1089
      %1107 = vmatpush.bf16.msra.mxu0 %v1088
      %1108 = vmatpush.bf16.msra.mxu0 %v1087
      %1109 = vmatpush.bf16.msra.mxu0 %v1086
      %1110 = vmatmul.bf16.gmra.mxu0 %v1046
      %v1111 = vpop.f32.mrf.mxu0
      %v1112 = vadd.f32 0.0, %v1111
      %v1113 = vpop.f32.mrf.mxu0
      %v1114 = vadd.f32 0.0, %v1113
      %1115 = vmatmul.bf16.gmra.mxu0 %v1047
      %v1116 = vpop.f32.mrf.mxu0
      %v1117 = vadd.f32 0.0, %v1116
      %v1118 = vpop.f32.mrf.mxu0
      %v1119 = vadd.f32 0.0, %v1118
      %1120 = vmatmul.bf16.gmra.mxu0 %v1048
      %v1121 = vpop.f32.mrf.mxu0
      %v1122 = vadd.f32 0.0, %v1121
      %v1123 = vpop.f32.mrf.mxu0
      %v1124 = vadd.f32 0.0, %v1123
      %1125 = vmatmul.bf16.gmra.mxu0 %v1049
      %v1126 = vpop.f32.mrf.mxu0
      %v1127 = vadd.f32 0.0, %v1126
      %v1128 = vpop.f32.mrf.mxu0
      %v1129 = vadd.f32 0.0, %v1128
      %1130 = vdwg.mxu0
      %v1131 = vadd.f32 %v993, %v1112
      %v1132 = vadd.f32 %v994, %v1114
      %v1133 = vadd.f32 %v995, %v1117
      %v1134 = vadd.f32 %v996, %v1119
      %v1135 = vadd.f32 %v997, %v1122
      %v1136 = vadd.f32 %v998, %v1124
      %v1137 = vadd.f32 %v999, %v1127
      %v1138 = vadd.f32 %v1000, %v1129
      %v1139 = vld [vmem:[%s866] sm:$0xf]
      %v1140 = vld [vmem:[%s866 + $0x4] sm:$0x1]
      %v1141 = vld [vmem:[%s866 + $0x8] sm:$0xf]
      %v1142 = vld [vmem:[%s866 + $0xc] sm:$0x1]
      %v1143 = vld [vmem:[%s866 + $0x10] sm:$0xf]
      %v1144 = vld [vmem:[%s866 + $0x14] sm:$0x1]
      %v1145 = vld [vmem:[%s866 + $0x18] sm:$0xf]
      %v1146 = vld [vmem:[%s866 + $0x1c] sm:$0x1]
      %v1147 = vld [vmem:[%s866 + $0x20] sm:$0xf]
      %v1148 = vld [vmem:[%s866 + $0x24] sm:$0x1]
      %v1149 = vld [vmem:[%s866 + $0x28] sm:$0xf]
      %v1150 = vld [vmem:[%s866 + $0x2c] sm:$0x1]
      %v1151 = vld [vmem:[%s866 + $0x30] sm:$0xf]
      %v1152 = vld [vmem:[%s866 + $0x34] sm:$0x1]
      %v1153 = vld [vmem:[%s866 + $0x38] sm:$0xf]
      %v1154 = vld [vmem:[%s866 + $0x3c] sm:$0x1]
      %v1156 = vshrl.u32 %v1139, 16
      %v1158 = vrot.slane %v1156, 4
      %v1159 = vshll.u32 %v1139, 16
      %v1161 = vrot.slane %v1159, 5
      %v1162 = vor.u32 %v1158, %v1161
      %v1163 = vrot.slane %v1162, 4
      %v1165 = vshll.u32 %v1140, 16
      %v1167 = vrot.slane %v1165, 5
      %v1168 = vsel %vm632, %v1163, %v1167
      %v1170 = vshrl.u32 %v1141, 16
      %v1172 = vrot.slane %v1170, 4
      %v1173 = vshll.u32 %v1141, 16
      %v1175 = vrot.slane %v1173, 5
      %v1176 = vor.u32 %v1172, %v1175
      %v1177 = vrot.slane %v1176, 4
      %v1179 = vshll.u32 %v1142, 16
      %v1181 = vrot.slane %v1179, 5
      %v1182 = vsel %vm632, %v1177, %v1181
      %v1184 = vshrl.u32 %v1143, 16
      %v1186 = vrot.slane %v1184, 4
      %v1187 = vshll.u32 %v1143, 16
      %v1189 = vrot.slane %v1187, 5
      %v1190 = vor.u32 %v1186, %v1189
      %v1191 = vrot.slane %v1190, 4
      %v1193 = vshll.u32 %v1144, 16
      %v1195 = vrot.slane %v1193, 5
      %v1196 = vsel %vm632, %v1191, %v1195
      %v1198 = vshrl.u32 %v1145, 16
      %v1200 = vrot.slane %v1198, 4
      %v1201 = vshll.u32 %v1145, 16
      %v1203 = vrot.slane %v1201, 5
      %v1204 = vor.u32 %v1200, %v1203
      %v1205 = vrot.slane %v1204, 4
      %v1207 = vshll.u32 %v1146, 16
      %v1209 = vrot.slane %v1207, 5
      %v1210 = vsel %vm632, %v1205, %v1209
      %v1212 = vshrl.u32 %v1147, 16
      %v1214 = vrot.slane %v1212, 4
      %v1215 = vshll.u32 %v1147, 16
      %v1217 = vrot.slane %v1215, 5
      %v1218 = vor.u32 %v1214, %v1217
      %v1219 = vrot.slane %v1218, 4
      %v1221 = vshll.u32 %v1148, 16
      %v1223 = vrot.slane %v1221, 5
      %v1224 = vsel %vm632, %v1219, %v1223
      %v1226 = vshrl.u32 %v1149, 16
      %v1228 = vrot.slane %v1226, 4
      %v1229 = vshll.u32 %v1149, 16
      %v1231 = vrot.slane %v1229, 5
      %v1232 = vor.u32 %v1228, %v1231
      %v1233 = vrot.slane %v1232, 4
      %v1235 = vshll.u32 %v1150, 16
      %v1237 = vrot.slane %v1235, 5
      %v1238 = vsel %vm632, %v1233, %v1237
      %v1240 = vshrl.u32 %v1151, 16
      %v1242 = vrot.slane %v1240, 4
      %v1243 = vshll.u32 %v1151, 16
      %v1245 = vrot.slane %v1243, 5
      %v1246 = vor.u32 %v1242, %v1245
      %v1247 = vrot.slane %v1246, 4
      %v1249 = vshll.u32 %v1152, 16
      %v1251 = vrot.slane %v1249, 5
      %v1252 = vsel %vm632, %v1247, %v1251
      %v1254 = vshrl.u32 %v1153, 16
      %v1256 = vrot.slane %v1254, 4
      %v1257 = vshll.u32 %v1153, 16
      %v1259 = vrot.slane %v1257, 5
      %v1260 = vor.u32 %v1256, %v1259
      %v1261 = vrot.slane %v1260, 4
      %v1263 = vshll.u32 %v1154, 16
      %v1265 = vrot.slane %v1263, 5
      %v1266 = vsel %vm632, %v1261, %v1265
      %s1267 = scalar_lea.vmem %s314, 320
      %v1268 = vld [vmem:[%s1267] sm:$0xf]
      %v1269 = vld [vmem:[%s1267 + $0x4] sm:$0xf]
      %v1270 = vld [vmem:[%s1267 + $0x8] sm:$0xf]
      %v1271 = vld [vmem:[%s1267 + $0xc] sm:$0xf]
      %v1272 = vld [vmem:[%s1267 + $0x10] sm:$0xf]
      %v1273 = vld [vmem:[%s1267 + $0x14] sm:$0xf]
      %v1274 = vld [vmem:[%s1267 + $0x18] sm:$0xf]
      %v1275 = vld [vmem:[%s1267 + $0x1c] sm:$0xf]
      %v1276 = vld [vmem:[%s1267 + $0x20] sm:$0xf]
      %v1277 = vld [vmem:[%s1267 + $0x24] sm:$0xf]
      %v1278 = vld [vmem:[%s1267 + $0x28] sm:$0xf]
      %v1279 = vld [vmem:[%s1267 + $0x2c] sm:$0xf]
      %v1280 = vld [vmem:[%s1267 + $0x30] sm:$0xf]
      %v1281 = vld [vmem:[%s1267 + $0x34] sm:$0xf]
      %v1282 = vld [vmem:[%s1267 + $0x38] sm:$0xf]
      %v1283 = vld [vmem:[%s1267 + $0x3c] sm:$0xf]
      %v1284 = vunpack.c.l.b16 %v1168
      %v1285 = vunpack.c.l.b16 %v1182
      %v1286 = vunpack.c.l.b16 %v1196
      %v1287 = vunpack.c.l.b16 %v1210
      %v1288 = vunpack.c.l.b16 %v1224
      %v1289 = vunpack.c.l.b16 %v1238
      %v1290 = vunpack.c.l.b16 %v1252
      %v1291 = vunpack.c.l.b16 %v1266
      %v1292 = vpack.c.b16 %v1285, %v1284
      %v1293 = vpack.c.b16 %v1287, %v1286
      %v1294 = vpack.c.b16 %v1289, %v1288
      %v1295 = vpack.c.b16 %v1291, %v1290
      %v1316 = vunpack.c.l.b16 %v1268
      %v1317 = vunpack.c.l.b16 %v1269
      %v1318 = vunpack.c.l.b16 %v1270
      %v1319 = vunpack.c.l.b16 %v1271
      %v1320 = vunpack.c.l.b16 %v1272
      %v1321 = vunpack.c.l.b16 %v1273
      %v1322 = vunpack.c.l.b16 %v1274
      %v1323 = vunpack.c.l.b16 %v1275
      %v1324 = vunpack.c.l.b16 %v1276
      %v1325 = vunpack.c.l.b16 %v1277
      %v1326 = vunpack.c.l.b16 %v1278
      %v1327 = vunpack.c.l.b16 %v1279
      %v1328 = vunpack.c.l.b16 %v1280
      %v1329 = vunpack.c.l.b16 %v1281
      %v1330 = vunpack.c.l.b16 %v1282
      %v1331 = vunpack.c.l.b16 %v1283
      %v1332 = vpack.c.b16 %v1317, %v1316
      %v1333 = vpack.c.b16 %v1319, %v1318
      %v1334 = vpack.c.b16 %v1321, %v1320
      %v1335 = vpack.c.b16 %v1323, %v1322
      %v1336 = vpack.c.b16 %v1325, %v1324
      %v1337 = vpack.c.b16 %v1327, %v1326
      %v1338 = vpack.c.b16 %v1329, %v1328
      %v1339 = vpack.c.b16 %v1331, %v1330
      %1348 = vmatpush.bf16.msra.mxu0 %v1339
      %1349 = vmatpush.bf16.msra.mxu0 %v1338
      %1350 = vmatpush.bf16.msra.mxu0 %v1337
      %1351 = vmatpush.bf16.msra.mxu0 %v1336
      %1352 = vmatpush.bf16.msra.mxu0 %v1335
      %1353 = vmatpush.bf16.msra.mxu0 %v1334
      %1354 = vmatpush.bf16.msra.mxu0 %v1333
      %1355 = vmatpush.bf16.msra.mxu0 %v1332
      %1356 = vmatmul.bf16.gmra.mxu0 %v1292
      %v1357 = vpop.f32.mrf.mxu0
      %v1358 = vadd.f32 0.0, %v1357
      %v1359 = vpop.f32.mrf.mxu0
      %v1360 = vadd.f32 0.0, %v1359
      %1361 = vmatmul.bf16.gmra.mxu0 %v1293
      %v1362 = vpop.f32.mrf.mxu0
      %v1363 = vadd.f32 0.0, %v1362
      %v1364 = vpop.f32.mrf.mxu0
      %v1365 = vadd.f32 0.0, %v1364
      %1366 = vmatmul.bf16.gmra.mxu0 %v1294
      %v1367 = vpop.f32.mrf.mxu0
      %v1368 = vadd.f32 0.0, %v1367
      %v1369 = vpop.f32.mrf.mxu0
      %v1370 = vadd.f32 0.0, %v1369
      %1371 = vmatmul.bf16.gmra.mxu0 %v1295
      %v1372 = vpop.f32.mrf.mxu0
      %v1373 = vadd.f32 0.0, %v1372
      %v1374 = vpop.f32.mrf.mxu0
      %v1375 = vadd.f32 0.0, %v1374
      %1376 = vdwg.mxu0
      %v1377 = vadd.f32 %v1131, %v1358
      %v1378 = vadd.f32 %v1132, %v1360
      %v1379 = vadd.f32 %v1133, %v1363
      %v1380 = vadd.f32 %v1134, %v1365
      %v1381 = vadd.f32 %v1135, %v1368
      %v1382 = vadd.f32 %v1136, %v1370
      %v1383 = vadd.f32 %v1137, %v1373
      %v1384 = vadd.f32 %v1138, %v1375
      %s1385 = sadd.s32 %s355, 1
      %s1386 = smul.u32 %s1385, 2
      %s1387 = smul.addr %s1386, 4
      %s1388 = scalar_lea.vmem %s310, %s1387
      %v1389 = vld [vmem:[%s1388] sm:$0xf]
      %v1390 = vld [vmem:[%s1388 + $0x8] sm:$0xf]
      %v1391 = vld [vmem:[%s1388 + $0x10] sm:$0xf]
      %v1392 = vld [vmem:[%s1388 + $0x18] sm:$0xf]
      %v1393 = vld [vmem:[%s1388 + $0x20] sm:$0xf]
      %v1394 = vld [vmem:[%s1388 + $0x28] sm:$0xf]
      %v1395 = vld [vmem:[%s1388 + $0x30] sm:$0xf]
      %v1396 = vld [vmem:[%s1388 + $0x38] sm:$0xf]
      %s1397 = scalar_lea.vmem %s314, 384
      %v1398 = vld [vmem:[%s1397] sm:$0xf]
      %v1399 = vld [vmem:[%s1397 + $0x4] sm:$0xf]
      %v1400 = vld [vmem:[%s1397 + $0x8] sm:$0xf]
      %v1401 = vld [vmem:[%s1397 + $0xc] sm:$0xf]
      %v1402 = vld [vmem:[%s1397 + $0x10] sm:$0xf]
      %v1403 = vld [vmem:[%s1397 + $0x14] sm:$0xf]
      %v1404 = vld [vmem:[%s1397 + $0x18] sm:$0xf]
      %v1405 = vld [vmem:[%s1397 + $0x1c] sm:$0xf]
      %v1406 = vld [vmem:[%s1397 + $0x20] sm:$0xf]
      %v1407 = vld [vmem:[%s1397 + $0x24] sm:$0xf]
      %v1408 = vld [vmem:[%s1397 + $0x28] sm:$0xf]
      %v1409 = vld [vmem:[%s1397 + $0x2c] sm:$0xf]
      %v1410 = vld [vmem:[%s1397 + $0x30] sm:$0xf]
      %v1411 = vld [vmem:[%s1397 + $0x34] sm:$0xf]
      %v1412 = vld [vmem:[%s1397 + $0x38] sm:$0xf]
      %v1413 = vld [vmem:[%s1397 + $0x3c] sm:$0xf]
      %v1422 = vunpack.c.l.b16 %v1389
      %v1423 = vunpack.c.l.b16 %v1390
      %v1424 = vunpack.c.l.b16 %v1391
      %v1425 = vunpack.c.l.b16 %v1392
      %v1426 = vunpack.c.l.b16 %v1393
      %v1427 = vunpack.c.l.b16 %v1394
      %v1428 = vunpack.c.l.b16 %v1395
      %v1429 = vunpack.c.l.b16 %v1396
      %v1430 = vpack.c.b16 %v1423, %v1422
      %v1431 = vpack.c.b16 %v1425, %v1424
      %v1432 = vpack.c.b16 %v1427, %v1426
      %v1433 = vpack.c.b16 %v1429, %v1428
      %v1454 = vunpack.c.l.b16 %v1398
      %v1455 = vunpack.c.l.b16 %v1399
      %v1456 = vunpack.c.l.b16 %v1400
      %v1457 = vunpack.c.l.b16 %v1401
      %v1458 = vunpack.c.l.b16 %v1402
      %v1459 = vunpack.c.l.b16 %v1403
      %v1460 = vunpack.c.l.b16 %v1404
      %v1461 = vunpack.c.l.b16 %v1405
      %v1462 = vunpack.c.l.b16 %v1406
      %v1463 = vunpack.c.l.b16 %v1407
      %v1464 = vunpack.c.l.b16 %v1408
      %v1465 = vunpack.c.l.b16 %v1409
      %v1466 = vunpack.c.l.b16 %v1410
      %v1467 = vunpack.c.l.b16 %v1411
      %v1468 = vunpack.c.l.b16 %v1412
      %v1469 = vunpack.c.l.b16 %v1413
      %v1470 = vpack.c.b16 %v1455, %v1454
      %v1471 = vpack.c.b16 %v1457, %v1456
      %v1472 = vpack.c.b16 %v1459, %v1458
      %v1473 = vpack.c.b16 %v1461, %v1460
      %v1474 = vpack.c.b16 %v1463, %v1462
      %v1475 = vpack.c.b16 %v1465, %v1464
      %v1476 = vpack.c.b16 %v1467, %v1466
      %v1477 = vpack.c.b16 %v1469, %v1468
      %1486 = vmatpush.bf16.msra.mxu0 %v1477
      %1487 = vmatpush.bf16.msra.mxu0 %v1476
      %1488 = vmatpush.bf16.msra.mxu0 %v1475
      %1489 = vmatpush.bf16.msra.mxu0 %v1474
      %1490 = vmatpush.bf16.msra.mxu0 %v1473
      %1491 = vmatpush.bf16.msra.mxu0 %v1472
      %1492 = vmatpush.bf16.msra.mxu0 %v1471
      %1493 = vmatpush.bf16.msra.mxu0 %v1470
      %1494 = vmatmul.bf16.gmra.mxu0 %v1430
      %v1495 = vpop.f32.mrf.mxu0
      %v1496 = vadd.f32 0.0, %v1495
      %v1497 = vpop.f32.mrf.mxu0
      %v1498 = vadd.f32 0.0, %v1497
      %1499 = vmatmul.bf16.gmra.mxu0 %v1431
      %v1500 = vpop.f32.mrf.mxu0
      %v1501 = vadd.f32 0.0, %v1500
      %v1502 = vpop.f32.mrf.mxu0
      %v1503 = vadd.f32 0.0, %v1502
      %1504 = vmatmul.bf16.gmra.mxu0 %v1432
      %v1505 = vpop.f32.mrf.mxu0
      %v1506 = vadd.f32 0.0, %v1505
      %v1507 = vpop.f32.mrf.mxu0
      %v1508 = vadd.f32 0.0, %v1507
      %1509 = vmatmul.bf16.gmra.mxu0 %v1433
      %v1510 = vpop.f32.mrf.mxu0
      %v1511 = vadd.f32 0.0, %v1510
      %v1512 = vpop.f32.mrf.mxu0
      %v1513 = vadd.f32 0.0, %v1512
      %1514 = vdwg.mxu0
      %v1515 = vadd.f32 %v1377, %v1496
      %v1516 = vadd.f32 %v1378, %v1498
      %v1517 = vadd.f32 %v1379, %v1501
      %v1518 = vadd.f32 %v1380, %v1503
      %v1519 = vadd.f32 %v1381, %v1506
      %v1520 = vadd.f32 %v1382, %v1508
      %v1521 = vadd.f32 %v1383, %v1511
      %v1522 = vadd.f32 %v1384, %v1513
      %s1523 = sadd.s32 %s355, 10
      %s1524 = smul.u32 %s1523, 2
      %s1525 = smul.addr %s1524, 4
      %s1526 = scalar_lea.vmem %s310, %s1525
      %v1527 = vld [vmem:[%s1526] sm:$0xf]
      %v1528 = vld [vmem:[%s1526 + $0x8] sm:$0xf]
      %v1529 = vld [vmem:[%s1526 + $0x10] sm:$0xf]
      %v1530 = vld [vmem:[%s1526 + $0x18] sm:$0xf]
      %v1531 = vld [vmem:[%s1526 + $0x20] sm:$0xf]
      %v1532 = vld [vmem:[%s1526 + $0x28] sm:$0xf]
      %v1533 = vld [vmem:[%s1526 + $0x30] sm:$0xf]
      %v1534 = vld [vmem:[%s1526 + $0x38] sm:$0xf]
      %s1535 = scalar_lea.vmem %s314, 448
      %v1536 = vld [vmem:[%s1535] sm:$0xf]
      %v1537 = vld [vmem:[%s1535 + $0x4] sm:$0xf]
      %v1538 = vld [vmem:[%s1535 + $0x8] sm:$0xf]
      %v1539 = vld [vmem:[%s1535 + $0xc] sm:$0xf]
      %v1540 = vld [vmem:[%s1535 + $0x10] sm:$0xf]
      %v1541 = vld [vmem:[%s1535 + $0x14] sm:$0xf]
      %v1542 = vld [vmem:[%s1535 + $0x18] sm:$0xf]
      %v1543 = vld [vmem:[%s1535 + $0x1c] sm:$0xf]
      %v1544 = vld [vmem:[%s1535 + $0x20] sm:$0xf]
      %v1545 = vld [vmem:[%s1535 + $0x24] sm:$0xf]
      %v1546 = vld [vmem:[%s1535 + $0x28] sm:$0xf]
      %v1547 = vld [vmem:[%s1535 + $0x2c] sm:$0xf]
      %v1548 = vld [vmem:[%s1535 + $0x30] sm:$0xf]
      %v1549 = vld [vmem:[%s1535 + $0x34] sm:$0xf]
      %v1550 = vld [vmem:[%s1535 + $0x38] sm:$0xf]
      %v1551 = vld [vmem:[%s1535 + $0x3c] sm:$0xf]
      %v1560 = vunpack.c.l.b16 %v1527
      %v1561 = vunpack.c.l.b16 %v1528
      %v1562 = vunpack.c.l.b16 %v1529
      %v1563 = vunpack.c.l.b16 %v1530
      %v1564 = vunpack.c.l.b16 %v1531
      %v1565 = vunpack.c.l.b16 %v1532
      %v1566 = vunpack.c.l.b16 %v1533
      %v1567 = vunpack.c.l.b16 %v1534
      %v1568 = vpack.c.b16 %v1561, %v1560
      %v1569 = vpack.c.b16 %v1563, %v1562
      %v1570 = vpack.c.b16 %v1565, %v1564
      %v1571 = vpack.c.b16 %v1567, %v1566
      %v1592 = vunpack.c.l.b16 %v1536
      %v1593 = vunpack.c.l.b16 %v1537
      %v1594 = vunpack.c.l.b16 %v1538
      %v1595 = vunpack.c.l.b16 %v1539
      %v1596 = vunpack.c.l.b16 %v1540
      %v1597 = vunpack.c.l.b16 %v1541
      %v1598 = vunpack.c.l.b16 %v1542
      %v1599 = vunpack.c.l.b16 %v1543
      %v1600 = vunpack.c.l.b16 %v1544
      %v1601 = vunpack.c.l.b16 %v1545
      %v1602 = vunpack.c.l.b16 %v1546
      %v1603 = vunpack.c.l.b16 %v1547
      %v1604 = vunpack.c.l.b16 %v1548
      %v1605 = vunpack.c.l.b16 %v1549
      %v1606 = vunpack.c.l.b16 %v1550
      %v1607 = vunpack.c.l.b16 %v1551
      %v1608 = vpack.c.b16 %v1593, %v1592
      %v1609 = vpack.c.b16 %v1595, %v1594
      %v1610 = vpack.c.b16 %v1597, %v1596
      %v1611 = vpack.c.b16 %v1599, %v1598
      %v1612 = vpack.c.b16 %v1601, %v1600
      %v1613 = vpack.c.b16 %v1603, %v1602
      %v1614 = vpack.c.b16 %v1605, %v1604
      %v1615 = vpack.c.b16 %v1607, %v1606
      %1624 = vmatpush.bf16.msra.mxu0 %v1615
      %1625 = vmatpush.bf16.msra.mxu0 %v1614
      %1626 = vmatpush.bf16.msra.mxu0 %v1613
      %1627 = vmatpush.bf16.msra.mxu0 %v1612
      %1628 = vmatpush.bf16.msra.mxu0 %v1611
      %1629 = vmatpush.bf16.msra.mxu0 %v1610
      %1630 = vmatpush.bf16.msra.mxu0 %v1609
      %1631 = vmatpush.bf16.msra.mxu0 %v1608
      %1632 = vmatmul.bf16.gmra.mxu0 %v1568
      %v1633 = vpop.f32.mrf.mxu0
      %v1634 = vadd.f32 0.0, %v1633
      %v1635 = vpop.f32.mrf.mxu0
      %v1636 = vadd.f32 0.0, %v1635
      %1637 = vmatmul.bf16.gmra.mxu0 %v1569
      %v1638 = vpop.f32.mrf.mxu0
      %v1639 = vadd.f32 0.0, %v1638
      %v1640 = vpop.f32.mrf.mxu0
      %v1641 = vadd.f32 0.0, %v1640
      %1642 = vmatmul.bf16.gmra.mxu0 %v1570
      %v1643 = vpop.f32.mrf.mxu0
      %v1644 = vadd.f32 0.0, %v1643
      %v1645 = vpop.f32.mrf.mxu0
      %v1646 = vadd.f32 0.0, %v1645
      %1647 = vmatmul.bf16.gmra.mxu0 %v1571
      %v1648 = vpop.f32.mrf.mxu0
      %v1649 = vadd.f32 0.0, %v1648
      %v1650 = vpop.f32.mrf.mxu0
      %v1651 = vadd.f32 0.0, %v1650
      %1652 = vdwg.mxu0
      %v1653 = vadd.f32 %v1515, %v1634
      %v1654 = vadd.f32 %v1516, %v1636
      %v1655 = vadd.f32 %v1517, %v1639
      %v1656 = vadd.f32 %v1518, %v1641
      %v1657 = vadd.f32 %v1519, %v1644
      %v1658 = vadd.f32 %v1520, %v1646
      %v1659 = vadd.f32 %v1521, %v1649
      %v1660 = vadd.f32 %v1522, %v1651
      %v1661 = vld [vmem:[%s1388] sm:$0xf]
      %v1662 = vld [vmem:[%s1388 + $0x4] sm:$0x1]
      %v1663 = vld [vmem:[%s1388 + $0x8] sm:$0xf]
      %v1664 = vld [vmem:[%s1388 + $0xc] sm:$0x1]
      %v1665 = vld [vmem:[%s1388 + $0x10] sm:$0xf]
      %v1666 = vld [vmem:[%s1388 + $0x14] sm:$0x1]
      %v1667 = vld [vmem:[%s1388 + $0x18] sm:$0xf]
      %v1668 = vld [vmem:[%s1388 + $0x1c] sm:$0x1]
      %v1669 = vld [vmem:[%s1388 + $0x20] sm:$0xf]
      %v1670 = vld [vmem:[%s1388 + $0x24] sm:$0x1]
      %v1671 = vld [vmem:[%s1388 + $0x28] sm:$0xf]
      %v1672 = vld [vmem:[%s1388 + $0x2c] sm:$0x1]
      %v1673 = vld [vmem:[%s1388 + $0x30] sm:$0xf]
      %v1674 = vld [vmem:[%s1388 + $0x34] sm:$0x1]
      %v1675 = vld [vmem:[%s1388 + $0x38] sm:$0xf]
      %v1676 = vld [vmem:[%s1388 + $0x3c] sm:$0x1]
      %v1678 = vshrl.u32 %v1661, 16
      %v1680 = vrot.slane %v1678, 4
      %v1681 = vshll.u32 %v1661, 16
      %v1683 = vrot.slane %v1681, 5
      %v1684 = vor.u32 %v1680, %v1683
      %v1685 = vrot.slane %v1684, 4
      %v1687 = vshll.u32 %v1662, 16
      %v1689 = vrot.slane %v1687, 5
      %v1690 = vsel %vm632, %v1685, %v1689
      %v1692 = vshrl.u32 %v1663, 16
      %v1694 = vrot.slane %v1692, 4
      %v1695 = vshll.u32 %v1663, 16
      %v1697 = vrot.slane %v1695, 5
      %v1698 = vor.u32 %v1694, %v1697
      %v1699 = vrot.slane %v1698, 4
      %v1701 = vshll.u32 %v1664, 16
      %v1703 = vrot.slane %v1701, 5
      %v1704 = vsel %vm632, %v1699, %v1703
      %v1706 = vshrl.u32 %v1665, 16
      %v1708 = vrot.slane %v1706, 4
      %v1709 = vshll.u32 %v1665, 16
      %v1711 = vrot.slane %v1709, 5
      %v1712 = vor.u32 %v1708, %v1711
      %v1713 = vrot.slane %v1712, 4
      %v1715 = vshll.u32 %v1666, 16
      %v1717 = vrot.slane %v1715, 5
      %v1718 = vsel %vm632, %v1713, %v1717
      %v1720 = vshrl.u32 %v1667, 16
      %v1722 = vrot.slane %v1720, 4
      %v1723 = vshll.u32 %v1667, 16
      %v1725 = vrot.slane %v1723, 5
      %v1726 = vor.u32 %v1722, %v1725
      %v1727 = vrot.slane %v1726, 4
      %v1729 = vshll.u32 %v1668, 16
      %v1731 = vrot.slane %v1729, 5
      %v1732 = vsel %vm632, %v1727, %v1731
      %v1734 = vshrl.u32 %v1669, 16
      %v1736 = vrot.slane %v1734, 4
      %v1737 = vshll.u32 %v1669, 16
      %v1739 = vrot.slane %v1737, 5
      %v1740 = vor.u32 %v1736, %v1739
      %v1741 = vrot.slane %v1740, 4
      %v1743 = vshll.u32 %v1670, 16
      %v1745 = vrot.slane %v1743, 5
      %v1746 = vsel %vm632, %v1741, %v1745
      %v1748 = vshrl.u32 %v1671, 16
      %v1750 = vrot.slane %v1748, 4
      %v1751 = vshll.u32 %v1671, 16
      %v1753 = vrot.slane %v1751, 5
      %v1754 = vor.u32 %v1750, %v1753
      %v1755 = vrot.slane %v1754, 4
      %v1757 = vshll.u32 %v1672, 16
      %v1759 = vrot.slane %v1757, 5
      %v1760 = vsel %vm632, %v1755, %v1759
      %v1762 = vshrl.u32 %v1673, 16
      %v1764 = vrot.slane %v1762, 4
      %v1765 = vshll.u32 %v1673, 16
      %v1767 = vrot.slane %v1765, 5
      %v1768 = vor.u32 %v1764, %v1767
      %v1769 = vrot.slane %v1768, 4
      %v1771 = vshll.u32 %v1674, 16
      %v1773 = vrot.slane %v1771, 5
      %v1774 = vsel %vm632, %v1769, %v1773
      %v1776 = vshrl.u32 %v1675, 16
      %v1778 = vrot.slane %v1776, 4
      %v1779 = vshll.u32 %v1675, 16
      %v1781 = vrot.slane %v1779, 5
      %v1782 = vor.u32 %v1778, %v1781
      %v1783 = vrot.slane %v1782, 4
      %v1785 = vshll.u32 %v1676, 16
      %v1787 = vrot.slane %v1785, 5
      %v1788 = vsel %vm632, %v1783, %v1787
      %s1789 = scalar_lea.vmem %s314, 512
      %v1790 = vld [vmem:[%s1789] sm:$0xf]
      %v1791 = vld [vmem:[%s1789 + $0x4] sm:$0xf]
      %v1792 = vld [vmem:[%s1789 + $0x8] sm:$0xf]
      %v1793 = vld [vmem:[%s1789 + $0xc] sm:$0xf]
      %v1794 = vld [vmem:[%s1789 + $0x10] sm:$0xf]
      %v1795 = vld [vmem:[%s1789 + $0x14] sm:$0xf]
      %v1796 = vld [vmem:[%s1789 + $0x18] sm:$0xf]
      %v1797 = vld [vmem:[%s1789 + $0x1c] sm:$0xf]
      %v1798 = vld [vmem:[%s1789 + $0x20] sm:$0xf]
      %v1799 = vld [vmem:[%s1789 + $0x24] sm:$0xf]
      %v1800 = vld [vmem:[%s1789 + $0x28] sm:$0xf]
      %v1801 = vld [vmem:[%s1789 + $0x2c] sm:$0xf]
      %v1802 = vld [vmem:[%s1789 + $0x30] sm:$0xf]
      %v1803 = vld [vmem:[%s1789 + $0x34] sm:$0xf]
      %v1804 = vld [vmem:[%s1789 + $0x38] sm:$0xf]
      %v1805 = vld [vmem:[%s1789 + $0x3c] sm:$0xf]
      %v1806 = vunpack.c.l.b16 %v1690
      %v1807 = vunpack.c.l.b16 %v1704
      %v1808 = vunpack.c.l.b16 %v1718
      %v1809 = vunpack.c.l.b16 %v1732
      %v1810 = vunpack.c.l.b16 %v1746
      %v1811 = vunpack.c.l.b16 %v1760
      %v1812 = vunpack.c.l.b16 %v1774
      %v1813 = vunpack.c.l.b16 %v1788
      %v1814 = vpack.c.b16 %v1807, %v1806
      %v1815 = vpack.c.b16 %v1809, %v1808
      %v1816 = vpack.c.b16 %v1811, %v1810
      %v1817 = vpack.c.b16 %v1813, %v1812
      %v1838 = vunpack.c.l.b16 %v1790
      %v1839 = vunpack.c.l.b16 %v1791
      %v1840 = vunpack.c.l.b16 %v1792
      %v1841 = vunpack.c.l.b16 %v1793
      %v1842 = vunpack.c.l.b16 %v1794
      %v1843 = vunpack.c.l.b16 %v1795
      %v1844 = vunpack.c.l.b16 %v1796
      %v1845 = vunpack.c.l.b16 %v1797
      %v1846 = vunpack.c.l.b16 %v1798
      %v1847 = vunpack.c.l.b16 %v1799
      %v1848 = vunpack.c.l.b16 %v1800
      %v1849 = vunpack.c.l.b16 %v1801
      %v1850 = vunpack.c.l.b16 %v1802
      %v1851 = vunpack.c.l.b16 %v1803
      %v1852 = vunpack.c.l.b16 %v1804
      %v1853 = vunpack.c.l.b16 %v1805
      %v1854 = vpack.c.b16 %v1839, %v1838
      %v1855 = vpack.c.b16 %v1841, %v1840
      %v1856 = vpack.c.b16 %v1843, %v1842
      %v1857 = vpack.c.b16 %v1845, %v1844
      %v1858 = vpack.c.b16 %v1847, %v1846
      %v1859 = vpack.c.b16 %v1849, %v1848
      %v1860 = vpack.c.b16 %v1851, %v1850
      %v1861 = vpack.c.b16 %v1853, %v1852
      %1870 = vmatpush.bf16.msra.mxu0 %v1861
      %1871 = vmatpush.bf16.msra.mxu0 %v1860
      %1872 = vmatpush.bf16.msra.mxu0 %v1859
      %1873 = vmatpush.bf16.msra.mxu0 %v1858
      %1874 = vmatpush.bf16.msra.mxu0 %v1857
      %1875 = vmatpush.bf16.msra.mxu0 %v1856
      %1876 = vmatpush.bf16.msra.mxu0 %v1855
      %1877 = vmatpush.bf16.msra.mxu0 %v1854
      %1878 = vmatmul.bf16.gmra.mxu0 %v1814
      %v1879 = vpop.f32.mrf.mxu0
      %v1880 = vadd.f32 0.0, %v1879
      %v1881 = vpop.f32.mrf.mxu0
      %v1882 = vadd.f32 0.0, %v1881
      %1883 = vmatmul.bf16.gmra.mxu0 %v1815
      %v1884 = vpop.f32.mrf.mxu0
      %v1885 = vadd.f32 0.0, %v1884
      %v1886 = vpop.f32.mrf.mxu0
      %v1887 = vadd.f32 0.0, %v1886
      %1888 = vmatmul.bf16.gmra.mxu0 %v1816
      %v1889 = vpop.f32.mrf.mxu0
      %v1890 = vadd.f32 0.0, %v1889
      %v1891 = vpop.f32.mrf.mxu0
      %v1892 = vadd.f32 0.0, %v1891
      %1893 = vmatmul.bf16.gmra.mxu0 %v1817
      %v1894 = vpop.f32.mrf.mxu0
      %v1895 = vadd.f32 0.0, %v1894
      %v1896 = vpop.f32.mrf.mxu0
      %v1897 = vadd.f32 0.0, %v1896
      %1898 = vdwg.mxu0
      %v1899 = vadd.f32 %v1653, %v1880
      %v1900 = vadd.f32 %v1654, %v1882
      %v1901 = vadd.f32 %v1655, %v1885
      %v1902 = vadd.f32 %v1656, %v1887
      %v1903 = vadd.f32 %v1657, %v1890
      %v1904 = vadd.f32 %v1658, %v1892
      %v1905 = vadd.f32 %v1659, %v1895
      %v1906 = vadd.f32 %v1660, %v1897
      %v1907 = vadd.f32 %v1899, %v1900
      %v1908 = vadd.f32 %v1907, %v1901
      %v1909 = vadd.f32 %v1908, %v1902
      %v1910 = vadd.f32 %v1909, %v1903
      %v1911 = vadd.f32 %v1910, %v1904
      %v1912 = vadd.f32 %v1911, %v1905
      %v1913 = vadd.f32 %v1912, %v1906
      %v1914 = vrot.slane %v1913, 4
      %v1915 = vadd.f32 %v1913, %v1914
      %v1916 = vrot.slane %v1915, 2
      %v1917 = vadd.f32 %v1915, %v1916
      %v1918 = vrot.slane %v1917, 1
      %v1919 = vadd.f32 %v1917, %v1918
      %1920 = vst [vmem:[%s354] sm:$0x1] %v1919
      %v1921 = vmul.f32 %v1899, %v1899
      %v1922 = vmul.f32 %v1900, %v1900
      %v1923 = vmul.f32 %v1901, %v1901
      %v1924 = vmul.f32 %v1902, %v1902
      %v1925 = vmul.f32 %v1903, %v1903
      %v1926 = vmul.f32 %v1904, %v1904
      %v1927 = vmul.f32 %v1905, %v1905
      %v1928 = vmul.f32 %v1906, %v1906
      %v1929 = vadd.f32 %v1921, %v1922
      %v1930 = vadd.f32 %v1929, %v1923
      %v1931 = vadd.f32 %v1930, %v1924
      %v1932 = vadd.f32 %v1931, %v1925
      %v1933 = vadd.f32 %v1932, %v1926
      %v1934 = vadd.f32 %v1933, %v1927
      %v1935 = vadd.f32 %v1934, %v1928
      %v1936 = vrot.slane %v1935, 4
      %v1937 = vadd.f32 %v1935, %v1936
      %v1938 = vrot.slane %v1937, 2
      %v1939 = vadd.f32 %v1937, %v1938
      %v1940 = vrot.slane %v1939, 1
      %v1941 = vadd.f32 %v1939, %v1940
      %1942 = vst [vmem:[%s354 + $0x1] sm:$0x1] %v1941
      %v1943 = vpack.c.bf16 %v1899, %v1899
      %v1944 = vpack.c.bf16 %v1900, %v1900
      %v1945 = vpack.c.bf16 %v1901, %v1901
      %v1946 = vpack.c.bf16 %v1902, %v1902
      %v1947 = vpack.c.bf16 %v1903, %v1903
      %v1948 = vpack.c.bf16 %v1904, %v1904
      %v1949 = vpack.c.bf16 %v1905, %v1905
      %v1950 = vpack.c.bf16 %v1906, %v1906
      %1951 = vst [vmem:[%s330] sm:$0xf] %v1943
      %1952 = vst [vmem:[%s330 + $0x4] sm:$0xf] %v1944
      %1953 = vst [vmem:[%s330 + $0x8] sm:$0xf] %v1945
      %1954 = vst [vmem:[%s330 + $0xc] sm:$0xf] %v1946
      %1955 = vst [vmem:[%s330 + $0x10] sm:$0xf] %v1947
      %1956 = vst [vmem:[%s330 + $0x14] sm:$0xf] %v1948
      %1957 = vst [vmem:[%s330 + $0x18] sm:$0xf] %v1949
      %1958 = vst [vmem:[%s330 + $0x1c] sm:$0xf] %v1950
      %v1959 = vld [vmem:[%s318] sm:$0xf]
      %v1960 = vld [vmem:[%s318 + $0x4] sm:$0xf]
      %v1961 = vld [vmem:[%s318 + $0x8] sm:$0xf]
      %v1962 = vld [vmem:[%s318 + $0xc] sm:$0xf]
      %v1963 = vld [vmem:[%s318 + $0x10] sm:$0xf]
      %v1964 = vld [vmem:[%s318 + $0x14] sm:$0xf]
      %v1965 = vld [vmem:[%s318 + $0x18] sm:$0xf]
      %v1966 = vld [vmem:[%s318 + $0x1c] sm:$0xf]
      %v1967 = vld [vmem:[%s318 + $0x20] sm:$0xf]
      %v1968 = vld [vmem:[%s318 + $0x24] sm:$0xf]
      %v1969 = vld [vmem:[%s318 + $0x28] sm:$0xf]
      %v1970 = vld [vmem:[%s318 + $0x2c] sm:$0xf]
      %v1971 = vld [vmem:[%s318 + $0x30] sm:$0xf]
      %v1972 = vld [vmem:[%s318 + $0x34] sm:$0xf]
      %v1973 = vld [vmem:[%s318 + $0x38] sm:$0xf]
      %v1974 = vld [vmem:[%s318 + $0x3c] sm:$0xf]
      %v1991 = vunpack.c.l.b16 %v1959
      %v1992 = vunpack.c.l.b16 %v1960
      %v1993 = vunpack.c.l.b16 %v1961
      %v1994 = vunpack.c.l.b16 %v1962
      %v1995 = vunpack.c.l.b16 %v1963
      %v1996 = vunpack.c.l.b16 %v1964
      %v1997 = vunpack.c.l.b16 %v1965
      %v1998 = vunpack.c.l.b16 %v1966
      %v1999 = vunpack.c.l.b16 %v1967
      %v2000 = vunpack.c.l.b16 %v1968
      %v2001 = vunpack.c.l.b16 %v1969
      %v2002 = vunpack.c.l.b16 %v1970
      %v2003 = vunpack.c.l.b16 %v1971
      %v2004 = vunpack.c.l.b16 %v1972
      %v2005 = vunpack.c.l.b16 %v1973
      %v2006 = vunpack.c.l.b16 %v1974
      %v2007 = vpack.c.b16 %v1992, %v1991
      %v2008 = vpack.c.b16 %v1994, %v1993
      %v2009 = vpack.c.b16 %v1996, %v1995
      %v2010 = vpack.c.b16 %v1998, %v1997
      %v2011 = vpack.c.b16 %v2000, %v1999
      %v2012 = vpack.c.b16 %v2002, %v2001
      %v2013 = vpack.c.b16 %v2004, %v2003
      %v2014 = vpack.c.b16 %v2006, %v2005
      %2023 = vmatpush.bf16.msra.mxu0 %v2014
      %2024 = vmatpush.bf16.msra.mxu0 %v2013
      %2025 = vmatpush.bf16.msra.mxu0 %v2012
      %2026 = vmatpush.bf16.msra.mxu0 %v2011
      %2027 = vmatpush.bf16.msra.mxu0 %v2010
      %2028 = vmatpush.bf16.msra.mxu0 %v2009
      %2029 = vmatpush.bf16.msra.mxu0 %v2008
      %2030 = vmatpush.bf16.msra.mxu0 %v2007
      %2031 = vmatmul.bf16.gmra.mxu0 %v1046
      %v2032 = vpop.f32.mrf.mxu0
      %v2033 = vadd.f32 0.0, %v2032
      %v2034 = vpop.f32.mrf.mxu0
      %v2035 = vadd.f32 0.0, %v2034
      %2036 = vmatmul.bf16.gmra.mxu0 %v1047
      %v2037 = vpop.f32.mrf.mxu0
      %v2038 = vadd.f32 0.0, %v2037
      %v2039 = vpop.f32.mrf.mxu0
      %v2040 = vadd.f32 0.0, %v2039
      %2041 = vmatmul.bf16.gmra.mxu0 %v1048
      %v2042 = vpop.f32.mrf.mxu0
      %v2043 = vadd.f32 0.0, %v2042
      %v2044 = vpop.f32.mrf.mxu0
      %v2045 = vadd.f32 0.0, %v2044
      %2046 = vmatmul.bf16.gmra.mxu0 %v1049
      %v2047 = vpop.f32.mrf.mxu0
      %v2048 = vadd.f32 0.0, %v2047
      %v2049 = vpop.f32.mrf.mxu0
      %v2050 = vadd.f32 0.0, %v2049
      %2051 = vdwg.mxu0
      %v2052 = vpack.c.bf16 %v2033, %v2033
      %v2053 = vpack.c.bf16 %v2035, %v2035
      %v2054 = vpack.c.bf16 %v2038, %v2038
      %v2055 = vpack.c.bf16 %v2040, %v2040
      %v2056 = vpack.c.bf16 %v2043, %v2043
      %v2057 = vpack.c.bf16 %v2045, %v2045
      %v2058 = vpack.c.bf16 %v2048, %v2048
      %v2059 = vpack.c.bf16 %v2050, %v2050
      %2060 = vst [vmem:[%s343] sm:$0xf] %v2052
      %2061 = vst [vmem:[%s343 + $0x4] sm:$0xf] %v2053
      %2062 = vst [vmem:[%s343 + $0x8] sm:$0xf] %v2054
      %2063 = vst [vmem:[%s343 + $0xc] sm:$0xf] %v2055
      %2064 = vst [vmem:[%s343 + $0x10] sm:$0xf] %v2056
      %2065 = vst [vmem:[%s343 + $0x14] sm:$0xf] %v2057
      %2066 = vst [vmem:[%s343 + $0x18] sm:$0xf] %v2058
      %2067 = vst [vmem:[%s343 + $0x1c] sm:$0xf] %v2059
      %s2068 = smul.u32 8, %s24
      %p2069 = scmp.lt.s32.totalorder %s22, 1
      %s2070 = scalar_select %p2069, %s22, 1
      %p2071 = scmp.lt.s32.totalorder %s2068, 7
      %s2072 = scalar_select %p2071, %s2068, 7
      %p2073 = scmp.lt.s32.totalorder %s23, 0
      %s2074 = scalar_select %p2073, %s23, 0
      %s2075 = sadd.s32 %s2074, %s2072
      %s2076 = smul.addr %s2070, 8
      %s2077 = sadd.s32 %s2075, %s2076
      %s2078 = smul.addr %s2077, 4
      %s2079 = scalar_lea.vmem %s3, %s2078
      %s2080 = smul.u32 8, %s24
      %p2081 = scmp.lt.s32.totalorder %s22, 1
      %s2082 = scalar_select %p2081, %s22, 1
      %p2083 = scmp.lt.s32.totalorder %s2080, 7
      %s2084 = scalar_select %p2083, %s2080, 7
      %p2085 = scmp.lt.s32.totalorder %s23, 0
      %s2086 = scalar_select %p2085, %s23, 0
      %s2087 = sadd.s32 %s2086, %s2084
      %s2088 = smul.addr %s2082, 8
      %s2089 = sadd.s32 %s2087, %s2088
      %s2090 = smul.addr %s2089, 4
      %s2091 = scalar_lea.vmem %s4, %s2090
      %p2092 = scmp.lt.s32.totalorder %s22, 1
      %s2093 = scalar_select %p2092, %s22, 1
      %p2094 = scmp.lt.s32.totalorder %s24, 0
      %s2095 = scalar_select %p2094, %s24, 0
      %p2096 = scmp.lt.s32.totalorder %s23, 0
      %s2097 = scalar_select %p2096, %s23, 0
      %s2098 = sadd.s32 %s2097, %s2095
      %s2099 = sadd.s32 %s2098, %s2093
      %s2100 = smul.addr %s2099, 2
      %s2101 = scalar_lea.vmem %s5, %s2100
      // Predicated region
      $region33: #{basic_block_forward.4} parent=31 // pred_check
        %p2102 = pneg %p136
      $region34: #{basic_block_forward.4} parent=31 // pred_check_branch
        %2104 = sbr.rel (%p2102) target = $region36
      $region35: #{basic_block_forward.4} parent=31 // pred_region
        %s2105 = smul.u32 8, %s24
      $region36: #{basic_block_forward.4} parent=31 // pred_fallthru
        _
      // Predicated region
      $region37: #{basic_block_forward.4} parent=31 // pred_check
        %p2106 = pneg %p166
      $region38: #{basic_block_forward.4} parent=31 // pred_check_branch
        %2108 = sbr.rel (%p2106) target = $region40
      $region39: #{basic_block_forward.4} parent=31 // pred_region
        %s2109 = smul.u32 8, %s24
      $region40: #{basic_block_forward.4} parent=31 // pred_fallthru
        _
      // Predicated region
      $region41: #{basic_block_forward.4} parent=31 // pred_check
        %p2110 = pneg %p196
      $region42: #{basic_block_forward.4} parent=31 // pred_check_branch
        %2112 = sbr.rel (%p2110) target = $region44
      $region43: #{basic_block_forward.4} parent=31 // pred_region
        _
      $region44: #{basic_block_forward.4} parent=31 // pred_fallthru
        _
    $region32: #{basic_block_forward.4} parent=5 // pred_fallthru
      _
    %p2113 = scmp.le.s32.totalorder 2, %s12
    // Predicated region
    $region45: #{basic_block_forward.4} parent=5 // pred_check
      %p2114 = pneg %p2113
    $region46: #{basic_block_forward.4} parent=5 // pred_check_branch
      %2116 = sbr.rel (%p2114) target = $region48
    $region47: #{basic_block_forward.4} parent=5 // pred_region
      %s2117 = ssub.s32 %s12, 2
      // Predicated region
      $region49: #{basic_block_forward.4} parent=47 // pred_check
        %p2118 = pneg %p142
      $region50: #{basic_block_forward.4} parent=47 // pred_check_branch
        %2120 = sbr.rel (%p2118) target = $region52
      $region51: #{basic_block_forward.4} parent=47 // pred_region
        %s2121 = smul.u32 8, %s27
        %p2122 = scmp.lt.s32.totalorder %s25, 1
        %s2123 = scalar_select %p2122, %s25, 1
        %p2124 = scmp.lt.s32.totalorder %s2121, 7
        %s2125 = scalar_select %p2124, %s2121, 7
        %p2126 = scmp.lt.s32.totalorder %s26, 0
        %s2127 = scalar_select %p2126, %s26, 0
        %s2128 = sadd.s32 %s2127, %s2125
        %s2129 = smul.addr %s2123, 8
        %s2130 = sadd.s32 %s2128, %s2129
        %s2131 = smul.addr %s2130, 4
        %s2132 = scalar_lea.vmem %s3, %s2131
      $region52: #{basic_block_forward.4} parent=47 // pred_fallthru
        _
      // Predicated region
      $region53: #{basic_block_forward.4} parent=47 // pred_check
        %p2133 = pneg %p172
      $region54: #{basic_block_forward.4} parent=47 // pred_check_branch
        %2135 = sbr.rel (%p2133) target = $region56
      $region55: #{basic_block_forward.4} parent=47 // pred_region
        %s2136 = smul.u32 8, %s27
        %p2137 = scmp.lt.s32.totalorder %s25, 1
        %s2138 = scalar_select %p2137, %s25, 1
        %p2139 = scmp.lt.s32.totalorder %s2136, 7
        %s2140 = scalar_select %p2139, %s2136, 7
        %p2141 = scmp.lt.s32.totalorder %s26, 0
        %s2142 = scalar_select %p2141, %s26, 0
        %s2143 = sadd.s32 %s2142, %s2140
        %s2144 = smul.addr %s2138, 8
        %s2145 = sadd.s32 %s2143, %s2144
        %s2146 = smul.addr %s2145, 4
        %s2147 = scalar_lea.vmem %s4, %s2146
      $region56: #{basic_block_forward.4} parent=47 // pred_fallthru
        _
      // Predicated region
      $region57: #{basic_block_forward.4} parent=47 // pred_check
        %p2148 = pneg %p202
      $region58: #{basic_block_forward.4} parent=47 // pred_check_branch
        %2150 = sbr.rel (%p2148) target = $region60
      $region59: #{basic_block_forward.4} parent=47 // pred_region
        %p2151 = scmp.lt.s32.totalorder %s25, 1
        %s2152 = scalar_select %p2151, %s25, 1
        %p2153 = scmp.lt.s32.totalorder %s27, 0
        %s2154 = scalar_select %p2153, %s27, 0
        %p2155 = scmp.lt.s32.totalorder %s26, 0
        %s2156 = scalar_select %p2155, %s26, 0
        %s2157 = sadd.s32 %s2156, %s2154
        %s2158 = sadd.s32 %s2157, %s2152
        %s2159 = smul.addr %s2158, 2
        %s2160 = scalar_lea.vmem %s5, %s2159
      $region60: #{basic_block_forward.4} parent=47 // pred_fallthru
        _
    $region48: #{basic_block_forward.4} parent=5 // pred_fallthru
      _
  $region6: #{basic_block_forward.4} parent=0 // loop_footer
    %s16 = sadd.s32 1, %s12
  $region7: #{basic_block_forward.4} parent=0 // loop_footer_branch
    %11 = sbr.rel target = $region3
  $region8: #{basic_block_forward.4} parent=0 // loop_exit
    _

// kernel: basic_block_forward.6
$region0: #{basic_block_forward.6}
  #allocation0 [shape = 'u32[]', space=smem, size = 0x4, offset = 0x4, fixed_abs, tag = 'smem constant byte address 0x4 - core index']
  #allocation1 [shape = 'u32[72,128]{1,0:T(1,128)}', space=vmem, size = 0x9000, scoped, tag = 'internal scratch']
  %s0 = inlined_call_operand.vmem [shape: bf16[2,10,10,128], index: 0, kind: input, shape index: {}]
  %s1 = inlined_call_operand.vmem [shape: bf16[9,128,128], index: 1, kind: input, shape index: {}]
  %s2 = inlined_call_operand.vmem [shape: bf16[2,8,8,128], index: 2, kind: input, shape index: {}]
  %s3 = inlined_call_operand.vmem [shape: bf16[2,8,8,128], index: 3, kind: output, shape index: {0}]
  %s4 = inlined_call_operand.vmem [shape: f32[2,1,2,128], index: 4, kind: output, shape index: {1}]
  %5 = xla_tuple %s3, %s4
  %s6 = sld [smem:[#allocation0]]
  $region53: #{basic_block_forward.6} parent=0
    _
  %s8 = ssub.s32 1, %s6
  %s9 = scalar_select 0, %s8, %s6
  loop: start=0, step=1, limit=4
  $region2: #{basic_block_forward.6} parent=0 // loop_pre_header
    _
  $region3: #{basic_block_forward.6} parent=0 // loop_header
    %s11 = sphi 0, %s15
    %p12 = scmp.ge.s32.totalorder %s11, 4
    %s18 = sphi 0, %s37
    %s19 = sphi 0, %s33
    %s20 = sphi 0, %s29
    %s21 = sphi 0, %s18
    %s22 = sphi 0, %s19
    %s23 = sphi 0, %s20
    %s24 = sphi 0, %s21
    %s25 = sphi 0, %s22
    %s26 = sphi 0, %s23
    %s40 = sphi 0, %s42
    %s43 = sphi 0, %s40
    %s44 = sphi 0, %s43
    %s60 = sphi 0, %s44
    %s66 = sphi 0, %s68
    %s69 = sphi 0, %s66
    %s70 = sphi 0, %s69
    %s86 = sphi 0, %s70
    %s96 = sphi 0, %s98
    %s99 = sphi 0, %s96
    %s100 = sphi 0, %s99
    %s116 = sphi 0, %s100
    %s126 = sphi 0, %s128
    %s129 = sphi 0, %s126
    %s130 = sphi 0, %s129
    %s146 = sphi 0, %s130
    %s156 = sphi 0, %s158
    %s159 = sphi 0, %s156
    %s160 = sphi 0, %s159
    %s176 = sphi 0, %s160
  $region4: #{basic_block_forward.6} parent=0 // loop_header_branch
    %14 = sbr.rel (%p12) target = $region8
  $region5: #{basic_block_forward.6} parent=0 // loop_body
    %s16 = ssub.s32 %s11, 1
    %s17 = ssub.s32 %s11, 2
    %s27 = sadd.s32 1, %s20
    %p28 = scmp.ge.s32.totalorder %s27, 1
    %s29 = scalar_select %p28, 0, %s27
    %s30 = sadd.s32 1, %s19
    %s31 = scalar_select %p28, %s30, %s19
    %p32 = scmp.ge.s32.totalorder %s31, 1
    %s33 = scalar_select %p32, 0, %s31
    %s34 = sadd.s32 1, %s18
    %s35 = scalar_select %p32, %s34, %s18
    %p36 = scmp.ge.s32.totalorder %s35, 2
    %s37 = scalar_select %p36, 0, %s35
    %s38 = ssub.s32 %s18, %s37
    %p39 = scmp.eq.s32.totalorder %s38, 0
    %s41 = sadd.s32 %s40, 1
    %s42 = scalar_select %p39, %s40, %s41
    %p45 = pneg %p39
    %p46 = scmp.eq.s32.totalorder %s11, 1
    %p47 = por %p45, %p46
    %p48 = scmp.ne.s32.totalorder %s40, %s43
    %p49 = scmp.eq.s32.totalorder %s11, 0
    %p50 = por %p48, %p49
    %p51 = scmp.ne.s32.totalorder %s40, %s43
    %p52 = scmp.eq.s32.totalorder %s16, 1
    %p53 = por %p51, %p52
    %p54 = scmp.ne.s32.totalorder %s43, %s44
    %p55 = scmp.eq.s32.totalorder %s16, 0
    %p56 = por %p54, %p55
    %p57 = scmp.ne.s32.totalorder %s43, %s44
    %p58 = scmp.eq.s32.totalorder %s17, 1
    %p59 = por %p57, %p58
    %p61 = scmp.ne.s32.totalorder %s44, %s60
    %p62 = scmp.eq.s32.totalorder %s17, 0
    %p63 = por %p61, %p62
    %s64 = ssub.s32 %s19, %s33
    %p65 = scmp.eq.s32.totalorder %s64, 0
    %s67 = sadd.s32 %s66, 1
    %s68 = scalar_select %p65, %s66, %s67
    %p71 = pneg %p65
    %p72 = scmp.eq.s32.totalorder %s11, 1
    %p73 = por %p71, %p72
    %p74 = scmp.ne.s32.totalorder %s66, %s69
    %p75 = scmp.eq.s32.totalorder %s11, 0
    %p76 = por %p74, %p75
    %p77 = scmp.ne.s32.totalorder %s66, %s69
    %p78 = scmp.eq.s32.totalorder %s16, 1
    %p79 = por %p77, %p78
    %p80 = scmp.ne.s32.totalorder %s69, %s70
    %p81 = scmp.eq.s32.totalorder %s16, 0
    %p82 = por %p80, %p81
    %p83 = scmp.ne.s32.totalorder %s69, %s70
    %p84 = scmp.eq.s32.totalorder %s17, 1
    %p85 = por %p83, %p84
    %p87 = scmp.ne.s32.totalorder %s70, %s86
    %p88 = scmp.eq.s32.totalorder %s17, 0
    %p89 = por %p87, %p88
    %s90 = ssub.s32 %s18, %s37
    %s91 = ssub.s32 %s20, %s29
    %s92 = sor.u32 %s90, %s91
    %s93 = ssub.s32 %s19, %s33
    %s94 = sor.u32 %s92, %s93
    %p95 = scmp.eq.s32.totalorder %s94, 0
    %s97 = sadd.s32 %s96, 1
    %s98 = scalar_select %p95, %s96, %s97
    %p101 = pneg %p95
    %p102 = scmp.eq.s32.totalorder %s11, 1
    %p103 = por %p101, %p102
    %p104 = scmp.ne.s32.totalorder %s96, %s99
    %p105 = scmp.eq.s32.totalorder %s11, 0
    %p106 = por %p104, %p105
    %p107 = scmp.ne.s32.totalorder %s96, %s99
    %p108 = scmp.eq.s32.totalorder %s16, 1
    %p109 = por %p107, %p108
    %p110 = scmp.ne.s32.totalorder %s99, %s100
    %p111 = scmp.eq.s32.totalorder %s16, 0
    %p112 = por %p110, %p111
    %p113 = scmp.ne.s32.totalorder %s99, %s100
    %p114 = scmp.eq.s32.totalorder %s17, 1
    %p115 = por %p113, %p114
    %p117 = scmp.ne.s32.totalorder %s100, %s116
    %p118 = scmp.eq.s32.totalorder %s17, 0
    %p119 = por %p117, %p118
    %s120 = ssub.s32 %s18, %s37
    %s121 = ssub.s32 %s20, %s29
    %s122 = sor.u32 %s120, %s121
    %s123 = ssub.s32 %s19, %s33
    %s124 = sor.u32 %s122, %s123
    %p125 = scmp.eq.s32.totalorder %s124, 0
    %s127 = sadd.s32 %s126, 1
    %s128 = scalar_select %p125, %s126, %s127
    %p131 = pneg %p125
    %p132 = scmp.eq.s32.totalorder %s11, 1
    %p133 = por %p131, %p132
    %p134 = scmp.ne.s32.totalorder %s126, %s129
    %p135 = scmp.eq.s32.totalorder %s11, 0
    %p136 = por %p134, %p135
    %p137 = scmp.ne.s32.totalorder %s126, %s129
    %p138 = scmp.eq.s32.totalorder %s16, 1
    %p139 = por %p137, %p138
    %p140 = scmp.ne.s32.totalorder %s129, %s130
    %p141 = scmp.eq.s32.totalorder %s16, 0
    %p142 = por %p140, %p141
    %p143 = scmp.ne.s32.totalorder %s129, %s130
    %p144 = scmp.eq.s32.totalorder %s17, 1
    %p145 = por %p143, %p144
    %p147 = scmp.ne.s32.totalorder %s130, %s146
    %p148 = scmp.eq.s32.totalorder %s17, 0
    %p149 = por %p147, %p148
    %s150 = ssub.s32 %s18, %s37
    %s151 = ssub.s32 %s20, %s29
    %s152 = sor.u32 %s150, %s151
    %s153 = ssub.s32 %s19, %s33
    %s154 = sor.u32 %s152, %s153
    %p155 = scmp.eq.s32.totalorder %s154, 0
    %s157 = sadd.s32 %s156, 1
    %s158 = scalar_select %p155, %s156, %s157
    %p161 = pneg %p155
    %p162 = scmp.eq.s32.totalorder %s11, 1
    %p163 = por %p161, %p162
    %p164 = scmp.ne.s32.totalorder %s156, %s159
    %p165 = scmp.eq.s32.totalorder %s11, 0
    %p166 = por %p164, %p165
    %p167 = scmp.ne.s32.totalorder %s156, %s159
    %p168 = scmp.eq.s32.totalorder %s16, 1
    %p169 = por %p167, %p168
    %p170 = scmp.ne.s32.totalorder %s159, %s160
    %p171 = scmp.eq.s32.totalorder %s16, 0
    %p172 = por %p170, %p171
    %p173 = scmp.ne.s32.totalorder %s159, %s160
    %p174 = scmp.eq.s32.totalorder %s17, 1
    %p175 = por %p173, %p174
    %p177 = scmp.ne.s32.totalorder %s160, %s176
    %p178 = scmp.eq.s32.totalorder %s17, 0
    %p179 = por %p177, %p178
    %p180 = scmp.le.s32.totalorder 1, %s11
    %p181 = scmp.lt.s32.totalorder %s11, 3
    %p182 = pnand %p180, %p181
    %p183 = pneg %p182
    // Predicated region
    $region9: #{basic_block_forward.6} parent=5 // pred_check
      _
    $region10: #{basic_block_forward.6} parent=5 // pred_check_branch
      %185 = sbr.rel (%p182) target = $region12
    $region11: #{basic_block_forward.6} parent=5 // pred_region
      %s186 = ssub.s32 %s11, 1
      // Predicated region
      $region13: #{basic_block_forward.6} parent=11 // pred_check
        %p187 = pneg %p82
      $region14: #{basic_block_forward.6} parent=11 // pred_check_branch
        %189 = sbr.rel (%p187) target = $region16
      $region15: #{basic_block_forward.6} parent=11 // pred_region
        %p190 = scmp.lt.s32.totalorder %s22, 0
        %s191 = scalar_select %p190, %s22, 0
        %s192 = smul.addr %s191, 4
        %s193 = scalar_lea.vmem %s1, %s192
      $region16: #{basic_block_forward.6} parent=11 // pred_fallthru
        _
    $region12: #{basic_block_forward.6} parent=5 // pred_fallthru
      _
    %p194 = scmp.lt.s32.totalorder %s11, 2
    // Predicated region
    $region17: #{basic_block_forward.6} parent=5 // pred_check
      %p195 = pneg %p194
    $region18: #{basic_block_forward.6} parent=5 // pred_check_branch
      %197 = sbr.rel (%p195) target = $region20
    $region19: #{basic_block_forward.6} parent=5 // pred_region
      // Predicated region
      $region21: #{basic_block_forward.6} parent=19 // pred_check
        %p198 = pneg %p50
      $region22: #{basic_block_forward.6} parent=19 // pred_check_branch
        %200 = sbr.rel (%p198) target = $region24
      $region23: #{basic_block_forward.6} parent=19 // pred_region
        %p201 = scmp.lt.s32.totalorder %s18, 1
        %s202 = scalar_select %p201, %s18, 1
        %s203 = smul.addr %s202, 20
        %s204 = smul.addr %s203, 4
        %s205 = scalar_lea.vmem %s0, %s204
      $region24: #{basic_block_forward.6} parent=19 // pred_fallthru
        _
      // Predicated region
      $region25: #{basic_block_forward.6} parent=19 // pred_check
        %p206 = pneg %p106
      $region26: #{basic_block_forward.6} parent=19 // pred_check_branch
        %208 = sbr.rel (%p206) target = $region28
      $region27: #{basic_block_forward.6} parent=19 // pred_region
        %s209 = smul.u32 8, %s20
        %p210 = scmp.lt.s32.totalorder %s18, 1
        %s211 = scalar_select %p210, %s18, 1
        %p212 = scmp.lt.s32.totalorder %s209, 7
        %s213 = scalar_select %p212, %s209, 7
        %p214 = scmp.lt.s32.totalorder %s19, 0
        %s215 = scalar_select %p214, %s19, 0
        %s216 = sadd.s32 %s215, %s213
        %s217 = smul.addr %s211, 8
        %s218 = sadd.s32 %s216, %s217
        %s219 = smul.addr %s218, 4
        %s220 = scalar_lea.vmem %s2, %s219
        %s221 = smul.u32 8, %s20
      $region28: #{basic_block_forward.6} parent=19 // pred_fallthru
        _
    $region20: #{basic_block_forward.6} parent=5 // pred_fallthru
      _
    %p222 = scmp.le.s32.totalorder 1, %s11
    %p223 = scmp.lt.s32.totalorder %s11, 3
    %p224 = pnand %p222, %p223
    %p225 = pneg %p224
    // Predicated region
    $region29: #{basic_block_forward.6} parent=5 // pred_check
      _
    $region30: #{basic_block_forward.6} parent=5 // pred_check_branch
      %227 = sbr.rel (%p224) target = $region32
    $region31: #{basic_block_forward.6} parent=5 // pred_region
      %s228 = ssub.s32 %s11, 1
      %p229 = scmp.lt.s32.totalorder %s21, 1
      %s230 = scalar_select %p229, %s21, 1
      %s231 = smul.addr %s230, 20
      %s232 = smul.addr %s231, 4
      %s233 = scalar_lea.vmem %s0, %s232
      %p234 = pneg %p56
      %p235 = pneg %p53
      %p236 = scmp.lt.s32.totalorder %s22, 0
      %s237 = scalar_select %p236, %s22, 0
      %s238 = smul.addr %s237, 4
      %s239 = scalar_lea.vmem %s1, %s238
      %p240 = pneg %p82
      %p241 = pneg %p79
      %s242 = smul.u32 8, %s23
      %p243 = scmp.lt.s32.totalorder %s21, 1
      %s244 = scalar_select %p243, %s21, 1
      %p245 = scmp.lt.s32.totalorder %s242, 7
      %s246 = scalar_select %p245, %s242, 7
      %p247 = scmp.lt.s32.totalorder %s22, 0
      %s248 = scalar_select %p247, %s22, 0
      %s249 = sadd.s32 %s248, %s246
      %s250 = smul.addr %s244, 8
      %s251 = sadd.s32 %s249, %s250
      %s252 = smul.addr %s251, 4
      %s253 = scalar_lea.vmem %s2, %s252
      %p254 = pneg %p112
      %p255 = pneg %p109
      %p256 = pneg %p142
      %p257 = pneg %p139
      %s258 = smul.u32 8, %s23
      %p259 = scmp.lt.s32.totalorder %s21, 1
      %s260 = scalar_select %p259, %s21, 1
      %p261 = scmp.lt.s32.totalorder %s258, 7
      %s262 = scalar_select %p261, %s258, 7
      %p263 = scmp.lt.s32.totalorder %s22, 0
      %s264 = scalar_select %p263, %s22, 0
      %s265 = sadd.s32 %s264, %s262
      %s266 = smul.addr %s260, 8
      %s267 = sadd.s32 %s265, %s266
      %s268 = smul.addr %s267, 4
      %s269 = scalar_lea.vmem %s3, %s268
      %p270 = pneg %p172
      %p271 = pneg %p169
      %p272 = scmp.lt.s32.totalorder %s21, 1
      %s273 = scalar_select %p272, %s21, 1
      %p274 = scmp.lt.s32.totalorder %s23, 0
      %s275 = scalar_select %p274, %s23, 0
      %p276 = scmp.lt.s32.totalorder %s22, 0
      %s277 = scalar_select %p276, %s22, 0
      %s278 = sadd.s32 %s277, %s275
      %s279 = sadd.s32 %s278, %s273
      %s280 = smul.addr %s279, 2
      %s281 = scalar_lea.vmem %s4, %s280
      %p282 = scmp.lt.s32.totalorder %s21, 1
      %s283 = scalar_select %p282, %s21, 1
      %s284 = smul.addr %s283, 20
      %s285 = smul.addr %s284, 4
      %s286 = scalar_lea.vmem %s0, %s285
      %p287 = scmp.lt.s32.totalorder %s22, 0
      %s288 = scalar_select %p287, %s22, 0
      %s289 = smul.addr %s288, 4
      %s290 = scalar_lea.vmem %s1, %s289
      %s291 = smul.u32 8, %s23
      %p292 = scmp.lt.s32.totalorder %s21, 1
      %s293 = scalar_select %p292, %s21, 1
      %p294 = scmp.lt.s32.totalorder %s291, 7
      %s295 = scalar_select %p294, %s291, 7
      %p296 = scmp.lt.s32.totalorder %s22, 0
      %s297 = scalar_select %p296, %s22, 0
      %s298 = sadd.s32 %s297, %s295
      %s299 = smul.addr %s293, 8
      %s300 = sadd.s32 %s298, %s299
      %s301 = smul.addr %s300, 4
      %s302 = scalar_lea.vmem %s2, %s301
      %s303 = smul.u32 8, %s23
      %s304 = smul.u32 8, %s23
      %p305 = scmp.lt.s32.totalorder %s21, 1
      %s306 = scalar_select %p305, %s21, 1
      %p307 = scmp.lt.s32.totalorder %s304, 7
      %s308 = scalar_select %p307, %s304, 7
      %p309 = scmp.lt.s32.totalorder %s22, 0
      %s310 = scalar_select %p309, %s22, 0
      %s311 = sadd.s32 %s310, %s308
      %s312 = smul.addr %s306, 8
      %s313 = sadd.s32 %s311, %s312
      %s314 = smul.addr %s313, 4
      %s315 = scalar_lea.vmem %s3, %s314
      %s316 = smul.u32 8, %s23
      %p317 = scmp.lt.s32.totalorder %s21, 1
      %s318 = scalar_select %p317, %s21, 1
      %p319 = scmp.lt.s32.totalorder %s23, 0
      %s320 = scalar_select %p319, %s23, 0
      %p321 = scmp.lt.s32.totalorder %s22, 0
      %s322 = scalar_select %p321, %s22, 0
      %s323 = sadd.s32 %s322, %s320
      %s324 = sadd.s32 %s323, %s318
      %s325 = smul.addr %s324, 2
      %s326 = scalar_lea.vmem %s4, %s325
      %s327 = smul.u32 %s23, 8
      %s328 = smul.u32 %s327, 2
      %s329 = smul.addr %s328, 4
      %s330 = scalar_lea.vmem %s286, %s329
      %v331 = vld [vmem:[%s330] sm:$0xf]
      %v332 = vld [vmem:[%s330 + $0x8] sm:$0xf]
      %v333 = vld [vmem:[%s330 + $0x10] sm:$0xf]
      %v334 = vld [vmem:[%s330 + $0x18] sm:$0xf]
      %v335 = vld [vmem:[%s330 + $0x20] sm:$0xf]
      %v336 = vld [vmem:[%s330 + $0x28] sm:$0xf]
      %v337 = vld [vmem:[%s330 + $0x30] sm:$0xf]
      %v338 = vld [vmem:[%s330 + $0x38] sm:$0xf]
      %v339 = vld [vmem:[%s290] sm:$0xf]
      %v340 = vld [vmem:[%s290 + $0x4] sm:$0xf]
      %v341 = vld [vmem:[%s290 + $0x8] sm:$0xf]
      %v342 = vld [vmem:[%s290 + $0xc] sm:$0xf]
      %v343 = vld [vmem:[%s290 + $0x10] sm:$0xf]
      %v344 = vld [vmem:[%s290 + $0x14] sm:$0xf]
      %v345 = vld [vmem:[%s290 + $0x18] sm:$0xf]
      %v346 = vld [vmem:[%s290 + $0x1c] sm:$0xf]
      %v347 = vld [vmem:[%s290 + $0x20] sm:$0xf]
      %v348 = vld [vmem:[%s290 + $0x24] sm:$0xf]
      %v349 = vld [vmem:[%s290 + $0x28] sm:$0xf]
      %v350 = vld [vmem:[%s290 + $0x2c] sm:$0xf]
      %v351 = vld [vmem:[%s290 + $0x30] sm:$0xf]
      %v352 = vld [vmem:[%s290 + $0x34] sm:$0xf]
      %v353 = vld [vmem:[%s290 + $0x38] sm:$0xf]
      %v354 = vld [vmem:[%s290 + $0x3c] sm:$0xf]
      %v355 = vld [vmem:[%s330 + $0x4] sm:$0x1]
      %v356 = vld [vmem:[%s330 + $0xc] sm:$0x1]
      %v357 = vld [vmem:[%s330 + $0x14] sm:$0x1]
      %v358 = vld [vmem:[%s330 + $0x1c] sm:$0x1]
      %v359 = vld [vmem:[%s330 + $0x24] sm:$0x1]
      %v360 = vld [vmem:[%s330 + $0x2c] sm:$0x1]
      %v361 = vld [vmem:[%s330 + $0x34] sm:$0x1]
      %v362 = vld [vmem:[%s330 + $0x3c] sm:$0x1]
      %vm363 = vsmask.f32 3328
      %vm364 = vsmask.f32 7440
      %vm365 = vmor %vm363, %vm364
      %v367 = vshrl.u32 %v331, 16
      %v369 = vrot.slane %v367, 4
      %v370 = vshll.u32 %v331, 16
      %v372 = vrot.slane %v370, 5
      %v373 = vor.u32 %v369, %v372
      %v374 = vrot.slane %v373, 4
      %v376 = vshll.u32 %v355, 16
      %v378 = vrot.slane %v376, 5
      %v379 = vsel %vm365, %v374, %v378
      %v381 = vshrl.u32 %v332, 16
      %v383 = vrot.slane %v381, 4
      %v384 = vshll.u32 %v332, 16
      %v386 = vrot.slane %v384, 5
      %v387 = vor.u32 %v383, %v386
      %v388 = vrot.slane %v387, 4
      %v390 = vshll.u32 %v356, 16
      %v392 = vrot.slane %v390, 5
      %v393 = vsel %vm365, %v388, %v392
      %v395 = vshrl.u32 %v333, 16
      %v397 = vrot.slane %v395, 4
      %v398 = vshll.u32 %v333, 16
      %v400 = vrot.slane %v398, 5
      %v401 = vor.u32 %v397, %v400
      %v402 = vrot.slane %v401, 4
      %v404 = vshll.u32 %v357, 16
      %v406 = vrot.slane %v404, 5
      %v407 = vsel %vm365, %v402, %v406
      %v409 = vshrl.u32 %v334, 16
      %v411 = vrot.slane %v409, 4
      %v412 = vshll.u32 %v334, 16
      %v414 = vrot.slane %v412, 5
      %v415 = vor.u32 %v411, %v414
      %v416 = vrot.slane %v415, 4
      %v418 = vshll.u32 %v358, 16
      %v420 = vrot.slane %v418, 5
      %v421 = vsel %vm365, %v416, %v420
      %v423 = vshrl.u32 %v335, 16
      %v425 = vrot.slane %v423, 4
      %v426 = vshll.u32 %v335, 16
      %v428 = vrot.slane %v426, 5
      %v429 = vor.u32 %v425, %v428
      %v430 = vrot.slane %v429, 4
      %v432 = vshll.u32 %v359, 16
      %v434 = vrot.slane %v432, 5
      %v435 = vsel %vm365, %v430, %v434
      %v437 = vshrl.u32 %v336, 16
      %v439 = vrot.slane %v437, 4
      %v440 = vshll.u32 %v336, 16
      %v442 = vrot.slane %v440, 5
      %v443 = vor.u32 %v439, %v442
      %v444 = vrot.slane %v443, 4
      %v446 = vshll.u32 %v360, 16
      %v448 = vrot.slane %v446, 5
      %v449 = vsel %vm365, %v444, %v448
      %v451 = vshrl.u32 %v337, 16
      %v453 = vrot.slane %v451, 4
      %v454 = vshll.u32 %v337, 16
      %v456 = vrot.slane %v454, 5
      %v457 = vor.u32 %v453, %v456
      %v458 = vrot.slane %v457, 4
      %v460 = vshll.u32 %v361, 16
      %v462 = vrot.slane %v460, 5
      %v463 = vsel %vm365, %v458, %v462
      %v465 = vshrl.u32 %v338, 16
      %v467 = vrot.slane %v465, 4
      %v468 = vshll.u32 %v338, 16
      %v470 = vrot.slane %v468, 5
      %v471 = vor.u32 %v467, %v470
      %v472 = vrot.slane %v471, 4
      %v474 = vshll.u32 %v362, 16
      %v476 = vrot.slane %v474, 5
      %v477 = vsel %vm365, %v472, %v476
      %s478 = scalar_lea.vmem %s290, 64
      %v479 = vld [vmem:[%s478] sm:$0xf]
      %v480 = vld [vmem:[%s478 + $0x4] sm:$0xf]
      %v481 = vld [vmem:[%s478 + $0x8] sm:$0xf]
      %v482 = vld [vmem:[%s478 + $0xc] sm:$0xf]
      %v483 = vld [vmem:[%s478 + $0x10] sm:$0xf]
      %v484 = vld [vmem:[%s478 + $0x14] sm:$0xf]
      %v485 = vld [vmem:[%s478 + $0x18] sm:$0xf]
      %v486 = vld [vmem:[%s478 + $0x1c] sm:$0xf]
      %v487 = vld [vmem:[%s478 + $0x20] sm:$0xf]
      %v488 = vld [vmem:[%s478 + $0x24] sm:$0xf]
      %v489 = vld [vmem:[%s478 + $0x28] sm:$0xf]
      %v490 = vld [vmem:[%s478 + $0x2c] sm:$0xf]
      %v491 = vld [vmem:[%s478 + $0x30] sm:$0xf]
      %v492 = vld [vmem:[%s478 + $0x34] sm:$0xf]
      %v493 = vld [vmem:[%s478 + $0x38] sm:$0xf]
      %v494 = vld [vmem:[%s478 + $0x3c] sm:$0xf]
      %v495 = vunpack.c.l.b16 %v379
      %v496 = vunpack.c.l.b16 %v393
      %v497 = vunpack.c.l.b16 %v407
      %v498 = vunpack.c.l.b16 %v421
      %v499 = vunpack.c.l.b16 %v435
      %v500 = vunpack.c.l.b16 %v449
      %v501 = vunpack.c.l.b16 %v463
      %v502 = vunpack.c.l.b16 %v477
      %v503 = vpack.c.b16 %v496, %v495
      %v504 = vpack.c.b16 %v498, %v497
      %v505 = vpack.c.b16 %v500, %v499
      %v506 = vpack.c.b16 %v502, %v501
      %v527 = vunpack.c.l.b16 %v479
      %v528 = vunpack.c.l.b16 %v480
      %v529 = vunpack.c.l.b16 %v481
      %v530 = vunpack.c.l.b16 %v482
      %v531 = vunpack.c.l.b16 %v483
      %v532 = vunpack.c.l.b16 %v484
      %v533 = vunpack.c.l.b16 %v485
      %v534 = vunpack.c.l.b16 %v486
      %v535 = vunpack.c.l.b16 %v487
      %v536 = vunpack.c.l.b16 %v488
      %v537 = vunpack.c.l.b16 %v489
      %v538 = vunpack.c.l.b16 %v490
      %v539 = vunpack.c.l.b16 %v491
      %v540 = vunpack.c.l.b16 %v492
      %v541 = vunpack.c.l.b16 %v493
      %v542 = vunpack.c.l.b16 %v494
      %v543 = vpack.c.b16 %v528, %v527
      %v544 = vpack.c.b16 %v530, %v529
      %v545 = vpack.c.b16 %v532, %v531
      %v546 = vpack.c.b16 %v534, %v533
      %v547 = vpack.c.b16 %v536, %v535
      %v548 = vpack.c.b16 %v538, %v537
      %v549 = vpack.c.b16 %v540, %v539
      %v550 = vpack.c.b16 %v542, %v541
      %559 = vmatpush.bf16.msra.mxu0 %v550
      %560 = vmatpush.bf16.msra.mxu0 %v549
      %561 = vmatpush.bf16.msra.mxu0 %v548
      %562 = vmatpush.bf16.msra.mxu0 %v547
      %563 = vmatpush.bf16.msra.mxu0 %v546
      %564 = vmatpush.bf16.msra.mxu0 %v545
      %565 = vmatpush.bf16.msra.mxu0 %v544
      %566 = vmatpush.bf16.msra.mxu0 %v543
      %567 = vmatmul.bf16.gmra.mxu0 %v503
      %v568 = vpop.f32.mrf.mxu0
      %v569 = vadd.f32 0.0, %v568
      %v570 = vpop.f32.mrf.mxu0
      %v571 = vadd.f32 0.0, %v570
      %572 = vmatmul.bf16.gmra.mxu0 %v504
      %v573 = vpop.f32.mrf.mxu0
      %v574 = vadd.f32 0.0, %v573
      %v575 = vpop.f32.mrf.mxu0
      %v576 = vadd.f32 0.0, %v575
      %577 = vmatmul.bf16.gmra.mxu0 %v505
      %v578 = vpop.f32.mrf.mxu0
      %v579 = vadd.f32 0.0, %v578
      %v580 = vpop.f32.mrf.mxu0
      %v581 = vadd.f32 0.0, %v580
      %582 = vmatmul.bf16.gmra.mxu0 %v506
      %v583 = vpop.f32.mrf.mxu0
      %v584 = vadd.f32 0.0, %v583
      %v585 = vpop.f32.mrf.mxu0
      %v586 = vadd.f32 0.0, %v585
      %587 = vdwg.mxu0
      %v596 = vunpack.c.l.b16 %v331
      %v597 = vunpack.c.l.b16 %v332
      %v598 = vunpack.c.l.b16 %v333
      %v599 = vunpack.c.l.b16 %v334
      %v600 = vunpack.c.l.b16 %v335
      %v601 = vunpack.c.l.b16 %v336
      %v602 = vunpack.c.l.b16 %v337
      %v603 = vunpack.c.l.b16 %v338
      %v604 = vpack.c.b16 %v597, %v596
      %v605 = vpack.c.b16 %v599, %v598
      %v606 = vpack.c.b16 %v601, %v600
      %v607 = vpack.c.b16 %v603, %v602
      %v628 = vunpack.c.l.b16 %v339
      %v629 = vunpack.c.l.b16 %v340
      %v630 = vunpack.c.l.b16 %v341
      %v631 = vunpack.c.l.b16 %v342
      %v632 = vunpack.c.l.b16 %v343
      %v633 = vunpack.c.l.b16 %v344
      %v634 = vunpack.c.l.b16 %v345
      %v635 = vunpack.c.l.b16 %v346
      %v636 = vunpack.c.l.b16 %v347
      %v637 = vunpack.c.l.b16 %v348
      %v638 = vunpack.c.l.b16 %v349
      %v639 = vunpack.c.l.b16 %v350
      %v640 = vunpack.c.l.b16 %v351
      %v641 = vunpack.c.l.b16 %v352
      %v642 = vunpack.c.l.b16 %v353
      %v643 = vunpack.c.l.b16 %v354
      %v644 = vpack.c.b16 %v629, %v628
      %v645 = vpack.c.b16 %v631, %v630
      %v646 = vpack.c.b16 %v633, %v632
      %v647 = vpack.c.b16 %v635, %v634
      %v648 = vpack.c.b16 %v637, %v636
      %v649 = vpack.c.b16 %v639, %v638
      %v650 = vpack.c.b16 %v641, %v640
      %v651 = vpack.c.b16 %v643, %v642
      %660 = vmatpush.bf16.msra.mxu0 %v651
      %661 = vmatpush.bf16.msra.mxu0 %v650
      %662 = vmatpush.bf16.msra.mxu0 %v649
      %663 = vmatpush.bf16.msra.mxu0 %v648
      %664 = vmatpush.bf16.msra.mxu0 %v647
      %665 = vmatpush.bf16.msra.mxu0 %v646
      %666 = vmatpush.bf16.msra.mxu0 %v645
      %667 = vmatpush.bf16.msra.mxu0 %v644
      %668 = vmatmul.bf16.gmra.mxu0 %v604
      %v669 = vpop.f32.mrf.mxu0
      %v670 = vadd.f32 %v569, %v669
      %v671 = vpop.f32.mrf.mxu0
      %v672 = vadd.f32 %v571, %v671
      %673 = vmatmul.bf16.gmra.mxu0 %v605
      %v674 = vpop.f32.mrf.mxu0
      %v675 = vadd.f32 %v574, %v674
      %v676 = vpop.f32.mrf.mxu0
      %v677 = vadd.f32 %v576, %v676
      %678 = vmatmul.bf16.gmra.mxu0 %v606
      %v679 = vpop.f32.mrf.mxu0
      %v680 = vadd.f32 %v579, %v679
      %v681 = vpop.f32.mrf.mxu0
      %v682 = vadd.f32 %v581, %v681
      %683 = vmatmul.bf16.gmra.mxu0 %v607
      %v684 = vpop.f32.mrf.mxu0
      %v685 = vadd.f32 %v584, %v684
      %v686 = vpop.f32.mrf.mxu0
      %v687 = vadd.f32 %v586, %v686
      %688 = vdwg.mxu0
      %v689 = vld [vmem:[%s330] sm:$0xe]
      %v690 = vld [vmem:[%s330 + $0x8] sm:$0xe]
      %v691 = vld [vmem:[%s330 + $0x10] sm:$0xe]
      %v692 = vld [vmem:[%s330 + $0x18] sm:$0xe]
      %v693 = vld [vmem:[%s330 + $0x20] sm:$0xe]
      %v694 = vld [vmem:[%s330 + $0x28] sm:$0xe]
      %v695 = vld [vmem:[%s330 + $0x30] sm:$0xe]
      %v696 = vld [vmem:[%s330 + $0x38] sm:$0xe]
      %vm713 = vcmask 1042432
      %vm714 = vcmask 1046532
      %vm715 = vmor %vm713, %vm714
      %v716 = vrot.slane %v689, 5
      %v717 = vrot.slane %v716, 4
      %v718 = vrot.slane %v355, 5
      %v719 = vsel %vm715, %v717, %v718
      %v720 = vrot.slane %v690, 5
      %v721 = vrot.slane %v720, 4
      %v722 = vrot.slane %v356, 5
      %v723 = vsel %vm715, %v721, %v722
      %v724 = vrot.slane %v691, 5
      %v725 = vrot.slane %v724, 4
      %v726 = vrot.slane %v357, 5
      %v727 = vsel %vm715, %v725, %v726
      %v728 = vrot.slane %v692, 5
      %v729 = vrot.slane %v728, 4
      %v730 = vrot.slane %v358, 5
      %v731 = vsel %vm715, %v729, %v730
      %v732 = vrot.slane %v693, 5
      %v733 = vrot.slane %v732, 4
      %v734 = vrot.slane %v359, 5
      %v735 = vsel %vm715, %v733, %v734
      %v736 = vrot.slane %v694, 5
      %v737 = vrot.slane %v736, 4
      %v738 = vrot.slane %v360, 5
      %v739 = vsel %vm715, %v737, %v738
      %v740 = vrot.slane %v695, 5
      %v741 = vrot.slane %v740, 4
      %v742 = vrot.slane %v361, 5
      %v743 = vsel %vm715, %v741, %v742
      %v744 = vrot.slane %v696, 5
      %v745 = vrot.slane %v744, 4
      %v746 = vrot.slane %v362, 5
      %v747 = vsel %vm715, %v745, %v746
      %s748 = scalar_lea.vmem %s290, 128
      %v749 = vld [vmem:[%s748] sm:$0xf]
      %v750 = vld [vmem:[%s748 + $0x4] sm:$0xf]
      %v751 = vld [vmem:[%s748 + $0x8] sm:$0xf]
      %v752 = vld [vmem:[%s748 + $0xc] sm:$0xf]
      %v753 = vld [vmem:[%s748 + $0x10] sm:$0xf]
      %v754 = vld [vmem:[%s748 + $0x14] sm:$0xf]
      %v755 = vld [vmem:[%s748 + $0x18] sm:$0xf]
      %v756 = vld [vmem:[%s748 + $0x1c] sm:$0xf]
      %v757 = vld [vmem:[%s748 + $0x20] sm:$0xf]
      %v758 = vld [vmem:[%s748 + $0x24] sm:$0xf]
      %v759 = vld [vmem:[%s748 + $0x28] sm:$0xf]
      %v760 = vld [vmem:[%s748 + $0x2c] sm:$0xf]
      %v761 = vld [vmem:[%s748 + $0x30] sm:$0xf]
      %v762 = vld [vmem:[%s748 + $0x34] sm:$0xf]
      %v763 = vld [vmem:[%s748 + $0x38] sm:$0xf]
      %v764 = vld [vmem:[%s748 + $0x3c] sm:$0xf]
      %v765 = vunpack.c.l.b16 %v719
      %v766 = vunpack.c.l.b16 %v723
      %v767 = vunpack.c.l.b16 %v727
      %v768 = vunpack.c.l.b16 %v731
      %v769 = vunpack.c.l.b16 %v735
      %v770 = vunpack.c.l.b16 %v739
      %v771 = vunpack.c.l.b16 %v743
      %v772 = vunpack.c.l.b16 %v747
      %v773 = vpack.c.b16 %v766, %v765
      %v774 = vpack.c.b16 %v768, %v767
      %v775 = vpack.c.b16 %v770, %v769
      %v776 = vpack.c.b16 %v772, %v771
      %v797 = vunpack.c.l.b16 %v749
      %v798 = vunpack.c.l.b16 %v750
      %v799 = vunpack.c.l.b16 %v751
      %v800 = vunpack.c.l.b16 %v752
      %v801 = vunpack.c.l.b16 %v753
      %v802 = vunpack.c.l.b16 %v754
      %v803 = vunpack.c.l.b16 %v755
      %v804 = vunpack.c.l.b16 %v756
      %v805 = vunpack.c.l.b16 %v757
      %v806 = vunpack.c.l.b16 %v758
      %v807 = vunpack.c.l.b16 %v759
      %v808 = vunpack.c.l.b16 %v760
      %v809 = vunpack.c.l.b16 %v761
      %v810 = vunpack.c.l.b16 %v762
      %v811 = vunpack.c.l.b16 %v763
      %v812 = vunpack.c.l.b16 %v764
      %v813 = vpack.c.b16 %v798, %v797
      %v814 = vpack.c.b16 %v800, %v799
      %v815 = vpack.c.b16 %v802, %v801
      %v816 = vpack.c.b16 %v804, %v803
      %v817 = vpack.c.b16 %v806, %v805
      %v818 = vpack.c.b16 %v808, %v807
      %v819 = vpack.c.b16 %v810, %v809
      %v820 = vpack.c.b16 %v812, %v811
      %829 = vmatpush.bf16.msra.mxu0 %v820
      %830 = vmatpush.bf16.msra.mxu0 %v819
      %831 = vmatpush.bf16.msra.mxu0 %v818
      %832 = vmatpush.bf16.msra.mxu0 %v817
      %833 = vmatpush.bf16.msra.mxu0 %v816
      %834 = vmatpush.bf16.msra.mxu0 %v815
      %835 = vmatpush.bf16.msra.mxu0 %v814
      %836 = vmatpush.bf16.msra.mxu0 %v813
      %837 = vmatmul.bf16.gmra.mxu0 %v773
      %v838 = vpop.f32.mrf.mxu0
      %v839 = vadd.f32 0.0, %v838
      %v840 = vpop.f32.mrf.mxu0
      %v841 = vadd.f32 0.0, %v840
      %842 = vmatmul.bf16.gmra.mxu0 %v774
      %v843 = vpop.f32.mrf.mxu0
      %v844 = vadd.f32 0.0, %v843
      %v845 = vpop.f32.mrf.mxu0
      %v846 = vadd.f32 0.0, %v845
      %847 = vmatmul.bf16.gmra.mxu0 %v775
      %v848 = vpop.f32.mrf.mxu0
      %v849 = vadd.f32 0.0, %v848
      %v850 = vpop.f32.mrf.mxu0
      %v851 = vadd.f32 0.0, %v850
      %852 = vmatmul.bf16.gmra.mxu0 %v776
      %v853 = vpop.f32.mrf.mxu0
      %v854 = vadd.f32 0.0, %v853
      %v855 = vpop.f32.mrf.mxu0
      %v856 = vadd.f32 0.0, %v855
      %857 = vdwg.mxu0
      %v858 = vadd.f32 %v670, %v839
      %v859 = vadd.f32 %v672, %v841
      %v860 = vadd.f32 %v675, %v844
      %v861 = vadd.f32 %v677, %v846
      %v862 = vadd.f32 %v680, %v849
      %v863 = vadd.f32 %v682, %v851
      %v864 = vadd.f32 %v685, %v854
      %v865 = vadd.f32 %v687, %v856
      %s866 = sadd.s32 %s327, 1
      %s867 = smul.u32 %s866, 2
      %s868 = smul.addr %s867, 4
      %s869 = scalar_lea.vmem %s286, %s868
      %v870 = vld [vmem:[%s869] sm:$0xf]
      %v871 = vld [vmem:[%s869 + $0x8] sm:$0xf]
      %v872 = vld [vmem:[%s869 + $0x10] sm:$0xf]
      %v873 = vld [vmem:[%s869 + $0x18] sm:$0xf]
      %v874 = vld [vmem:[%s869 + $0x20] sm:$0xf]
      %v875 = vld [vmem:[%s869 + $0x28] sm:$0xf]
      %v876 = vld [vmem:[%s869 + $0x30] sm:$0xf]
      %v877 = vld [vmem:[%s869 + $0x38] sm:$0xf]
      %s878 = scalar_lea.vmem %s290, 192
      %v879 = vld [vmem:[%s878] sm:$0xf]
      %v880 = vld [vmem:[%s878 + $0x4] sm:$0xf]
      %v881 = vld [vmem:[%s878 + $0x8] sm:$0xf]
      %v882 = vld [vmem:[%s878 + $0xc] sm:$0xf]
      %v883 = vld [vmem:[%s878 + $0x10] sm:$0xf]
      %v884 = vld [vmem:[%s878 + $0x14] sm:$0xf]
      %v885 = vld [vmem:[%s878 + $0x18] sm:$0xf]
      %v886 = vld [vmem:[%s878 + $0x1c] sm:$0xf]
      %v887 = vld [vmem:[%s878 + $0x20] sm:$0xf]
      %v888 = vld [vmem:[%s878 + $0x24] sm:$0xf]
      %v889 = vld [vmem:[%s878 + $0x28] sm:$0xf]
      %v890 = vld [vmem:[%s878 + $0x2c] sm:$0xf]
      %v891 = vld [vmem:[%s878 + $0x30] sm:$0xf]
      %v892 = vld [vmem:[%s878 + $0x34] sm:$0xf]
      %v893 = vld [vmem:[%s878 + $0x38] sm:$0xf]
      %v894 = vld [vmem:[%s878 + $0x3c] sm:$0xf]
      %v903 = vunpack.c.l.b16 %v870
      %v904 = vunpack.c.l.b16 %v871
      %v905 = vunpack.c.l.b16 %v872
      %v906 = vunpack.c.l.b16 %v873
      %v907 = vunpack.c.l.b16 %v874
      %v908 = vunpack.c.l.b16 %v875
      %v909 = vunpack.c.l.b16 %v876
      %v910 = vunpack.c.l.b16 %v877
      %v911 = vpack.c.b16 %v904, %v903
      %v912 = vpack.c.b16 %v906, %v905
      %v913 = vpack.c.b16 %v908, %v907
      %v914 = vpack.c.b16 %v910, %v909
      %v935 = vunpack.c.l.b16 %v879
      %v936 = vunpack.c.l.b16 %v880
      %v937 = vunpack.c.l.b16 %v881
      %v938 = vunpack.c.l.b16 %v882
      %v939 = vunpack.c.l.b16 %v883
      %v940 = vunpack.c.l.b16 %v884
      %v941 = vunpack.c.l.b16 %v885
      %v942 = vunpack.c.l.b16 %v886
      %v943 = vunpack.c.l.b16 %v887
      %v944 = vunpack.c.l.b16 %v888
      %v945 = vunpack.c.l.b16 %v889
      %v946 = vunpack.c.l.b16 %v890
      %v947 = vunpack.c.l.b16 %v891
      %v948 = vunpack.c.l.b16 %v892
      %v949 = vunpack.c.l.b16 %v893
      %v950 = vunpack.c.l.b16 %v894
      %v951 = vpack.c.b16 %v936, %v935
      %v952 = vpack.c.b16 %v938, %v937
      %v953 = vpack.c.b16 %v940, %v939
      %v954 = vpack.c.b16 %v942, %v941
      %v955 = vpack.c.b16 %v944, %v943
      %v956 = vpack.c.b16 %v946, %v945
      %v957 = vpack.c.b16 %v948, %v947
      %v958 = vpack.c.b16 %v950, %v949
      %967 = vmatpush.bf16.msra.mxu0 %v958
      %968 = vmatpush.bf16.msra.mxu0 %v957
      %969 = vmatpush.bf16.msra.mxu0 %v956
      %970 = vmatpush.bf16.msra.mxu0 %v955
      %971 = vmatpush.bf16.msra.mxu0 %v954
      %972 = vmatpush.bf16.msra.mxu0 %v953
      %973 = vmatpush.bf16.msra.mxu0 %v952
      %974 = vmatpush.bf16.msra.mxu0 %v951
      %975 = vmatmul.bf16.gmra.mxu0 %v911
      %v976 = vpop.f32.mrf.mxu0
      %v977 = vadd.f32 0.0, %v976
      %v978 = vpop.f32.mrf.mxu0
      %v979 = vadd.f32 0.0, %v978
      %980 = vmatmul.bf16.gmra.mxu0 %v912
      %v981 = vpop.f32.mrf.mxu0
      %v982 = vadd.f32 0.0, %v981
      %v983 = vpop.f32.mrf.mxu0
      %v984 = vadd.f32 0.0, %v983
      %985 = vmatmul.bf16.gmra.mxu0 %v913
      %v986 = vpop.f32.mrf.mxu0
      %v987 = vadd.f32 0.0, %v986
      %v988 = vpop.f32.mrf.mxu0
      %v989 = vadd.f32 0.0, %v988
      %990 = vmatmul.bf16.gmra.mxu0 %v914
      %v991 = vpop.f32.mrf.mxu0
      %v992 = vadd.f32 0.0, %v991
      %v993 = vpop.f32.mrf.mxu0
      %v994 = vadd.f32 0.0, %v993
      %995 = vdwg.mxu0
      %v996 = vadd.f32 %v858, %v977
      %v997 = vadd.f32 %v859, %v979
      %v998 = vadd.f32 %v860, %v982
      %v999 = vadd.f32 %v861, %v984
      %v1000 = vadd.f32 %v862, %v987
      %v1001 = vadd.f32 %v863, %v989
      %v1002 = vadd.f32 %v864, %v992
      %v1003 = vadd.f32 %v865, %v994
      %v1004 = vld [vmem:[%s869] sm:$0xf]
      %v1005 = vld [vmem:[%s869 + $0x4] sm:$0x1]
      %v1006 = vld [vmem:[%s869 + $0x8] sm:$0xf]
      %v1007 = vld [vmem:[%s869 + $0xc] sm:$0x1]
      %v1008 = vld [vmem:[%s869 + $0x10] sm:$0xf]
      %v1009 = vld [vmem:[%s869 + $0x14] sm:$0x1]
      %v1010 = vld [vmem:[%s869 + $0x18] sm:$0xf]
      %v1011 = vld [vmem:[%s869 + $0x1c] sm:$0x1]
      %v1012 = vld [vmem:[%s869 + $0x20] sm:$0xf]
      %v1013 = vld [vmem:[%s869 + $0x24] sm:$0x1]
      %v1014 = vld [vmem:[%s869 + $0x28] sm:$0xf]
      %v1015 = vld [vmem:[%s869 + $0x2c] sm:$0x1]
      %v1016 = vld [vmem:[%s869 + $0x30] sm:$0xf]
      %v1017 = vld [vmem:[%s869 + $0x34] sm:$0x1]
      %v1018 = vld [vmem:[%s869 + $0x38] sm:$0xf]
      %v1019 = vld [vmem:[%s869 + $0x3c] sm:$0x1]
      %v1021 = vshrl.u32 %v1004, 16
      %v1023 = vrot.slane %v1021, 4
      %v1024 = vshll.u32 %v1004, 16
      %v1026 = vrot.slane %v1024, 5
      %v1027 = vor.u32 %v1023, %v1026
      %v1028 = vrot.slane %v1027, 4
      %v1030 = vshll.u32 %v1005, 16
      %v1032 = vrot.slane %v1030, 5
      %v1033 = vsel %vm365, %v1028, %v1032
      %v1035 = vshrl.u32 %v1006, 16
      %v1037 = vrot.slane %v1035, 4
      %v1038 = vshll.u32 %v1006, 16
      %v1040 = vrot.slane %v1038, 5
      %v1041 = vor.u32 %v1037, %v1040
      %v1042 = vrot.slane %v1041, 4
      %v1044 = vshll.u32 %v1007, 16
      %v1046 = vrot.slane %v1044, 5
      %v1047 = vsel %vm365, %v1042, %v1046
      %v1049 = vshrl.u32 %v1008, 16
      %v1051 = vrot.slane %v1049, 4
      %v1052 = vshll.u32 %v1008, 16
      %v1054 = vrot.slane %v1052, 5
      %v1055 = vor.u32 %v1051, %v1054
      %v1056 = vrot.slane %v1055, 4
      %v1058 = vshll.u32 %v1009, 16
      %v1060 = vrot.slane %v1058, 5
      %v1061 = vsel %vm365, %v1056, %v1060
      %v1063 = vshrl.u32 %v1010, 16
      %v1065 = vrot.slane %v1063, 4
      %v1066 = vshll.u32 %v1010, 16
      %v1068 = vrot.slane %v1066, 5
      %v1069 = vor.u32 %v1065, %v1068
      %v1070 = vrot.slane %v1069, 4
      %v1072 = vshll.u32 %v1011, 16
      %v1074 = vrot.slane %v1072, 5
      %v1075 = vsel %vm365, %v1070, %v1074
      %v1077 = vshrl.u32 %v1012, 16
      %v1079 = vrot.slane %v1077, 4
      %v1080 = vshll.u32 %v1012, 16
      %v1082 = vrot.slane %v1080, 5
      %v1083 = vor.u32 %v1079, %v1082
      %v1084 = vrot.slane %v1083, 4
      %v1086 = vshll.u32 %v1013, 16
      %v1088 = vrot.slane %v1086, 5
      %v1089 = vsel %vm365, %v1084, %v1088
      %v1091 = vshrl.u32 %v1014, 16
      %v1093 = vrot.slane %v1091, 4
      %v1094 = vshll.u32 %v1014, 16
      %v1096 = vrot.slane %v1094, 5
      %v1097 = vor.u32 %v1093, %v1096
      %v1098 = vrot.slane %v1097, 4
      %v1100 = vshll.u32 %v1015, 16
      %v1102 = vrot.slane %v1100, 5
      %v1103 = vsel %vm365, %v1098, %v1102
      %v1105 = vshrl.u32 %v1016, 16
      %v1107 = vrot.slane %v1105, 4
      %v1108 = vshll.u32 %v1016, 16
      %v1110 = vrot.slane %v1108, 5
      %v1111 = vor.u32 %v1107, %v1110
      %v1112 = vrot.slane %v1111, 4
      %v1114 = vshll.u32 %v1017, 16
      %v1116 = vrot.slane %v1114, 5
      %v1117 = vsel %vm365, %v1112, %v1116
      %v1119 = vshrl.u32 %v1018, 16
      %v1121 = vrot.slane %v1119, 4
      %v1122 = vshll.u32 %v1018, 16
      %v1124 = vrot.slane %v1122, 5
      %v1125 = vor.u32 %v1121, %v1124
      %v1126 = vrot.slane %v1125, 4
      %v1128 = vshll.u32 %v1019, 16
      %v1130 = vrot.slane %v1128, 5
      %v1131 = vsel %vm365, %v1126, %v1130
      %s1132 = scalar_lea.vmem %s290, 256
      %v1133 = vld [vmem:[%s1132] sm:$0xf]
      %v1134 = vld [vmem:[%s1132 + $0x4] sm:$0xf]
      %v1135 = vld [vmem:[%s1132 + $0x8] sm:$0xf]
      %v1136 = vld [vmem:[%s1132 + $0xc] sm:$0xf]
      %v1137 = vld [vmem:[%s1132 + $0x10] sm:$0xf]
      %v1138 = vld [vmem:[%s1132 + $0x14] sm:$0xf]
      %v1139 = vld [vmem:[%s1132 + $0x18] sm:$0xf]
      %v1140 = vld [vmem:[%s1132 + $0x1c] sm:$0xf]
      %v1141 = vld [vmem:[%s1132 + $0x20] sm:$0xf]
      %v1142 = vld [vmem:[%s1132 + $0x24] sm:$0xf]
      %v1143 = vld [vmem:[%s1132 + $0x28] sm:$0xf]
      %v1144 = vld [vmem:[%s1132 + $0x2c] sm:$0xf]
      %v1145 = vld [vmem:[%s1132 + $0x30] sm:$0xf]
      %v1146 = vld [vmem:[%s1132 + $0x34] sm:$0xf]
      %v1147 = vld [vmem:[%s1132 + $0x38] sm:$0xf]
      %v1148 = vld [vmem:[%s1132 + $0x3c] sm:$0xf]
      %v1149 = vunpack.c.l.b16 %v1033
      %v1150 = vunpack.c.l.b16 %v1047
      %v1151 = vunpack.c.l.b16 %v1061
      %v1152 = vunpack.c.l.b16 %v1075
      %v1153 = vunpack.c.l.b16 %v1089
      %v1154 = vunpack.c.l.b16 %v1103
      %v1155 = vunpack.c.l.b16 %v1117
      %v1156 = vunpack.c.l.b16 %v1131
      %v1157 = vpack.c.b16 %v1150, %v1149
      %v1158 = vpack.c.b16 %v1152, %v1151
      %v1159 = vpack.c.b16 %v1154, %v1153
      %v1160 = vpack.c.b16 %v1156, %v1155
      %v1181 = vunpack.c.l.b16 %v1133
      %v1182 = vunpack.c.l.b16 %v1134
      %v1183 = vunpack.c.l.b16 %v1135
      %v1184 = vunpack.c.l.b16 %v1136
      %v1185 = vunpack.c.l.b16 %v1137
      %v1186 = vunpack.c.l.b16 %v1138
      %v1187 = vunpack.c.l.b16 %v1139
      %v1188 = vunpack.c.l.b16 %v1140
      %v1189 = vunpack.c.l.b16 %v1141
      %v1190 = vunpack.c.l.b16 %v1142
      %v1191 = vunpack.c.l.b16 %v1143
      %v1192 = vunpack.c.l.b16 %v1144
      %v1193 = vunpack.c.l.b16 %v1145
      %v1194 = vunpack.c.l.b16 %v1146
      %v1195 = vunpack.c.l.b16 %v1147
      %v1196 = vunpack.c.l.b16 %v1148
      %v1197 = vpack.c.b16 %v1182, %v1181
      %v1198 = vpack.c.b16 %v1184, %v1183
      %v1199 = vpack.c.b16 %v1186, %v1185
      %v1200 = vpack.c.b16 %v1188, %v1187
      %v1201 = vpack.c.b16 %v1190, %v1189
      %v1202 = vpack.c.b16 %v1192, %v1191
      %v1203 = vpack.c.b16 %v1194, %v1193
      %v1204 = vpack.c.b16 %v1196, %v1195
      %1213 = vmatpush.bf16.msra.mxu0 %v1204
      %1214 = vmatpush.bf16.msra.mxu0 %v1203
      %1215 = vmatpush.bf16.msra.mxu0 %v1202
      %1216 = vmatpush.bf16.msra.mxu0 %v1201
      %1217 = vmatpush.bf16.msra.mxu0 %v1200
      %1218 = vmatpush.bf16.msra.mxu0 %v1199
      %1219 = vmatpush.bf16.msra.mxu0 %v1198
      %1220 = vmatpush.bf16.msra.mxu0 %v1197
      %1221 = vmatmul.bf16.gmra.mxu0 %v1157
      %v1222 = vpop.f32.mrf.mxu0
      %v1223 = vadd.f32 0.0, %v1222
      %v1224 = vpop.f32.mrf.mxu0
      %v1225 = vadd.f32 0.0, %v1224
      %1226 = vmatmul.bf16.gmra.mxu0 %v1158
      %v1227 = vpop.f32.mrf.mxu0
      %v1228 = vadd.f32 0.0, %v1227
      %v1229 = vpop.f32.mrf.mxu0
      %v1230 = vadd.f32 0.0, %v1229
      %1231 = vmatmul.bf16.gmra.mxu0 %v1159
      %v1232 = vpop.f32.mrf.mxu0
      %v1233 = vadd.f32 0.0, %v1232
      %v1234 = vpop.f32.mrf.mxu0
      %v1235 = vadd.f32 0.0, %v1234
      %1236 = vmatmul.bf16.gmra.mxu0 %v1160
      %v1237 = vpop.f32.mrf.mxu0
      %v1238 = vadd.f32 0.0, %v1237
      %v1239 = vpop.f32.mrf.mxu0
      %v1240 = vadd.f32 0.0, %v1239
      %1241 = vdwg.mxu0
      %v1242 = vadd.f32 %v996, %v1223
      %v1243 = vadd.f32 %v997, %v1225
      %v1244 = vadd.f32 %v998, %v1228
      %v1245 = vadd.f32 %v999, %v1230
      %v1246 = vadd.f32 %v1000, %v1233
      %v1247 = vadd.f32 %v1001, %v1235
      %v1248 = vadd.f32 %v1002, %v1238
      %v1249 = vadd.f32 %v1003, %v1240
      %v1250 = vld [vmem:[%s869] sm:$0xe]
      %v1251 = vld [vmem:[%s869 + $0x8] sm:$0xe]
      %v1252 = vld [vmem:[%s869 + $0x10] sm:$0xe]
      %v1253 = vld [vmem:[%s869 + $0x18] sm:$0xe]
      %v1254 = vld [vmem:[%s869 + $0x20] sm:$0xe]
      %v1255 = vld [vmem:[%s869 + $0x28] sm:$0xe]
      %v1256 = vld [vmem:[%s869 + $0x30] sm:$0xe]
      %v1257 = vld [vmem:[%s869 + $0x38] sm:$0xe]
      %v1274 = vrot.slane %v1250, 5
      %v1275 = vrot.slane %v1274, 4
      %v1276 = vrot.slane %v1005, 5
      %v1277 = vsel %vm715, %v1275, %v1276
      %v1278 = vrot.slane %v1251, 5
      %v1279 = vrot.slane %v1278, 4
      %v1280 = vrot.slane %v1007, 5
      %v1281 = vsel %vm715, %v1279, %v1280
      %v1282 = vrot.slane %v1252, 5
      %v1283 = vrot.slane %v1282, 4
      %v1284 = vrot.slane %v1009, 5
      %v1285 = vsel %vm715, %v1283, %v1284
      %v1286 = vrot.slane %v1253, 5
      %v1287 = vrot.slane %v1286, 4
      %v1288 = vrot.slane %v1011, 5
      %v1289 = vsel %vm715, %v1287, %v1288
      %v1290 = vrot.slane %v1254, 5
      %v1291 = vrot.slane %v1290, 4
      %v1292 = vrot.slane %v1013, 5
      %v1293 = vsel %vm715, %v1291, %v1292
      %v1294 = vrot.slane %v1255, 5
      %v1295 = vrot.slane %v1294, 4
      %v1296 = vrot.slane %v1015, 5
      %v1297 = vsel %vm715, %v1295, %v1296
      %v1298 = vrot.slane %v1256, 5
      %v1299 = vrot.slane %v1298, 4
      %v1300 = vrot.slane %v1017, 5
      %v1301 = vsel %vm715, %v1299, %v1300
      %v1302 = vrot.slane %v1257, 5
      %v1303 = vrot.slane %v1302, 4
      %v1304 = vrot.slane %v1019, 5
      %v1305 = vsel %vm715, %v1303, %v1304
      %s1306 = scalar_lea.vmem %s290, 320
      %v1307 = vld [vmem:[%s1306] sm:$0xf]
      %v1308 = vld [vmem:[%s1306 + $0x4] sm:$0xf]
      %v1309 = vld [vmem:[%s1306 + $0x8] sm:$0xf]
      %v1310 = vld [vmem:[%s1306 + $0xc] sm:$0xf]
      %v1311 = vld [vmem:[%s1306 + $0x10] sm:$0xf]
      %v1312 = vld [vmem:[%s1306 + $0x14] sm:$0xf]
      %v1313 = vld [vmem:[%s1306 + $0x18] sm:$0xf]
      %v1314 = vld [vmem:[%s1306 + $0x1c] sm:$0xf]
      %v1315 = vld [vmem:[%s1306 + $0x20] sm:$0xf]
      %v1316 = vld [vmem:[%s1306 + $0x24] sm:$0xf]
      %v1317 = vld [vmem:[%s1306 + $0x28] sm:$0xf]
      %v1318 = vld [vmem:[%s1306 + $0x2c] sm:$0xf]
      %v1319 = vld [vmem:[%s1306 + $0x30] sm:$0xf]
      %v1320 = vld [vmem:[%s1306 + $0x34] sm:$0xf]
      %v1321 = vld [vmem:[%s1306 + $0x38] sm:$0xf]
      %v1322 = vld [vmem:[%s1306 + $0x3c] sm:$0xf]
      %v1323 = vunpack.c.l.b16 %v1277
      %v1324 = vunpack.c.l.b16 %v1281
      %v1325 = vunpack.c.l.b16 %v1285
      %v1326 = vunpack.c.l.b16 %v1289
      %v1327 = vunpack.c.l.b16 %v1293
      %v1328 = vunpack.c.l.b16 %v1297
      %v1329 = vunpack.c.l.b16 %v1301
      %v1330 = vunpack.c.l.b16 %v1305
      %v1331 = vpack.c.b16 %v1324, %v1323
      %v1332 = vpack.c.b16 %v1326, %v1325
      %v1333 = vpack.c.b16 %v1328, %v1327
      %v1334 = vpack.c.b16 %v1330, %v1329
      %v1355 = vunpack.c.l.b16 %v1307
      %v1356 = vunpack.c.l.b16 %v1308
      %v1357 = vunpack.c.l.b16 %v1309
      %v1358 = vunpack.c.l.b16 %v1310
      %v1359 = vunpack.c.l.b16 %v1311
      %v1360 = vunpack.c.l.b16 %v1312
      %v1361 = vunpack.c.l.b16 %v1313
      %v1362 = vunpack.c.l.b16 %v1314
      %v1363 = vunpack.c.l.b16 %v1315
      %v1364 = vunpack.c.l.b16 %v1316
      %v1365 = vunpack.c.l.b16 %v1317
      %v1366 = vunpack.c.l.b16 %v1318
      %v1367 = vunpack.c.l.b16 %v1319
      %v1368 = vunpack.c.l.b16 %v1320
      %v1369 = vunpack.c.l.b16 %v1321
      %v1370 = vunpack.c.l.b16 %v1322
      %v1371 = vpack.c.b16 %v1356, %v1355
      %v1372 = vpack.c.b16 %v1358, %v1357
      %v1373 = vpack.c.b16 %v1360, %v1359
      %v1374 = vpack.c.b16 %v1362, %v1361
      %v1375 = vpack.c.b16 %v1364, %v1363
      %v1376 = vpack.c.b16 %v1366, %v1365
      %v1377 = vpack.c.b16 %v1368, %v1367
      %v1378 = vpack.c.b16 %v1370, %v1369
      %1387 = vmatpush.bf16.msra.mxu0 %v1378
      %1388 = vmatpush.bf16.msra.mxu0 %v1377
      %1389 = vmatpush.bf16.msra.mxu0 %v1376
      %1390 = vmatpush.bf16.msra.mxu0 %v1375
      %1391 = vmatpush.bf16.msra.mxu0 %v1374
      %1392 = vmatpush.bf16.msra.mxu0 %v1373
      %1393 = vmatpush.bf16.msra.mxu0 %v1372
      %1394 = vmatpush.bf16.msra.mxu0 %v1371
      %1395 = vmatmul.bf16.gmra.mxu0 %v1331
      %v1396 = vpop.f32.mrf.mxu0
      %v1397 = vadd.f32 0.0, %v1396
      %v1398 = vpop.f32.mrf.mxu0
      %v1399 = vadd.f32 0.0, %v1398
      %1400 = vmatmul.bf16.gmra.mxu0 %v1332
      %v1401 = vpop.f32.mrf.mxu0
      %v1402 = vadd.f32 0.0, %v1401
      %v1403 = vpop.f32.mrf.mxu0
      %v1404 = vadd.f32 0.0, %v1403
      %1405 = vmatmul.bf16.gmra.mxu0 %v1333
      %v1406 = vpop.f32.mrf.mxu0
      %v1407 = vadd.f32 0.0, %v1406
      %v1408 = vpop.f32.mrf.mxu0
      %v1409 = vadd.f32 0.0, %v1408
      %1410 = vmatmul.bf16.gmra.mxu0 %v1334
      %v1411 = vpop.f32.mrf.mxu0
      %v1412 = vadd.f32 0.0, %v1411
      %v1413 = vpop.f32.mrf.mxu0
      %v1414 = vadd.f32 0.0, %v1413
      %1415 = vdwg.mxu0
      %v1416 = vadd.f32 %v1242, %v1397
      %v1417 = vadd.f32 %v1243, %v1399
      %v1418 = vadd.f32 %v1244, %v1402
      %v1419 = vadd.f32 %v1245, %v1404
      %v1420 = vadd.f32 %v1246, %v1407
      %v1421 = vadd.f32 %v1247, %v1409
      %v1422 = vadd.f32 %v1248, %v1412
      %v1423 = vadd.f32 %v1249, %v1414
      %s1424 = sadd.s32 %s327, 2
      %s1425 = smul.u32 %s1424, 2
      %s1426 = smul.addr %s1425, 4
      %s1427 = scalar_lea.vmem %s286, %s1426
      %v1428 = vld [vmem:[%s1427] sm:$0xf]
      %v1429 = vld [vmem:[%s1427 + $0x8] sm:$0xf]
      %v1430 = vld [vmem:[%s1427 + $0x10] sm:$0xf]
      %v1431 = vld [vmem:[%s1427 + $0x18] sm:$0xf]
      %v1432 = vld [vmem:[%s1427 + $0x20] sm:$0xf]
      %v1433 = vld [vmem:[%s1427 + $0x28] sm:$0xf]
      %v1434 = vld [vmem:[%s1427 + $0x30] sm:$0xf]
      %v1435 = vld [vmem:[%s1427 + $0x38] sm:$0xf]
      %s1436 = scalar_lea.vmem %s290, 384
      %v1437 = vld [vmem:[%s1436] sm:$0xf]
      %v1438 = vld [vmem:[%s1436 + $0x4] sm:$0xf]
      %v1439 = vld [vmem:[%s1436 + $0x8] sm:$0xf]
      %v1440 = vld [vmem:[%s1436 + $0xc] sm:$0xf]
      %v1441 = vld [vmem:[%s1436 + $0x10] sm:$0xf]
      %v1442 = vld [vmem:[%s1436 + $0x14] sm:$0xf]
      %v1443 = vld [vmem:[%s1436 + $0x18] sm:$0xf]
      %v1444 = vld [vmem:[%s1436 + $0x1c] sm:$0xf]
      %v1445 = vld [vmem:[%s1436 + $0x20] sm:$0xf]
      %v1446 = vld [vmem:[%s1436 + $0x24] sm:$0xf]
      %v1447 = vld [vmem:[%s1436 + $0x28] sm:$0xf]
      %v1448 = vld [vmem:[%s1436 + $0x2c] sm:$0xf]
      %v1449 = vld [vmem:[%s1436 + $0x30] sm:$0xf]
      %v1450 = vld [vmem:[%s1436 + $0x34] sm:$0xf]
      %v1451 = vld [vmem:[%s1436 + $0x38] sm:$0xf]
      %v1452 = vld [vmem:[%s1436 + $0x3c] sm:$0xf]
      %v1461 = vunpack.c.l.b16 %v1428
      %v1462 = vunpack.c.l.b16 %v1429
      %v1463 = vunpack.c.l.b16 %v1430
      %v1464 = vunpack.c.l.b16 %v1431
      %v1465 = vunpack.c.l.b16 %v1432
      %v1466 = vunpack.c.l.b16 %v1433
      %v1467 = vunpack.c.l.b16 %v1434
      %v1468 = vunpack.c.l.b16 %v1435
      %v1469 = vpack.c.b16 %v1462, %v1461
      %v1470 = vpack.c.b16 %v1464, %v1463
      %v1471 = vpack.c.b16 %v1466, %v1465
      %v1472 = vpack.c.b16 %v1468, %v1467
      %v1493 = vunpack.c.l.b16 %v1437
      %v1494 = vunpack.c.l.b16 %v1438
      %v1495 = vunpack.c.l.b16 %v1439
      %v1496 = vunpack.c.l.b16 %v1440
      %v1497 = vunpack.c.l.b16 %v1441
      %v1498 = vunpack.c.l.b16 %v1442
      %v1499 = vunpack.c.l.b16 %v1443
      %v1500 = vunpack.c.l.b16 %v1444
      %v1501 = vunpack.c.l.b16 %v1445
      %v1502 = vunpack.c.l.b16 %v1446
      %v1503 = vunpack.c.l.b16 %v1447
      %v1504 = vunpack.c.l.b16 %v1448
      %v1505 = vunpack.c.l.b16 %v1449
      %v1506 = vunpack.c.l.b16 %v1450
      %v1507 = vunpack.c.l.b16 %v1451
      %v1508 = vunpack.c.l.b16 %v1452
      %v1509 = vpack.c.b16 %v1494, %v1493
      %v1510 = vpack.c.b16 %v1496, %v1495
      %v1511 = vpack.c.b16 %v1498, %v1497
      %v1512 = vpack.c.b16 %v1500, %v1499
      %v1513 = vpack.c.b16 %v1502, %v1501
      %v1514 = vpack.c.b16 %v1504, %v1503
      %v1515 = vpack.c.b16 %v1506, %v1505
      %v1516 = vpack.c.b16 %v1508, %v1507
      %1525 = vmatpush.bf16.msra.mxu0 %v1516
      %1526 = vmatpush.bf16.msra.mxu0 %v1515
      %1527 = vmatpush.bf16.msra.mxu0 %v1514
      %1528 = vmatpush.bf16.msra.mxu0 %v1513
      %1529 = vmatpush.bf16.msra.mxu0 %v1512
      %1530 = vmatpush.bf16.msra.mxu0 %v1511
      %1531 = vmatpush.bf16.msra.mxu0 %v1510
      %1532 = vmatpush.bf16.msra.mxu0 %v1509
      %1533 = vmatmul.bf16.gmra.mxu0 %v1469
      %v1534 = vpop.f32.mrf.mxu0
      %v1535 = vadd.f32 0.0, %v1534
      %v1536 = vpop.f32.mrf.mxu0
      %v1537 = vadd.f32 0.0, %v1536
      %1538 = vmatmul.bf16.gmra.mxu0 %v1470
      %v1539 = vpop.f32.mrf.mxu0
      %v1540 = vadd.f32 0.0, %v1539
      %v1541 = vpop.f32.mrf.mxu0
      %v1542 = vadd.f32 0.0, %v1541
      %1543 = vmatmul.bf16.gmra.mxu0 %v1471
      %v1544 = vpop.f32.mrf.mxu0
      %v1545 = vadd.f32 0.0, %v1544
      %v1546 = vpop.f32.mrf.mxu0
      %v1547 = vadd.f32 0.0, %v1546
      %1548 = vmatmul.bf16.gmra.mxu0 %v1472
      %v1549 = vpop.f32.mrf.mxu0
      %v1550 = vadd.f32 0.0, %v1549
      %v1551 = vpop.f32.mrf.mxu0
      %v1552 = vadd.f32 0.0, %v1551
      %1553 = vdwg.mxu0
      %v1554 = vadd.f32 %v1416, %v1535
      %v1555 = vadd.f32 %v1417, %v1537
      %v1556 = vadd.f32 %v1418, %v1540
      %v1557 = vadd.f32 %v1419, %v1542
      %v1558 = vadd.f32 %v1420, %v1545
      %v1559 = vadd.f32 %v1421, %v1547
      %v1560 = vadd.f32 %v1422, %v1550
      %v1561 = vadd.f32 %v1423, %v1552
      %v1562 = vld [vmem:[%s1427] sm:$0xf]
      %v1563 = vld [vmem:[%s1427 + $0x4] sm:$0x1]
      %v1564 = vld [vmem:[%s1427 + $0x8] sm:$0xf]
      %v1565 = vld [vmem:[%s1427 + $0xc] sm:$0x1]
      %v1566 = vld [vmem:[%s1427 + $0x10] sm:$0xf]
      %v1567 = vld [vmem:[%s1427 + $0x14] sm:$0x1]
      %v1568 = vld [vmem:[%s1427 + $0x18] sm:$0xf]
      %v1569 = vld [vmem:[%s1427 + $0x1c] sm:$0x1]
      %v1570 = vld [vmem:[%s1427 + $0x20] sm:$0xf]
      %v1571 = vld [vmem:[%s1427 + $0x24] sm:$0x1]
      %v1572 = vld [vmem:[%s1427 + $0x28] sm:$0xf]
      %v1573 = vld [vmem:[%s1427 + $0x2c] sm:$0x1]
      %v1574 = vld [vmem:[%s1427 + $0x30] sm:$0xf]
      %v1575 = vld [vmem:[%s1427 + $0x34] sm:$0x1]
      %v1576 = vld [vmem:[%s1427 + $0x38] sm:$0xf]
      %v1577 = vld [vmem:[%s1427 + $0x3c] sm:$0x1]
      %v1579 = vshrl.u32 %v1562, 16
      %v1581 = vrot.slane %v1579, 4
      %v1582 = vshll.u32 %v1562, 16
      %v1584 = vrot.slane %v1582, 5
      %v1585 = vor.u32 %v1581, %v1584
      %v1586 = vrot.slane %v1585, 4
      %v1588 = vshll.u32 %v1563, 16
      %v1590 = vrot.slane %v1588, 5
      %v1591 = vsel %vm365, %v1586, %v1590
      %v1593 = vshrl.u32 %v1564, 16
      %v1595 = vrot.slane %v1593, 4
      %v1596 = vshll.u32 %v1564, 16
      %v1598 = vrot.slane %v1596, 5
      %v1599 = vor.u32 %v1595, %v1598
      %v1600 = vrot.slane %v1599, 4
      %v1602 = vshll.u32 %v1565, 16
      %v1604 = vrot.slane %v1602, 5
      %v1605 = vsel %vm365, %v1600, %v1604
      %v1607 = vshrl.u32 %v1566, 16
      %v1609 = vrot.slane %v1607, 4
      %v1610 = vshll.u32 %v1566, 16
      %v1612 = vrot.slane %v1610, 5
      %v1613 = vor.u32 %v1609, %v1612
      %v1614 = vrot.slane %v1613, 4
      %v1616 = vshll.u32 %v1567, 16
      %v1618 = vrot.slane %v1616, 5
      %v1619 = vsel %vm365, %v1614, %v1618
      %v1621 = vshrl.u32 %v1568, 16
      %v1623 = vrot.slane %v1621, 4
      %v1624 = vshll.u32 %v1568, 16
      %v1626 = vrot.slane %v1624, 5
      %v1627 = vor.u32 %v1623, %v1626
      %v1628 = vrot.slane %v1627, 4
      %v1630 = vshll.u32 %v1569, 16
      %v1632 = vrot.slane %v1630, 5
      %v1633 = vsel %vm365, %v1628, %v1632
      %v1635 = vshrl.u32 %v1570, 16
      %v1637 = vrot.slane %v1635, 4
      %v1638 = vshll.u32 %v1570, 16
      %v1640 = vrot.slane %v1638, 5
      %v1641 = vor.u32 %v1637, %v1640
      %v1642 = vrot.slane %v1641, 4
      %v1644 = vshll.u32 %v1571, 16
      %v1646 = vrot.slane %v1644, 5
      %v1647 = vsel %vm365, %v1642, %v1646
      %v1649 = vshrl.u32 %v1572, 16
      %v1651 = vrot.slane %v1649, 4
      %v1652 = vshll.u32 %v1572, 16
      %v1654 = vrot.slane %v1652, 5
      %v1655 = vor.u32 %v1651, %v1654
      %v1656 = vrot.slane %v1655, 4
      %v1658 = vshll.u32 %v1573, 16
      %v1660 = vrot.slane %v1658, 5
      %v1661 = vsel %vm365, %v1656, %v1660
      %v1663 = vshrl.u32 %v1574, 16
      %v1665 = vrot.slane %v1663, 4
      %v1666 = vshll.u32 %v1574, 16
      %v1668 = vrot.slane %v1666, 5
      %v1669 = vor.u32 %v1665, %v1668
      %v1670 = vrot.slane %v1669, 4
      %v1672 = vshll.u32 %v1575, 16
      %v1674 = vrot.slane %v1672, 5
      %v1675 = vsel %vm365, %v1670, %v1674
      %v1677 = vshrl.u32 %v1576, 16
      %v1679 = vrot.slane %v1677, 4
      %v1680 = vshll.u32 %v1576, 16
      %v1682 = vrot.slane %v1680, 5
      %v1683 = vor.u32 %v1679, %v1682
      %v1684 = vrot.slane %v1683, 4
      %v1686 = vshll.u32 %v1577, 16
      %v1688 = vrot.slane %v1686, 5
      %v1689 = vsel %vm365, %v1684, %v1688
      %s1690 = scalar_lea.vmem %s290, 448
      %v1691 = vld [vmem:[%s1690] sm:$0xf]
      %v1692 = vld [vmem:[%s1690 + $0x4] sm:$0xf]
      %v1693 = vld [vmem:[%s1690 + $0x8] sm:$0xf]
      %v1694 = vld [vmem:[%s1690 + $0xc] sm:$0xf]
      %v1695 = vld [vmem:[%s1690 + $0x10] sm:$0xf]
      %v1696 = vld [vmem:[%s1690 + $0x14] sm:$0xf]
      %v1697 = vld [vmem:[%s1690 + $0x18] sm:$0xf]
      %v1698 = vld [vmem:[%s1690 + $0x1c] sm:$0xf]
      %v1699 = vld [vmem:[%s1690 + $0x20] sm:$0xf]
      %v1700 = vld [vmem:[%s1690 + $0x24] sm:$0xf]
      %v1701 = vld [vmem:[%s1690 + $0x28] sm:$0xf]
      %v1702 = vld [vmem:[%s1690 + $0x2c] sm:$0xf]
      %v1703 = vld [vmem:[%s1690 + $0x30] sm:$0xf]
      %v1704 = vld [vmem:[%s1690 + $0x34] sm:$0xf]
      %v1705 = vld [vmem:[%s1690 + $0x38] sm:$0xf]
      %v1706 = vld [vmem:[%s1690 + $0x3c] sm:$0xf]
      %v1707 = vunpack.c.l.b16 %v1591
      %v1708 = vunpack.c.l.b16 %v1605
      %v1709 = vunpack.c.l.b16 %v1619
      %v1710 = vunpack.c.l.b16 %v1633
      %v1711 = vunpack.c.l.b16 %v1647
      %v1712 = vunpack.c.l.b16 %v1661
      %v1713 = vunpack.c.l.b16 %v1675
      %v1714 = vunpack.c.l.b16 %v1689
      %v1715 = vpack.c.b16 %v1708, %v1707
      %v1716 = vpack.c.b16 %v1710, %v1709
      %v1717 = vpack.c.b16 %v1712, %v1711
      %v1718 = vpack.c.b16 %v1714, %v1713
      %v1739 = vunpack.c.l.b16 %v1691
      %v1740 = vunpack.c.l.b16 %v1692
      %v1741 = vunpack.c.l.b16 %v1693
      %v1742 = vunpack.c.l.b16 %v1694
      %v1743 = vunpack.c.l.b16 %v1695
      %v1744 = vunpack.c.l.b16 %v1696
      %v1745 = vunpack.c.l.b16 %v1697
      %v1746 = vunpack.c.l.b16 %v1698
      %v1747 = vunpack.c.l.b16 %v1699
      %v1748 = vunpack.c.l.b16 %v1700
      %v1749 = vunpack.c.l.b16 %v1701
      %v1750 = vunpack.c.l.b16 %v1702
      %v1751 = vunpack.c.l.b16 %v1703
      %v1752 = vunpack.c.l.b16 %v1704
      %v1753 = vunpack.c.l.b16 %v1705
      %v1754 = vunpack.c.l.b16 %v1706
      %v1755 = vpack.c.b16 %v1740, %v1739
      %v1756 = vpack.c.b16 %v1742, %v1741
      %v1757 = vpack.c.b16 %v1744, %v1743
      %v1758 = vpack.c.b16 %v1746, %v1745
      %v1759 = vpack.c.b16 %v1748, %v1747
      %v1760 = vpack.c.b16 %v1750, %v1749
      %v1761 = vpack.c.b16 %v1752, %v1751
      %v1762 = vpack.c.b16 %v1754, %v1753
      %1771 = vmatpush.bf16.msra.mxu0 %v1762
      %1772 = vmatpush.bf16.msra.mxu0 %v1761
      %1773 = vmatpush.bf16.msra.mxu0 %v1760
      %1774 = vmatpush.bf16.msra.mxu0 %v1759
      %1775 = vmatpush.bf16.msra.mxu0 %v1758
      %1776 = vmatpush.bf16.msra.mxu0 %v1757
      %1777 = vmatpush.bf16.msra.mxu0 %v1756
      %1778 = vmatpush.bf16.msra.mxu0 %v1755
      %1779 = vmatmul.bf16.gmra.mxu0 %v1715
      %v1780 = vpop.f32.mrf.mxu0
      %v1781 = vadd.f32 0.0, %v1780
      %v1782 = vpop.f32.mrf.mxu0
      %v1783 = vadd.f32 0.0, %v1782
      %1784 = vmatmul.bf16.gmra.mxu0 %v1716
      %v1785 = vpop.f32.mrf.mxu0
      %v1786 = vadd.f32 0.0, %v1785
      %v1787 = vpop.f32.mrf.mxu0
      %v1788 = vadd.f32 0.0, %v1787
      %1789 = vmatmul.bf16.gmra.mxu0 %v1717
      %v1790 = vpop.f32.mrf.mxu0
      %v1791 = vadd.f32 0.0, %v1790
      %v1792 = vpop.f32.mrf.mxu0
      %v1793 = vadd.f32 0.0, %v1792
      %1794 = vmatmul.bf16.gmra.mxu0 %v1718
      %v1795 = vpop.f32.mrf.mxu0
      %v1796 = vadd.f32 0.0, %v1795
      %v1797 = vpop.f32.mrf.mxu0
      %v1798 = vadd.f32 0.0, %v1797
      %1799 = vdwg.mxu0
      %v1800 = vadd.f32 %v1554, %v1781
      %v1801 = vadd.f32 %v1555, %v1783
      %v1802 = vadd.f32 %v1556, %v1786
      %v1803 = vadd.f32 %v1557, %v1788
      %v1804 = vadd.f32 %v1558, %v1791
      %v1805 = vadd.f32 %v1559, %v1793
      %v1806 = vadd.f32 %v1560, %v1796
      %v1807 = vadd.f32 %v1561, %v1798
      %v1808 = vld [vmem:[%s1427] sm:$0xe]
      %v1809 = vld [vmem:[%s1427 + $0x8] sm:$0xe]
      %v1810 = vld [vmem:[%s1427 + $0x10] sm:$0xe]
      %v1811 = vld [vmem:[%s1427 + $0x18] sm:$0xe]
      %v1812 = vld [vmem:[%s1427 + $0x20] sm:$0xe]
      %v1813 = vld [vmem:[%s1427 + $0x28] sm:$0xe]
      %v1814 = vld [vmem:[%s1427 + $0x30] sm:$0xe]
      %v1815 = vld [vmem:[%s1427 + $0x38] sm:$0xe]
      %v1832 = vrot.slane %v1808, 5
      %v1833 = vrot.slane %v1832, 4
      %v1834 = vrot.slane %v1563, 5
      %v1835 = vsel %vm715, %v1833, %v1834
      %v1836 = vrot.slane %v1809, 5
      %v1837 = vrot.slane %v1836, 4
      %v1838 = vrot.slane %v1565, 5
      %v1839 = vsel %vm715, %v1837, %v1838
      %v1840 = vrot.slane %v1810, 5
      %v1841 = vrot.slane %v1840, 4
      %v1842 = vrot.slane %v1567, 5
      %v1843 = vsel %vm715, %v1841, %v1842
      %v1844 = vrot.slane %v1811, 5
      %v1845 = vrot.slane %v1844, 4
      %v1846 = vrot.slane %v1569, 5
      %v1847 = vsel %vm715, %v1845, %v1846
      %v1848 = vrot.slane %v1812, 5
      %v1849 = vrot.slane %v1848, 4
      %v1850 = vrot.slane %v1571, 5
      %v1851 = vsel %vm715, %v1849, %v1850
      %v1852 = vrot.slane %v1813, 5
      %v1853 = vrot.slane %v1852, 4
      %v1854 = vrot.slane %v1573, 5
      %v1855 = vsel %vm715, %v1853, %v1854
      %v1856 = vrot.slane %v1814, 5
      %v1857 = vrot.slane %v1856, 4
      %v1858 = vrot.slane %v1575, 5
      %v1859 = vsel %vm715, %v1857, %v1858
      %v1860 = vrot.slane %v1815, 5
      %v1861 = vrot.slane %v1860, 4
      %v1862 = vrot.slane %v1577, 5
      %v1863 = vsel %vm715, %v1861, %v1862
      %s1864 = scalar_lea.vmem %s290, 512
      %v1865 = vld [vmem:[%s1864] sm:$0xf]
      %v1866 = vld [vmem:[%s1864 + $0x4] sm:$0xf]
      %v1867 = vld [vmem:[%s1864 + $0x8] sm:$0xf]
      %v1868 = vld [vmem:[%s1864 + $0xc] sm:$0xf]
      %v1869 = vld [vmem:[%s1864 + $0x10] sm:$0xf]
      %v1870 = vld [vmem:[%s1864 + $0x14] sm:$0xf]
      %v1871 = vld [vmem:[%s1864 + $0x18] sm:$0xf]
      %v1872 = vld [vmem:[%s1864 + $0x1c] sm:$0xf]
      %v1873 = vld [vmem:[%s1864 + $0x20] sm:$0xf]
      %v1874 = vld [vmem:[%s1864 + $0x24] sm:$0xf]
      %v1875 = vld [vmem:[%s1864 + $0x28] sm:$0xf]
      %v1876 = vld [vmem:[%s1864 + $0x2c] sm:$0xf]
      %v1877 = vld [vmem:[%s1864 + $0x30] sm:$0xf]
      %v1878 = vld [vmem:[%s1864 + $0x34] sm:$0xf]
      %v1879 = vld [vmem:[%s1864 + $0x38] sm:$0xf]
      %v1880 = vld [vmem:[%s1864 + $0x3c] sm:$0xf]
      %v1881 = vunpack.c.l.b16 %v1835
      %v1882 = vunpack.c.l.b16 %v1839
      %v1883 = vunpack.c.l.b16 %v1843
      %v1884 = vunpack.c.l.b16 %v1847
      %v1885 = vunpack.c.l.b16 %v1851
      %v1886 = vunpack.c.l.b16 %v1855
      %v1887 = vunpack.c.l.b16 %v1859
      %v1888 = vunpack.c.l.b16 %v1863
      %v1889 = vpack.c.b16 %v1882, %v1881
      %v1890 = vpack.c.b16 %v1884, %v1883
      %v1891 = vpack.c.b16 %v1886, %v1885
      %v1892 = vpack.c.b16 %v1888, %v1887
      %v1913 = vunpack.c.l.b16 %v1865
      %v1914 = vunpack.c.l.b16 %v1866
      %v1915 = vunpack.c.l.b16 %v1867
      %v1916 = vunpack.c.l.b16 %v1868
      %v1917 = vunpack.c.l.b16 %v1869
      %v1918 = vunpack.c.l.b16 %v1870
      %v1919 = vunpack.c.l.b16 %v1871
      %v1920 = vunpack.c.l.b16 %v1872
      %v1921 = vunpack.c.l.b16 %v1873
      %v1922 = vunpack.c.l.b16 %v1874
      %v1923 = vunpack.c.l.b16 %v1875
      %v1924 = vunpack.c.l.b16 %v1876
      %v1925 = vunpack.c.l.b16 %v1877
      %v1926 = vunpack.c.l.b16 %v1878
      %v1927 = vunpack.c.l.b16 %v1879
      %v1928 = vunpack.c.l.b16 %v1880
      %v1929 = vpack.c.b16 %v1914, %v1913
      %v1930 = vpack.c.b16 %v1916, %v1915
      %v1931 = vpack.c.b16 %v1918, %v1917
      %v1932 = vpack.c.b16 %v1920, %v1919
      %v1933 = vpack.c.b16 %v1922, %v1921
      %v1934 = vpack.c.b16 %v1924, %v1923
      %v1935 = vpack.c.b16 %v1926, %v1925
      %v1936 = vpack.c.b16 %v1928, %v1927
      %1945 = vmatpush.bf16.msra.mxu0 %v1936
      %1946 = vmatpush.bf16.msra.mxu0 %v1935
      %1947 = vmatpush.bf16.msra.mxu0 %v1934
      %1948 = vmatpush.bf16.msra.mxu0 %v1933
      %1949 = vmatpush.bf16.msra.mxu0 %v1932
      %1950 = vmatpush.bf16.msra.mxu0 %v1931
      %1951 = vmatpush.bf16.msra.mxu0 %v1930
      %1952 = vmatpush.bf16.msra.mxu0 %v1929
      %1953 = vmatmul.bf16.gmra.mxu0 %v1889
      %v1954 = vpop.f32.mrf.mxu0
      %v1955 = vadd.f32 0.0, %v1954
      %v1956 = vpop.f32.mrf.mxu0
      %v1957 = vadd.f32 0.0, %v1956
      %1958 = vmatmul.bf16.gmra.mxu0 %v1890
      %v1959 = vpop.f32.mrf.mxu0
      %v1960 = vadd.f32 0.0, %v1959
      %v1961 = vpop.f32.mrf.mxu0
      %v1962 = vadd.f32 0.0, %v1961
      %1963 = vmatmul.bf16.gmra.mxu0 %v1891
      %v1964 = vpop.f32.mrf.mxu0
      %v1965 = vadd.f32 0.0, %v1964
      %v1966 = vpop.f32.mrf.mxu0
      %v1967 = vadd.f32 0.0, %v1966
      %1968 = vmatmul.bf16.gmra.mxu0 %v1892
      %v1969 = vpop.f32.mrf.mxu0
      %v1970 = vadd.f32 0.0, %v1969
      %v1971 = vpop.f32.mrf.mxu0
      %v1972 = vadd.f32 0.0, %v1971
      %1973 = vdwg.mxu0
      %v1974 = vadd.f32 %v1800, %v1955
      %v1975 = vadd.f32 %v1801, %v1957
      %v1976 = vadd.f32 %v1802, %v1960
      %v1977 = vadd.f32 %v1803, %v1962
      %v1978 = vadd.f32 %v1804, %v1965
      %v1979 = vadd.f32 %v1805, %v1967
      %v1980 = vadd.f32 %v1806, %v1970
      %v1981 = vadd.f32 %v1807, %v1972
      %v1982 = vld [vmem:[%s302] sm:$0xf]
      %v1983 = vld [vmem:[%s302 + $0x4] sm:$0xf]
      %v1984 = vld [vmem:[%s302 + $0x8] sm:$0xf]
      %v1985 = vld [vmem:[%s302 + $0xc] sm:$0xf]
      %v1986 = vld [vmem:[%s302 + $0x10] sm:$0xf]
      %v1987 = vld [vmem:[%s302 + $0x14] sm:$0xf]
      %v1988 = vld [vmem:[%s302 + $0x18] sm:$0xf]
      %v1989 = vld [vmem:[%s302 + $0x1c] sm:$0xf]
      %v1990 = vunpack.c.l.bf16 %v1982
      %v1991 = vunpack.c.l.bf16 %v1983
      %v1992 = vunpack.c.l.bf16 %v1984
      %v1993 = vunpack.c.l.bf16 %v1985
      %v1994 = vunpack.c.l.bf16 %v1986
      %v1995 = vunpack.c.l.bf16 %v1987
      %v1996 = vunpack.c.l.bf16 %v1988
      %v1997 = vunpack.c.l.bf16 %v1989
      %v1998 = vadd.f32 %v1974, %v1990
      %v1999 = vadd.f32 %v1975, %v1991
      %v2000 = vadd.f32 %v1976, %v1992
      %v2001 = vadd.f32 %v1977, %v1993
      %v2002 = vadd.f32 %v1978, %v1994
      %v2003 = vadd.f32 %v1979, %v1995
      %v2004 = vadd.f32 %v1980, %v1996
      %v2005 = vadd.f32 %v1981, %v1997
      %v2006 = vadd.f32 %v1998, %v1999
      %v2007 = vadd.f32 %v2006, %v2000
      %v2008 = vadd.f32 %v2007, %v2001
      %v2009 = vadd.f32 %v2008, %v2002
      %v2010 = vadd.f32 %v2009, %v2003
      %v2011 = vadd.f32 %v2010, %v2004
      %v2012 = vadd.f32 %v2011, %v2005
      %v2013 = vrot.slane %v2012, 4
      %v2014 = vadd.f32 %v2012, %v2013
      %v2015 = vrot.slane %v2014, 2
      %v2016 = vadd.f32 %v2014, %v2015
      %v2017 = vrot.slane %v2016, 1
      %v2018 = vadd.f32 %v2016, %v2017
      %2019 = vst [vmem:[%s326] sm:$0x1] %v2018
      %v2020 = vmul.f32 %v1998, %v1998
      %v2021 = vmul.f32 %v1999, %v1999
      %v2022 = vmul.f32 %v2000, %v2000
      %v2023 = vmul.f32 %v2001, %v2001
      %v2024 = vmul.f32 %v2002, %v2002
      %v2025 = vmul.f32 %v2003, %v2003
      %v2026 = vmul.f32 %v2004, %v2004
      %v2027 = vmul.f32 %v2005, %v2005
      %v2028 = vadd.f32 %v2020, %v2021
      %v2029 = vadd.f32 %v2028, %v2022
      %v2030 = vadd.f32 %v2029, %v2023
      %v2031 = vadd.f32 %v2030, %v2024
      %v2032 = vadd.f32 %v2031, %v2025
      %v2033 = vadd.f32 %v2032, %v2026
      %v2034 = vadd.f32 %v2033, %v2027
      %v2035 = vrot.slane %v2034, 4
      %v2036 = vadd.f32 %v2034, %v2035
      %v2037 = vrot.slane %v2036, 2
      %v2038 = vadd.f32 %v2036, %v2037
      %v2039 = vrot.slane %v2038, 1
      %v2040 = vadd.f32 %v2038, %v2039
      %2041 = vst [vmem:[%s326 + $0x1] sm:$0x1] %v2040
      %v2042 = vpack.c.bf16 %v1998, %v1998
      %v2043 = vpack.c.bf16 %v1999, %v1999
      %v2044 = vpack.c.bf16 %v2000, %v2000
      %v2045 = vpack.c.bf16 %v2001, %v2001
      %v2046 = vpack.c.bf16 %v2002, %v2002
      %v2047 = vpack.c.bf16 %v2003, %v2003
      %v2048 = vpack.c.bf16 %v2004, %v2004
      %v2049 = vpack.c.bf16 %v2005, %v2005
      %2050 = vst [vmem:[%s315] sm:$0xf] %v2042
      %2051 = vst [vmem:[%s315 + $0x4] sm:$0xf] %v2043
      %2052 = vst [vmem:[%s315 + $0x8] sm:$0xf] %v2044
      %2053 = vst [vmem:[%s315 + $0xc] sm:$0xf] %v2045
      %2054 = vst [vmem:[%s315 + $0x10] sm:$0xf] %v2046
      %2055 = vst [vmem:[%s315 + $0x14] sm:$0xf] %v2047
      %2056 = vst [vmem:[%s315 + $0x18] sm:$0xf] %v2048
      %2057 = vst [vmem:[%s315 + $0x1c] sm:$0xf] %v2049
      %s2058 = smul.u32 8, %s23
      %p2059 = scmp.lt.s32.totalorder %s21, 1
      %s2060 = scalar_select %p2059, %s21, 1
      %p2061 = scmp.lt.s32.totalorder %s2058, 7
      %s2062 = scalar_select %p2061, %s2058, 7
      %p2063 = scmp.lt.s32.totalorder %s22, 0
      %s2064 = scalar_select %p2063, %s22, 0
      %s2065 = sadd.s32 %s2064, %s2062
      %s2066 = smul.addr %s2060, 8
      %s2067 = sadd.s32 %s2065, %s2066
      %s2068 = smul.addr %s2067, 4
      %s2069 = scalar_lea.vmem %s3, %s2068
      %p2070 = scmp.lt.s32.totalorder %s21, 1
      %s2071 = scalar_select %p2070, %s21, 1
      %p2072 = scmp.lt.s32.totalorder %s23, 0
      %s2073 = scalar_select %p2072, %s23, 0
      %p2074 = scmp.lt.s32.totalorder %s22, 0
      %s2075 = scalar_select %p2074, %s22, 0
      %s2076 = sadd.s32 %s2075, %s2073
      %s2077 = sadd.s32 %s2076, %s2071
      %s2078 = smul.addr %s2077, 2
      %s2079 = scalar_lea.vmem %s4, %s2078
      // Predicated region
      $region33: #{basic_block_forward.6} parent=31 // pred_check
        %p2080 = pneg %p139
      $region34: #{basic_block_forward.6} parent=31 // pred_check_branch
        %2082 = sbr.rel (%p2080) target = $region36
      $region35: #{basic_block_forward.6} parent=31 // pred_region
        %s2083 = smul.u32 8, %s23
      $region36: #{basic_block_forward.6} parent=31 // pred_fallthru
        _
      // Predicated region
      $region37: #{basic_block_forward.6} parent=31 // pred_check
        %p2084 = pneg %p169
      $region38: #{basic_block_forward.6} parent=31 // pred_check_branch
        %2086 = sbr.rel (%p2084) target = $region40
      $region39: #{basic_block_forward.6} parent=31 // pred_region
        _
      $region40: #{basic_block_forward.6} parent=31 // pred_fallthru
        _
    $region32: #{basic_block_forward.6} parent=5 // pred_fallthru
      _
    %p2087 = scmp.le.s32.totalorder 2, %s11
    // Predicated region
    $region41: #{basic_block_forward.6} parent=5 // pred_check
      %p2088 = pneg %p2087
    $region42: #{basic_block_forward.6} parent=5 // pred_check_branch
      %2090 = sbr.rel (%p2088) target = $region44
    $region43: #{basic_block_forward.6} parent=5 // pred_region
      %s2091 = ssub.s32 %s11, 2
      // Predicated region
      $region45: #{basic_block_forward.6} parent=43 // pred_check
        %p2092 = pneg %p145
      $region46: #{basic_block_forward.6} parent=43 // pred_check_branch
        %2094 = sbr.rel (%p2092) target = $region48
      $region47: #{basic_block_forward.6} parent=43 // pred_region
        %s2095 = smul.u32 8, %s26
        %p2096 = scmp.lt.s32.totalorder %s24, 1
        %s2097 = scalar_select %p2096, %s24, 1
        %p2098 = scmp.lt.s32.totalorder %s2095, 7
        %s2099 = scalar_select %p2098, %s2095, 7
        %p2100 = scmp.lt.s32.totalorder %s25, 0
        %s2101 = scalar_select %p2100, %s25, 0
        %s2102 = sadd.s32 %s2101, %s2099
        %s2103 = smul.addr %s2097, 8
        %s2104 = sadd.s32 %s2102, %s2103
        %s2105 = smul.addr %s2104, 4
        %s2106 = scalar_lea.vmem %s3, %s2105
      $region48: #{basic_block_forward.6} parent=43 // pred_fallthru
        _
      // Predicated region
      $region49: #{basic_block_forward.6} parent=43 // pred_check
        %p2107 = pneg %p175
      $region50: #{basic_block_forward.6} parent=43 // pred_check_branch
        %2109 = sbr.rel (%p2107) target = $region52
      $region51: #{basic_block_forward.6} parent=43 // pred_region
        %p2110 = scmp.lt.s32.totalorder %s24, 1
        %s2111 = scalar_select %p2110, %s24, 1
        %p2112 = scmp.lt.s32.totalorder %s26, 0
        %s2113 = scalar_select %p2112, %s26, 0
        %p2114 = scmp.lt.s32.totalorder %s25, 0
        %s2115 = scalar_select %p2114, %s25, 0
        %s2116 = sadd.s32 %s2115, %s2113
        %s2117 = sadd.s32 %s2116, %s2111
        %s2118 = smul.addr %s2117, 2
        %s2119 = scalar_lea.vmem %s4, %s2118
      $region52: #{basic_block_forward.6} parent=43 // pred_fallthru
        _
    $region44: #{basic_block_forward.6} parent=5 // pred_fallthru
      _
  $region6: #{basic_block_forward.6} parent=0 // loop_footer
    %s15 = sadd.s32 1, %s11
  $region7: #{basic_block_forward.6} parent=0 // loop_footer_branch
    %10 = sbr.rel target = $region3
  $region8: #{basic_block_forward.6} parent=0 // loop_exit
    _

</llo_original>
